<compile_context>
chip_gen: v7x
topology: tpu7x:2x2x1
jax: 0.10.0
libtpu: 0.0.40
codegen_flags: <defaults>
</compile_context>

<pallas_src>
import jax
import jax.numpy as jnp
from jax.experimental import pallas as pl
from jax.experimental.pallas import tpu as pltpu

# ---- module constants (from the PyTorch source) ----
MESH_SIZE = 6
DSC_FILTERS = [128, 64]
RNN_FEA = [32, 16]
BN_EPS = 1e-5

C_IN = DSC_FILTERS[0]            # 128
C_OUT = DSC_FILTERS[1]           # 64
M_OUT = MESH_SIZE - 2            # 4   (valid 3x3 conv: 6 -> 4)
N_POS = M_OUT * M_OUT            # 16  output spatial positions
N_PIX = MESH_SIZE * MESH_SIZE    # 36  input spatial positions
WIDE = N_POS * C_OUT             # 1024 = fc input size
FC_OUT = RNN_FEA[0]              # 32
PAD_OUT = 128                    # lane-dense padded fc output width


# ---------------- fused Pallas kernel (TB batch frames per grid step) ----------------

def _dsc_fused_kernel(x_ref, pall_ref, dww_ref, dwp_ref, pww_ref, pwb_ref,
                      pwsc_ref, pwsh_ref, fcw_ref, fcb_ref, o_ref, y1_scr):
    """x_ref   : (TB, 128, 36)  f32   NCHW frames, spatial flattened on the lane axis
       pall_ref: (144, 36)      bf16  0/1 im2col selector, row = tap*16 + out_pos
       dww_ref : (9, TB*128)    f32   depthwise weights, lane = frame*128 + ch
       dwp_ref : (3, TB*128)    f32   [conv bias, bn scale, bn shift], tiled per frame
       pww_ref : (128, 1024)    bf16  pointwise weights tiled 16x, lane = q*64 + c
       pwb_ref : (1, 1024)      f32   pointwise conv bias, tiled the same way
       pwsc_ref: (16, 1024)     f32   bn scale * block-diag mask (0 where lane//64 != q)
       pwsh_ref: (16, 1024)     f32   bn shift * block-diag mask
       fcw_ref : (1024, 128)    bf16  fc weights (row = q*64 + c), zero-padded out-lanes
       fcb_ref : (1, 128)       f32   fc bias, zero-padded
       o_ref   : (TB, 128)      f32
       y1_scr  : (TB, 16, 128)  bf16  scratch for (q, frame*128+ch) -> (frame*16+q, ch)
    """
    tb = x_ref.shape[0]

    # im2col for all TB frames in one MXU call: taps[t*16+q, f*128+ch] = x[f, ch, pix(t,q)]
    x2d = x_ref[...].reshape(tb * C_IN, N_PIX).astype(jnp.bfloat16)
    taps = jax.lax.dot_general(pall_ref[...], x2d, (((1,), (1,)), ((), ())),
                               preferred_element_type=jnp.float32)        # (144, TB*128)

    # depthwise 3x3 = weighted sum of the 9 taps (aligned 16-row sublane slices),
    # then bias -> ReLU -> BN(eval), all on TB*128-lane-dense f32 tiles.
    w9 = dww_ref[...]
    y1 = taps[0:N_POS, :] * w9[0, :]
    for t in range(1, 9):
        y1 = y1 + taps[t * N_POS:(t + 1) * N_POS, :] * w9[t, :]
    dwp = dwp_ref[...]
    y1 = jnp.maximum(y1 + dwp[0, :], 0.0) * dwp[1, :] + dwp[2, :]         # (16, TB*128)

    # relayout rows=q, lanes=(frame, ch)  ->  rows=(frame, q), lanes=ch via TB aligned
    # 128-lane slices through a small VMEM scratch (pure vreg moves, no XLU shuffles).
    for f in range(tb):
        y1_scr[f] = y1[:, f * C_IN:(f + 1) * C_IN].astype(jnp.bfloat16)
    y1r = y1_scr[...].reshape(tb * N_POS, C_IN)                           # (TB*16, 128)

    # pointwise 1x1 conv in the wide (TB*16, 1024) layout, lane = q*64 + c; the
    # q-block-diagonal mask is pre-folded into the BN scale/shift planes.
    y2 = jnp.dot(y1r, pww_ref[...], preferred_element_type=jnp.float32)   # (TB*16, 1024)
    y2 = y2.reshape(tb, N_POS, WIDE)
    y2 = jnp.maximum(y2 + pwb_ref[...], 0.0) * pwsc_ref[...] + pwsh_ref[...]
    y2 = y2.astype(jnp.bfloat16).reshape(tb * N_POS, WIDE)

    # fc BEFORE the q-reduction: big lane-dense matmul, then a tiny per-frame row sum.
    part = jnp.dot(y2, fcw_ref[...], preferred_element_type=jnp.float32)  # (TB*16, 128)
    out = part.reshape(tb, N_POS, PAD_OUT).sum(axis=1) + fcb_ref[...]     # (TB, 128)
    o_ref[...] = out


# ---------------- parameters (PyTorch layout) + one-time packing ----------------

def init_params(key):
    ks = jax.random.split(key, 6)
    return {
        # depthwise Conv2d(128, 128, 3, groups=128): weight (128, 1, 3, 3)
        'dw_w': jax.random.normal(ks[0], (C_IN, 1, 3, 3), jnp.float32) * 0.1,
        'dw_b': jax.random.normal(ks[1], (C_IN,), jnp.float32) * 0.1,
        'dw_bn_gamma': jnp.ones((C_IN,), jnp.float32),
        'dw_bn_beta': jnp.zeros((C_IN,), jnp.float32),
        'dw_bn_mean': jnp.zeros((C_IN,), jnp.float32),
        'dw_bn_var': jnp.ones((C_IN,), jnp.float32),
        # pointwise Conv2d(128, 64, 1): weight (64, 128, 1, 1)
        'pw_w': jax.random.normal(ks[2], (C_OUT, C_IN, 1, 1), jnp.float32) * 0.1,
        'pw_b': jax.random.normal(ks[3], (C_OUT,), jnp.float32) * 0.1,
        'pw_bn_gamma': jnp.ones((C_OUT,), jnp.float32),
        'pw_bn_beta': jnp.zeros((C_OUT,), jnp.float32),
        'pw_bn_mean': jnp.zeros((C_OUT,), jnp.float32),
        'pw_bn_var': jnp.ones((C_OUT,), jnp.float32),
        # fc Linear(64*4*4 -> 32); PyTorch flattens the input in (C, H, W) order
        'fc_w': jax.random.normal(ks[4], (FC_OUT, C_OUT * N_POS), jnp.float32) * 0.05,
        'fc_b': jax.random.normal(ks[5], (FC_OUT,), jnp.float32) * 0.05,
    }


def _bn_affine(gamma, beta, mean, var):
    scale = gamma / jnp.sqrt(var + BN_EPS)
    return scale, beta - mean * scale


def prepare_params(p, tb):
    """One-time repack of PyTorch-layout weights for a batch tile of `tb` frames/step."""
    # im2col selector: row = t*16 + q picks input pixel (i+ki)*6 + (j+kj)
    rows = jnp.arange(9 * N_POS)
    t, q = rows // N_POS, rows % N_POS
    ki, kj = t // 3, t % 3
    i, j = q // M_OUT, q % M_OUT
    src = (i + ki) * MESH_SIZE + (j + kj)                                  # (144,)
    p_all = (src[:, None] == jnp.arange(N_PIX)[None, :]).astype(jnp.bfloat16)

    # depthwise weights / post-ops, tiled per frame on the lane axis (lane = f*128 + ch)
    dw_w9 = p['dw_w'].reshape(C_IN, 9).T                                   # (9, 128)
    dw_sc, dw_sh = _bn_affine(p['dw_bn_gamma'], p['dw_bn_beta'],
                              p['dw_bn_mean'], p['dw_bn_var'])
    dw_w9_t = jnp.tile(dw_w9, (1, tb))                                     # (9, tb*128)
    dw_post_t = jnp.tile(jnp.stack([p['dw_b'], dw_sc, dw_sh]), (1, tb))    # (3, tb*128)

    # pointwise weights tiled 16x on the lane axis (lane = q*64 + c); the q-block-diagonal
    # mask is folded into the BN scale/shift planes so the kernel needs no iota/where.
    pw_kc = p['pw_w'].reshape(C_OUT, C_IN).T                               # (128, 64)
    pw_w_wide = jnp.tile(pw_kc, (1, N_POS)).astype(jnp.bfloat16)           # (128, 1024)
    psc, psh = _bn_affine(p['pw_bn_gamma'], p['pw_bn_beta'],
                          p['pw_bn_mean'], p['pw_bn_var'])
    pw_b_wide = jnp.tile(p['pw_b'], N_POS).reshape(1, WIDE)                # (1, 1024)
    mask = (jnp.arange(WIDE)[None, :] // C_OUT
            == jnp.arange(N_POS)[:, None]).astype(jnp.float32)             # (16, 1024)
    pw_scale_m = jnp.tile(psc, N_POS)[None, :] * mask                      # (16, 1024)
    pw_shift_m = jnp.tile(psh, N_POS)[None, :] * mask                      # (16, 1024)

    # PyTorch flattens (C, H, W): fc_w[o, c*16 + q]; kernel rows are q*64 + c.
    # Zero-pad the 32 outputs to 128 lanes for an unmasked, lane-dense store.
    fc_w_wide = (p['fc_w'].reshape(FC_OUT, C_OUT, N_POS)
                 .transpose(2, 1, 0).reshape(WIDE, FC_OUT))                # (1024, 32)
    fc_w_pad = jnp.zeros((WIDE, PAD_OUT), jnp.float32)
    fc_w_pad = fc_w_pad.at[:, :FC_OUT].set(fc_w_wide).astype(jnp.bfloat16)
    fc_b_pad = jnp.zeros((1, PAD_OUT), jnp.float32).at[0, :FC_OUT].set(p['fc_b'])

    return {'tb': int(tb), 'p_all': p_all, 'dw_w9': dw_w9_t, 'dw_post': dw_post_t,
            'pw_w_wide': pw_w_wide, 'pw_b_wide': pw_b_wide,
            'pw_scale_m': pw_scale_m, 'pw_shift_m': pw_shift_m,
            'fc_w_pad': fc_w_pad, 'fc_b_pad': fc_b_pad}


# ---------------- forward wrapper ----------------

def dsc_forward(prep, x):
    """x: (B, 128, 6, 6) float32, PyTorch NCHW layout."""
    B = x.shape[0]
    tb = prep['tb']
    nblk = pl.cdiv(B, tb)
    Bp = nblk * tb
    xf = x.reshape(B, C_IN, N_PIX)              # contiguous reshape only; no transpose
    if Bp != B:                                 # pad batch to a multiple of the tile
        xf = jnp.concatenate(
            [xf, jnp.zeros((Bp - B, C_IN, N_PIX), xf.dtype)], axis=0)

    const2 = lambda n: (0, 0)
    out = pl.pallas_call(
        _dsc_fused_kernel,
        out_shape=jax.ShapeDtypeStruct((Bp, PAD_OUT), jnp.float32),
        grid=(nblk,),
        in_specs=[
            pl.BlockSpec((tb, C_IN, N_PIX), lambda n: (n, 0, 0)),   # per-step frame block
            pl.BlockSpec((9 * N_POS, N_PIX), const2),               # im2col selector
            pl.BlockSpec((9, tb * C_IN), const2),                   # depthwise weights
            pl.BlockSpec((3, tb * C_IN), const2),                   # dw bias / bn
            pl.BlockSpec((C_IN, WIDE), const2),                     # pointwise (tiled 16x)
            pl.BlockSpec((1, WIDE), const2),                        # pw bias
            pl.BlockSpec((N_POS, WIDE), const2),                    # pw bn scale * mask
            pl.BlockSpec((N_POS, WIDE), const2),                    # pw bn shift * mask
            pl.BlockSpec((WIDE, PAD_OUT), const2),                  # fc weights (padded)
            pl.BlockSpec((1, PAD_OUT), const2),                     # fc bias (padded)
        ],
        out_specs=pl.BlockSpec((tb, PAD_OUT), lambda n: (n, 0)),
        scratch_shapes=[pltpu.VMEM((tb, N_POS, C_IN), jnp.bfloat16)],
        compiler_params=pltpu.CompilerParams(dimension_semantics=("parallel",)),
    )(xf, prep['p_all'], prep['dw_w9'], prep['dw_post'], prep['pw_w_wide'],
      prep['pw_b_wide'], prep['pw_scale_m'], prep['pw_shift_m'],
      prep['fc_w_pad'], prep['fc_b_pad'])
    return out[:B, :FC_OUT]


# ---------------- pure-JAX reference (for a correctness check) ----------------

def dsc_reference(p, x):
    B = x.shape[0]
    hp = jax.lax.Precision.HIGHEST
    y1 = jnp.zeros((B, C_IN, M_OUT, M_OUT), jnp.float32)
    for ki in range(3):
        for kj in range(3):
            w_tap = p['dw_w'][:, 0, ki, kj].reshape(1, C_IN, 1, 1)
            y1 = y1 + x[:, :, ki:ki + M_OUT, kj:kj + M_OUT] * w_tap
    y1 = jnp.maximum(y1 + p['dw_b'].reshape(1, C_IN, 1, 1), 0.0)
    sc, sh = _bn_affine(p['dw_bn_gamma'], p['dw_bn_beta'], p['dw_bn_mean'], p['dw_bn_var'])
    y1 = y1 * sc.reshape(1, C_IN, 1, 1) + sh.reshape(1, C_IN, 1, 1)

    y2 = jnp.einsum('bkhw,ck->bchw', y1, p['pw_w'][:, :, 0, 0], precision=hp)
    y2 = jnp.maximum(y2 + p['pw_b'].reshape(1, C_OUT, 1, 1), 0.0)
    sc, sh = _bn_affine(p['pw_bn_gamma'], p['pw_bn_beta'], p['pw_bn_mean'], p['pw_bn_var'])
    y2 = y2 * sc.reshape(1, C_OUT, 1, 1) + sh.reshape(1, C_OUT, 1, 1)

    flat = y2.reshape(B, -1)                                  # (C, H, W) order
    return jnp.dot(flat, p['fc_w'].T, precision=hp) + p['fc_b']


if __name__ == "__main__":
    key = jax.random.PRNGKey(0)
    pkey, xkey = jax.random.split(key)
    params = init_params(pkey)

    TB = 8                  # frames per grid step -> grid=(2,), even split on v7x's 2 TCs
    prep = prepare_params(params, TB)

    B = 16                  # channels / spatial are fixed at 128 / 6x6 by the module
    x = jax.random.normal(xkey, (B, C_IN, MESH_SIZE, MESH_SIZE), jnp.float32)

    fwd = jax.jit(lambda xx: dsc_forward(prep, xx))
    out = jax.block_until_ready(fwd(x))

    assert out.shape == (B, FC_OUT), out.shape
    assert bool(jnp.all(jnp.isfinite(out)))
    ref = dsc_reference(params, x)
    assert jnp.allclose(out, ref, rtol=1e-2, atol=1e-2), \
        float(jnp.max(jnp.abs(out - ref)))
    print("KERNEL_OK")
</pallas_src>

<mosaic_0001>
module attributes {stable_mosaic.version = 11 : i64} {
  func.func @_dsc_fused_kernel(%arg0: i32, %arg1: memref<8x128x36xf32, #tpu.memory_space<vmem>>, %arg2: memref<144x36xbf16, #tpu.memory_space<vmem>>, %arg3: memref<9x1024xf32, #tpu.memory_space<vmem>>, %arg4: memref<3x1024xf32, #tpu.memory_space<vmem>>, %arg5: memref<128x1024xbf16, #tpu.memory_space<vmem>>, %arg6: memref<1x1024xf32, #tpu.memory_space<vmem>>, %arg7: memref<16x1024xf32, #tpu.memory_space<vmem>>, %arg8: memref<16x1024xf32, #tpu.memory_space<vmem>>, %arg9: memref<1024x128xbf16, #tpu.memory_space<vmem>>, %arg10: memref<1x128xf32, #tpu.memory_space<vmem>>, %arg11: memref<8x128xf32, #tpu.memory_space<vmem>>, %arg12: memref<8x16x128xbf16, #tpu.memory_space<vmem>>) attributes {dimension_semantics = [#tpu.dimension_semantics<parallel>], iteration_bounds = array<i64: 2>, scalar_prefetch = 0 : i64, scratch_operands = 1 : i64, tpu.core_type = #tpu.core_type<tc>, window_params = [{transform_indices = @transform_0, window_bounds = array<i64: 8, 128, 36>}, {pipeline_mode = #tpu.pipeline_mode<synchronous>, transform_indices = @transform_1, window_bounds = array<i64: 144, 36>}, {pipeline_mode = #tpu.pipeline_mode<synchronous>, transform_indices = @transform_2, window_bounds = array<i64: 9, 1024>}, {pipeline_mode = #tpu.pipeline_mode<synchronous>, transform_indices = @transform_3, window_bounds = array<i64: 3, 1024>}, {pipeline_mode = #tpu.pipeline_mode<synchronous>, transform_indices = @transform_4, window_bounds = array<i64: 128, 1024>}, {pipeline_mode = #tpu.pipeline_mode<synchronous>, transform_indices = @transform_5, window_bounds = array<i64: 1, 1024>}, {pipeline_mode = #tpu.pipeline_mode<synchronous>, transform_indices = @transform_6, window_bounds = array<i64: 16, 1024>}, {pipeline_mode = #tpu.pipeline_mode<synchronous>, transform_indices = @transform_7, window_bounds = array<i64: 16, 1024>}, {pipeline_mode = #tpu.pipeline_mode<synchronous>, transform_indices = @transform_8, window_bounds = array<i64: 1024, 128>}, {pipeline_mode = #tpu.pipeline_mode<synchronous>, transform_indices = @transform_9, window_bounds = array<i64: 1, 128>}, {transform_indices = @transform_10, window_bounds = array<i64: 8, 128>}]} {
    %c0 = arith.constant 0 : index
    %c0_0 = arith.constant 0 : index
    %c0_1 = arith.constant 0 : index
    %0 = vector.load %arg1[%c0, %c0_0, %c0_1] : memref<8x128x36xf32, #tpu.memory_space<vmem>>, vector<8x128x36xf32>
    %1 = vector.shape_cast %0 : vector<8x128x36xf32> to vector<1024x36xf32>
    %2 = arith.truncf %1 : vector<1024x36xf32> to vector<1024x36xbf16>
    %c0_2 = arith.constant 0 : index
    %c0_3 = arith.constant 0 : index
    %3 = vector.load %arg2[%c0_2, %c0_3] : memref<144x36xbf16, #tpu.memory_space<vmem>>, vector<144x36xbf16>
    %cst = arith.constant dense<0.000000e+00> : vector<144x1024xf32>
    %4 = tpu.matmul %3, %2, %cst {dimension_numbers = #tpu.dot_dimension_numbers<[1], [1], [0], [0], [0, 0, 1, 0], [], []>} : vector<144x36xbf16>, vector<1024x36xbf16>, vector<144x1024xf32> -> vector<144x1024xf32>
    %c0_4 = arith.constant 0 : index
    %c0_5 = arith.constant 0 : index
    %5 = vector.load %arg3[%c0_4, %c0_5] : memref<9x1024xf32, #tpu.memory_space<vmem>>, vector<9x1024xf32>
    %6 = vector.extract_strided_slice %4 {offsets = [0, 0], sizes = [16, 1024], strides = [1, 1]} : vector<144x1024xf32> to vector<16x1024xf32>
    %7 = vector.extract_strided_slice %5 {offsets = [0, 0], sizes = [1, 1024], strides = [1, 1]} : vector<9x1024xf32> to vector<1x1024xf32>
    %8 = vector.shape_cast %7 : vector<1x1024xf32> to vector<1024xf32>
    %9 = vector.shape_cast %8 : vector<1024xf32> to vector<1x1024xf32>
    %10 = vector.broadcast %9 : vector<1x1024xf32> to vector<16x1024xf32>
    %11 = arith.mulf %6, %10 : vector<16x1024xf32>
    %12 = vector.extract_strided_slice %4 {offsets = [16, 0], sizes = [16, 1024], strides = [1, 1]} : vector<144x1024xf32> to vector<16x1024xf32>
    %13 = vector.extract_strided_slice %5 {offsets = [1, 0], sizes = [1, 1024], strides = [1, 1]} : vector<9x1024xf32> to vector<1x1024xf32>
    %14 = vector.shape_cast %13 : vector<1x1024xf32> to vector<1024xf32>
    %15 = vector.shape_cast %14 : vector<1024xf32> to vector<1x1024xf32>
    %16 = vector.broadcast %15 : vector<1x1024xf32> to vector<16x1024xf32>
    %17 = arith.mulf %12, %16 : vector<16x1024xf32>
    %18 = arith.addf %11, %17 : vector<16x1024xf32>
    %19 = vector.extract_strided_slice %4 {offsets = [32, 0], sizes = [16, 1024], strides = [1, 1]} : vector<144x1024xf32> to vector<16x1024xf32>
    %20 = vector.extract_strided_slice %5 {offsets = [2, 0], sizes = [1, 1024], strides = [1, 1]} : vector<9x1024xf32> to vector<1x1024xf32>
    %21 = vector.shape_cast %20 : vector<1x1024xf32> to vector<1024xf32>
    %22 = vector.shape_cast %21 : vector<1024xf32> to vector<1x1024xf32>
    %23 = vector.broadcast %22 : vector<1x1024xf32> to vector<16x1024xf32>
    %24 = arith.mulf %19, %23 : vector<16x1024xf32>
    %25 = arith.addf %18, %24 : vector<16x1024xf32>
    %26 = vector.extract_strided_slice %4 {offsets = [48, 0], sizes = [16, 1024], strides = [1, 1]} : vector<144x1024xf32> to vector<16x1024xf32>
    %27 = vector.extract_strided_slice %5 {offsets = [3, 0], sizes = [1, 1024], strides = [1, 1]} : vector<9x1024xf32> to vector<1x1024xf32>
    %28 = vector.shape_cast %27 : vector<1x1024xf32> to vector<1024xf32>
    %29 = vector.shape_cast %28 : vector<1024xf32> to vector<1x1024xf32>
    %30 = vector.broadcast %29 : vector<1x1024xf32> to vector<16x1024xf32>
    %31 = arith.mulf %26, %30 : vector<16x1024xf32>
    %32 = arith.addf %25, %31 : vector<16x1024xf32>
    %33 = vector.extract_strided_slice %4 {offsets = [64, 0], sizes = [16, 1024], strides = [1, 1]} : vector<144x1024xf32> to vector<16x1024xf32>
    %34 = vector.extract_strided_slice %5 {offsets = [4, 0], sizes = [1, 1024], strides = [1, 1]} : vector<9x1024xf32> to vector<1x1024xf32>
    %35 = vector.shape_cast %34 : vector<1x1024xf32> to vector<1024xf32>
    %36 = vector.shape_cast %35 : vector<1024xf32> to vector<1x1024xf32>
    %37 = vector.broadcast %36 : vector<1x1024xf32> to vector<16x1024xf32>
    %38 = arith.mulf %33, %37 : vector<16x1024xf32>
    %39 = arith.addf %32, %38 : vector<16x1024xf32>
    %40 = vector.extract_strided_slice %4 {offsets = [80, 0], sizes = [16, 1024], strides = [1, 1]} : vector<144x1024xf32> to vector<16x1024xf32>
    %41 = vector.extract_strided_slice %5 {offsets = [5, 0], sizes = [1, 1024], strides = [1, 1]} : vector<9x1024xf32> to vector<1x1024xf32>
    %42 = vector.shape_cast %41 : vector<1x1024xf32> to vector<1024xf32>
    %43 = vector.shape_cast %42 : vector<1024xf32> to vector<1x1024xf32>
    %44 = vector.broadcast %43 : vector<1x1024xf32> to vector<16x1024xf32>
    %45 = arith.mulf %40, %44 : vector<16x1024xf32>
    %46 = arith.addf %39, %45 : vector<16x1024xf32>
    %47 = vector.extract_strided_slice %4 {offsets = [96, 0], sizes = [16, 1024], strides = [1, 1]} : vector<144x1024xf32> to vector<16x1024xf32>
    %48 = vector.extract_strided_slice %5 {offsets = [6, 0], sizes = [1, 1024], strides = [1, 1]} : vector<9x1024xf32> to vector<1x1024xf32>
    %49 = vector.shape_cast %48 : vector<1x1024xf32> to vector<1024xf32>
    %50 = vector.shape_cast %49 : vector<1024xf32> to vector<1x1024xf32>
    %51 = vector.broadcast %50 : vector<1x1024xf32> to vector<16x1024xf32>
    %52 = arith.mulf %47, %51 : vector<16x1024xf32>
    %53 = arith.addf %46, %52 : vector<16x1024xf32>
    %54 = vector.extract_strided_slice %4 {offsets = [112, 0], sizes = [16, 1024], strides = [1, 1]} : vector<144x1024xf32> to vector<16x1024xf32>
    %55 = vector.extract_strided_slice %5 {offsets = [7, 0], sizes = [1, 1024], strides = [1, 1]} : vector<9x1024xf32> to vector<1x1024xf32>
    %56 = vector.shape_cast %55 : vector<1x1024xf32> to vector<1024xf32>
    %57 = vector.shape_cast %56 : vector<1024xf32> to vector<1x1024xf32>
    %58 = vector.broadcast %57 : vector<1x1024xf32> to vector<16x1024xf32>
    %59 = arith.mulf %54, %58 : vector<16x1024xf32>
    %60 = arith.addf %53, %59 : vector<16x1024xf32>
    %61 = vector.extract_strided_slice %4 {offsets = [128, 0], sizes = [16, 1024], strides = [1, 1]} : vector<144x1024xf32> to vector<16x1024xf32>
    %62 = vector.extract_strided_slice %5 {offsets = [8, 0], sizes = [1, 1024], strides = [1, 1]} : vector<9x1024xf32> to vector<1x1024xf32>
    %63 = vector.shape_cast %62 : vector<1x1024xf32> to vector<1024xf32>
    %64 = vector.shape_cast %63 : vector<1024xf32> to vector<1x1024xf32>
    %65 = vector.broadcast %64 : vector<1x1024xf32> to vector<16x1024xf32>
    %66 = arith.mulf %61, %65 : vector<16x1024xf32>
    %67 = arith.addf %60, %66 : vector<16x1024xf32>
    %c0_6 = arith.constant 0 : index
    %c0_7 = arith.constant 0 : index
    %68 = vector.load %arg4[%c0_6, %c0_7] : memref<3x1024xf32, #tpu.memory_space<vmem>>, vector<3x1024xf32>
    %69 = vector.extract_strided_slice %68 {offsets = [0, 0], sizes = [1, 1024], strides = [1, 1]} : vector<3x1024xf32> to vector<1x1024xf32>
    %70 = vector.shape_cast %69 : vector<1x1024xf32> to vector<1024xf32>
    %71 = vector.shape_cast %70 : vector<1024xf32> to vector<1x1024xf32>
    %72 = vector.broadcast %71 : vector<1x1024xf32> to vector<16x1024xf32>
    %73 = arith.addf %67, %72 : vector<16x1024xf32>
    %cst_8 = arith.constant 0.000000e+00 : f32
    %74 = vector.broadcast %cst_8 : f32 to vector<16x1024xf32>
    %75 = arith.maximumf %73, %74 : vector<16x1024xf32>
    %76 = vector.extract_strided_slice %68 {offsets = [1, 0], sizes = [1, 1024], strides = [1, 1]} : vector<3x1024xf32> to vector<1x1024xf32>
    %77 = vector.shape_cast %76 : vector<1x1024xf32> to vector<1024xf32>
    %78 = vector.shape_cast %77 : vector<1024xf32> to vector<1x1024xf32>
    %79 = vector.broadcast %78 : vector<1x1024xf32> to vector<16x1024xf32>
    %80 = arith.mulf %75, %79 : vector<16x1024xf32>
    %81 = vector.extract_strided_slice %68 {offsets = [2, 0], sizes = [1, 1024], strides = [1, 1]} : vector<3x1024xf32> to vector<1x1024xf32>
    %82 = vector.shape_cast %81 : vector<1x1024xf32> to vector<1024xf32>
    %83 = vector.shape_cast %82 : vector<1024xf32> to vector<1x1024xf32>
    %84 = vector.broadcast %83 : vector<1x1024xf32> to vector<16x1024xf32>
    %85 = arith.addf %80, %84 : vector<16x1024xf32>
    %86 = vector.extract_strided_slice %85 {offsets = [0, 0], sizes = [16, 128], strides = [1, 1]} : vector<16x1024xf32> to vector<16x128xf32>
    %87 = arith.truncf %86 : vector<16x128xf32> to vector<16x128xbf16>
    %c0_9 = arith.constant 0 : index
    %c0_10 = arith.constant 0 : index
    %c0_11 = arith.constant 0 : index
    %88 = vector.load %arg12[%c0_9, %c0_10, %c0_11] : memref<8x16x128xbf16, #tpu.memory_space<vmem>>, vector<1x16x128xbf16>
    %89 = vector.shape_cast %88 : vector<1x16x128xbf16> to vector<16x128xbf16>
    %90 = vector.shape_cast %87 : vector<16x128xbf16> to vector<1x16x128xbf16>
    tpu.vector_store %arg12[%c0_9, %c0_10, %c0_11], %90 {strides = array<i32>} : memref<8x16x128xbf16, #tpu.memory_space<vmem>>, vector<1x16x128xbf16>,
    %91 = vector.extract_strided_slice %85 {offsets = [0, 128], sizes = [16, 128], strides = [1, 1]} : vector<16x1024xf32> to vector<16x128xf32>
    %92 = arith.truncf %91 : vector<16x128xf32> to vector<16x128xbf16>
    %c1 = arith.constant 1 : index
    %c0_12 = arith.constant 0 : index
    %c0_13 = arith.constant 0 : index
    %93 = vector.load %arg12[%c1, %c0_12, %c0_13] : memref<8x16x128xbf16, #tpu.memory_space<vmem>>, vector<1x16x128xbf16>
    %94 = vector.shape_cast %93 : vector<1x16x128xbf16> to vector<16x128xbf16>
    %95 = vector.shape_cast %92 : vector<16x128xbf16> to vector<1x16x128xbf16>
    tpu.vector_store %arg12[%c1, %c0_12, %c0_13], %95 {strides = array<i32>} : memref<8x16x128xbf16, #tpu.memory_space<vmem>>, vector<1x16x128xbf16>,
    %96 = vector.extract_strided_slice %85 {offsets = [0, 256], sizes = [16, 128], strides = [1, 1]} : vector<16x1024xf32> to vector<16x128xf32>
    %97 = arith.truncf %96 : vector<16x128xf32> to vector<16x128xbf16>
    %c2 = arith.constant 2 : index
    %c0_14 = arith.constant 0 : index
    %c0_15 = arith.constant 0 : index
    %98 = vector.load %arg12[%c2, %c0_14, %c0_15] : memref<8x16x128xbf16, #tpu.memory_space<vmem>>, vector<1x16x128xbf16>
    %99 = vector.shape_cast %98 : vector<1x16x128xbf16> to vector<16x128xbf16>
    %100 = vector.shape_cast %97 : vector<16x128xbf16> to vector<1x16x128xbf16>
    tpu.vector_store %arg12[%c2, %c0_14, %c0_15], %100 {strides = array<i32>} : memref<8x16x128xbf16, #tpu.memory_space<vmem>>, vector<1x16x128xbf16>,
    %101 = vector.extract_strided_slice %85 {offsets = [0, 384], sizes = [16, 128], strides = [1, 1]} : vector<16x1024xf32> to vector<16x128xf32>
    %102 = arith.truncf %101 : vector<16x128xf32> to vector<16x128xbf16>
    %c3 = arith.constant 3 : index
    %c0_16 = arith.constant 0 : index
    %c0_17 = arith.constant 0 : index
    %103 = vector.load %arg12[%c3, %c0_16, %c0_17] : memref<8x16x128xbf16, #tpu.memory_space<vmem>>, vector<1x16x128xbf16>
    %104 = vector.shape_cast %103 : vector<1x16x128xbf16> to vector<16x128xbf16>
    %105 = vector.shape_cast %102 : vector<16x128xbf16> to vector<1x16x128xbf16>
    tpu.vector_store %arg12[%c3, %c0_16, %c0_17], %105 {strides = array<i32>} : memref<8x16x128xbf16, #tpu.memory_space<vmem>>, vector<1x16x128xbf16>,
    %106 = vector.extract_strided_slice %85 {offsets = [0, 512], sizes = [16, 128], strides = [1, 1]} : vector<16x1024xf32> to vector<16x128xf32>
    %107 = arith.truncf %106 : vector<16x128xf32> to vector<16x128xbf16>
    %c4 = arith.constant 4 : index
    %c0_18 = arith.constant 0 : index
    %c0_19 = arith.constant 0 : index
    %108 = vector.load %arg12[%c4, %c0_18, %c0_19] : memref<8x16x128xbf16, #tpu.memory_space<vmem>>, vector<1x16x128xbf16>
    %109 = vector.shape_cast %108 : vector<1x16x128xbf16> to vector<16x128xbf16>
    %110 = vector.shape_cast %107 : vector<16x128xbf16> to vector<1x16x128xbf16>
    tpu.vector_store %arg12[%c4, %c0_18, %c0_19], %110 {strides = array<i32>} : memref<8x16x128xbf16, #tpu.memory_space<vmem>>, vector<1x16x128xbf16>,
    %111 = vector.extract_strided_slice %85 {offsets = [0, 640], sizes = [16, 128], strides = [1, 1]} : vector<16x1024xf32> to vector<16x128xf32>
    %112 = arith.truncf %111 : vector<16x128xf32> to vector<16x128xbf16>
    %c5 = arith.constant 5 : index
    %c0_20 = arith.constant 0 : index
    %c0_21 = arith.constant 0 : index
    %113 = vector.load %arg12[%c5, %c0_20, %c0_21] : memref<8x16x128xbf16, #tpu.memory_space<vmem>>, vector<1x16x128xbf16>
    %114 = vector.shape_cast %113 : vector<1x16x128xbf16> to vector<16x128xbf16>
    %115 = vector.shape_cast %112 : vector<16x128xbf16> to vector<1x16x128xbf16>
    tpu.vector_store %arg12[%c5, %c0_20, %c0_21], %115 {strides = array<i32>} : memref<8x16x128xbf16, #tpu.memory_space<vmem>>, vector<1x16x128xbf16>,
    %116 = vector.extract_strided_slice %85 {offsets = [0, 768], sizes = [16, 128], strides = [1, 1]} : vector<16x1024xf32> to vector<16x128xf32>
    %117 = arith.truncf %116 : vector<16x128xf32> to vector<16x128xbf16>
    %c6 = arith.constant 6 : index
    %c0_22 = arith.constant 0 : index
    %c0_23 = arith.constant 0 : index
    %118 = vector.load %arg12[%c6, %c0_22, %c0_23] : memref<8x16x128xbf16, #tpu.memory_space<vmem>>, vector<1x16x128xbf16>
    %119 = vector.shape_cast %118 : vector<1x16x128xbf16> to vector<16x128xbf16>
    %120 = vector.shape_cast %117 : vector<16x128xbf16> to vector<1x16x128xbf16>
    tpu.vector_store %arg12[%c6, %c0_22, %c0_23], %120 {strides = array<i32>} : memref<8x16x128xbf16, #tpu.memory_space<vmem>>, vector<1x16x128xbf16>,
    %121 = vector.extract_strided_slice %85 {offsets = [0, 896], sizes = [16, 128], strides = [1, 1]} : vector<16x1024xf32> to vector<16x128xf32>
    %122 = arith.truncf %121 : vector<16x128xf32> to vector<16x128xbf16>
    %c7 = arith.constant 7 : index
    %c0_24 = arith.constant 0 : index
    %c0_25 = arith.constant 0 : index
    %123 = vector.load %arg12[%c7, %c0_24, %c0_25] : memref<8x16x128xbf16, #tpu.memory_space<vmem>>, vector<1x16x128xbf16>
    %124 = vector.shape_cast %123 : vector<1x16x128xbf16> to vector<16x128xbf16>
    %125 = vector.shape_cast %122 : vector<16x128xbf16> to vector<1x16x128xbf16>
    tpu.vector_store %arg12[%c7, %c0_24, %c0_25], %125 {strides = array<i32>} : memref<8x16x128xbf16, #tpu.memory_space<vmem>>, vector<1x16x128xbf16>,
    %c0_26 = arith.constant 0 : index
    %c0_27 = arith.constant 0 : index
    %c0_28 = arith.constant 0 : index
    %126 = vector.load %arg12[%c0_26, %c0_27, %c0_28] : memref<8x16x128xbf16, #tpu.memory_space<vmem>>, vector<8x16x128xbf16>
    %127 = vector.shape_cast %126 : vector<8x16x128xbf16> to vector<128x128xbf16>
    %c0_29 = arith.constant 0 : index
    %c0_30 = arith.constant 0 : index
    %128 = vector.load %arg5[%c0_29, %c0_30] : memref<128x1024xbf16, #tpu.memory_space<vmem>>, vector<128x1024xbf16>
    %cst_31 = arith.constant dense<0.000000e+00> : vector<128x1024xf32>
    %129 = tpu.matmul %127, %128, %cst_31 {dimension_numbers = #tpu.dot_dimension_numbers<[1], [0], [0], [1], [0, 0, 1, 1], [], []>} : vector<128x128xbf16>, vector<128x1024xbf16>, vector<128x1024xf32> -> vector<128x1024xf32>
    %130 = vector.shape_cast %129 : vector<128x1024xf32> to vector<8x16x1024xf32>
    %c0_32 = arith.constant 0 : index
    %c0_33 = arith.constant 0 : index
    %131 = vector.load %arg6[%c0_32, %c0_33] : memref<1x1024xf32, #tpu.memory_space<vmem>>, vector<1x1024xf32>
    %132 = vector.shape_cast %131 : vector<1x1024xf32> to vector<1x1x1024xf32>
    %133 = vector.broadcast %132 : vector<1x1x1024xf32> to vector<8x16x1024xf32>
    %134 = arith.addf %130, %133 : vector<8x16x1024xf32>
    %cst_34 = arith.constant 0.000000e+00 : f32
    %135 = vector.broadcast %cst_34 : f32 to vector<8x16x1024xf32>
    %136 = arith.maximumf %134, %135 : vector<8x16x1024xf32>
    %c0_35 = arith.constant 0 : index
    %c0_36 = arith.constant 0 : index
    %137 = vector.load %arg7[%c0_35, %c0_36] : memref<16x1024xf32, #tpu.memory_space<vmem>>, vector<16x1024xf32>
    %138 = vector.shape_cast %137 : vector<16x1024xf32> to vector<1x16x1024xf32>
    %139 = vector.broadcast %138 : vector<1x16x1024xf32> to vector<8x16x1024xf32>
    %140 = arith.mulf %136, %139 : vector<8x16x1024xf32>
    %c0_37 = arith.constant 0 : index
    %c0_38 = arith.constant 0 : index
    %141 = vector.load %arg8[%c0_37, %c0_38] : memref<16x1024xf32, #tpu.memory_space<vmem>>, vector<16x1024xf32>
    %142 = vector.shape_cast %141 : vector<16x1024xf32> to vector<1x16x1024xf32>
    %143 = vector.broadcast %142 : vector<1x16x1024xf32> to vector<8x16x1024xf32>
    %144 = arith.addf %140, %143 : vector<8x16x1024xf32>
    %145 = arith.truncf %144 : vector<8x16x1024xf32> to vector<8x16x1024xbf16>
    %146 = vector.shape_cast %145 : vector<8x16x1024xbf16> to vector<128x1024xbf16>
    %c0_39 = arith.constant 0 : index
    %c0_40 = arith.constant 0 : index
    %147 = vector.load %arg9[%c0_39, %c0_40] : memref<1024x128xbf16, #tpu.memory_space<vmem>>, vector<1024x128xbf16>
    %cst_41 = arith.constant dense<0.000000e+00> : vector<128x128xf32>
    %148 = tpu.matmul %146, %147, %cst_41 {dimension_numbers = #tpu.dot_dimension_numbers<[1], [0], [0], [1], [0, 0, 1, 1], [], []>} : vector<128x1024xbf16>, vector<1024x128xbf16>, vector<128x128xf32> -> vector<128x128xf32>
    %149 = vector.shape_cast %148 : vector<128x128xf32> to vector<8x16x128xf32>
    %cst_42 = arith.constant dense<0.000000e+00> : vector<8x128xf32>
    %150 = vector.multi_reduction <add>, %149, %cst_42 [1] : vector<8x16x128xf32> to vector<8x128xf32>
    %c0_43 = arith.constant 0 : index
    %c0_44 = arith.constant 0 : index
    %151 = vector.load %arg10[%c0_43, %c0_44] : memref<1x128xf32, #tpu.memory_space<vmem>>, vector<1x128xf32>
    %152 = vector.broadcast %151 : vector<1x128xf32> to vector<8x128xf32>
    %153 = arith.addf %150, %152 : vector<8x128xf32>
    %c0_45 = arith.constant 0 : index
    %c0_46 = arith.constant 0 : index
    %154 = vector.load %arg11[%c0_45, %c0_46] : memref<8x128xf32, #tpu.memory_space<vmem>>, vector<8x128xf32>
    tpu.vector_store %arg11[%c0_45, %c0_46], %153 {strides = array<i32>} : memref<8x128xf32, #tpu.memory_space<vmem>>, vector<8x128xf32>,
    return
  }
  func.func @transform_0(%arg0: i32) -> (i32, i32, i32) {
    %c0_i32 = arith.constant 0 : i32
    %c0_i32_0 = arith.constant 0 : i32
    %c0_i32_1 = arith.constant 0 : i32
    return %arg0, %c0_i32, %c0_i32_0 : i32, i32, i32
  }
  func.func @transform_1(%arg0: i32) -> (i32, i32) {
    %c0_i32 = arith.constant 0 : i32
    %c0_i32_0 = arith.constant 0 : i32
    %c0_i32_1 = arith.constant 0 : i32
    return %c0_i32, %c0_i32_0 : i32, i32
  }
  func.func @transform_2(%arg0: i32) -> (i32, i32) {
    %c0_i32 = arith.constant 0 : i32
    %c0_i32_0 = arith.constant 0 : i32
    %c0_i32_1 = arith.constant 0 : i32
    return %c0_i32, %c0_i32_0 : i32, i32
  }
  func.func @transform_3(%arg0: i32) -> (i32, i32) {
    %c0_i32 = arith.constant 0 : i32
    %c0_i32_0 = arith.constant 0 : i32
    %c0_i32_1 = arith.constant 0 : i32
    return %c0_i32, %c0_i32_0 : i32, i32
  }
  func.func @transform_4(%arg0: i32) -> (i32, i32) {
    %c0_i32 = arith.constant 0 : i32
    %c0_i32_0 = arith.constant 0 : i32
    %c0_i32_1 = arith.constant 0 : i32
    return %c0_i32, %c0_i32_0 : i32, i32
  }
  func.func @transform_5(%arg0: i32) -> (i32, i32) {
    %c0_i32 = arith.constant 0 : i32
    %c0_i32_0 = arith.constant 0 : i32
    %c0_i32_1 = arith.constant 0 : i32
    return %c0_i32, %c0_i32_0 : i32, i32
  }
  func.func @transform_6(%arg0: i32) -> (i32, i32) {
    %c0_i32 = arith.constant 0 : i32
    %c0_i32_0 = arith.constant 0 : i32
    %c0_i32_1 = arith.constant 0 : i32
    return %c0_i32, %c0_i32_0 : i32, i32
  }
  func.func @transform_7(%arg0: i32) -> (i32, i32) {
    %c0_i32 = arith.constant 0 : i32
    %c0_i32_0 = arith.constant 0 : i32
    %c0_i32_1 = arith.constant 0 : i32
    return %c0_i32, %c0_i32_0 : i32, i32
  }
  func.func @transform_8(%arg0: i32) -> (i32, i32) {
    %c0_i32 = arith.constant 0 : i32
    %c0_i32_0 = arith.constant 0 : i32
    %c0_i32_1 = arith.constant 0 : i32
    return %c0_i32, %c0_i32_0 : i32, i32
  }
  func.func @transform_9(%arg0: i32) -> (i32, i32) {
    %c0_i32 = arith.constant 0 : i32
    %c0_i32_0 = arith.constant 0 : i32
    %c0_i32_1 = arith.constant 0 : i32
    return %c0_i32, %c0_i32_0 : i32, i32
  }
  func.func @transform_10(%arg0: i32) -> (i32, i32) {
    %c0_i32 = arith.constant 0 : i32
    %c0_i32_0 = arith.constant 0 : i32
    return %arg0, %c0_i32 : i32, i32
  }
}

</mosaic_0001>

<llo_original>
// kernel: _lambda_.1
$region0: #{_lambda_.1}
  #allocation0 [shape = 'u32[]', space=smem, size = 0x4, offset = 0x4, fixed_abs, tag = 'smem constant byte address 0x4 - core index']
  #allocation1 [shape = 'u32[144,128]{1,0:T(1,128)}', space=vmem, size = 0x12000, scoped, tag = 'internal scratch']
  #allocation2 [shape = 'bf16[8,16,128]{2,1,0:T(16,128)(2,1)}', space=vmem, size = 0x8000, scoped, tag = 'scratch operand']
  %s0 = inlined_call_operand.vmem [shape: f32[16,128,36], index: 0, kind: input, shape index: {}]
  %s1 = inlined_call_operand.vmem [shape: bf16[144,36], index: 1, kind: input, shape index: {}]
  %s2 = inlined_call_operand.vmem [shape: f32[9,1024], index: 2, kind: input, shape index: {}]
  %s3 = inlined_call_operand.vmem [shape: f32[3,1024], index: 3, kind: input, shape index: {}]
  %s4 = inlined_call_operand.vmem [shape: bf16[128,1024], index: 4, kind: input, shape index: {}]
  %s5 = inlined_call_operand.vmem [shape: f32[1,1024], index: 5, kind: input, shape index: {}]
  %s6 = inlined_call_operand.vmem [shape: f32[16,1024], index: 6, kind: input, shape index: {}]
  %s7 = inlined_call_operand.vmem [shape: f32[16,1024], index: 7, kind: input, shape index: {}]
  %s8 = inlined_call_operand.vmem [shape: bf16[1024,128], index: 8, kind: input, shape index: {}]
  %s9 = inlined_call_operand.vmem [shape: f32[1,128], index: 9, kind: input, shape index: {}]
  %s10 = inlined_call_operand.hbm [shape: f32[16,128], index: 10, kind: output, shape index: {}]
  %s11 = sld [smem:[#allocation0]]
  $region73: #{_lambda_.1} parent=0
    _
  %s13 = ssub.s32 1, %s11
  %s14 = scalar_select 0, %s13, %s11
  $region1: #{_lambda_.1} parent=0
    #allocation3 [shape = 'u8[8192]{0}', space=vmem, size = 0x2000, scoped, tag = 'output window, operand 0']
    #allocation4 [shape = 's32[2]{0}', space=sflag, size = 0x8, scoped, tag = 'scoped memory for _lambda_.1']
    %15 = vsyncpa [#allocation4], 0
    %s16 = scalar_lea.sflag [#allocation4], 1
    %17 = vsyncpa %s16, 0
    loop: start=0, step=1, limit=4
    $region2: #{_lambda_.1} parent=1 // loop_pre_header
      _
    $region3: #{_lambda_.1} parent=1 // loop_header
      %s19 = sphi 0, %s23
      %p20 = scmp.ge.s32.totalorder %s19, 4
      %s29 = sphi 0, %s31
      %s32 = sphi 0, %s29
      %s33 = sphi 0, %s32
      %s49 = sphi 0, %s33
      %s53 = sphi 0, %s53
      %s55 = sphi 0, %s53
      %s56 = sphi 0, %s55
      %s70 = sphi 0, %s56
      %s74 = sphi 0, %s74
      %s76 = sphi 0, %s74
      %s77 = sphi 0, %s76
      %s91 = sphi 0, %s77
      %s95 = sphi 0, %s95
      %s97 = sphi 0, %s95
      %s98 = sphi 0, %s97
      %s112 = sphi 0, %s98
      %s116 = sphi 0, %s116
      %s118 = sphi 0, %s116
      %s119 = sphi 0, %s118
      %s133 = sphi 0, %s119
      %s137 = sphi 0, %s137
      %s139 = sphi 0, %s137
      %s140 = sphi 0, %s139
      %s154 = sphi 0, %s140
      %s158 = sphi 0, %s158
      %s160 = sphi 0, %s158
      %s161 = sphi 0, %s160
      %s175 = sphi 0, %s161
      %s179 = sphi 0, %s179
      %s181 = sphi 0, %s179
      %s182 = sphi 0, %s181
      %s196 = sphi 0, %s182
      %s200 = sphi 0, %s200
      %s202 = sphi 0, %s200
      %s203 = sphi 0, %s202
      %s217 = sphi 0, %s203
      %s221 = sphi 0, %s221
      %s223 = sphi 0, %s221
      %s224 = sphi 0, %s223
      %s238 = sphi 0, %s224
      %s244 = sphi 0, %s246
      %s247 = sphi 0, %s244
      %s248 = sphi 0, %s247
      %s264 = sphi 0, %s248
    $region4: #{_lambda_.1} parent=1 // loop_header_branch
      %22 = sbr.rel (%p20) target = $region8
    $region5: #{_lambda_.1} parent=1 // loop_body
      %s24 = ssub.s32 %s19, 1
      %s25 = ssub.s32 %s19, 2
      %s26 = sadd.s32 %s19, 1
      %s27 = ssub.s32 %s19, %s26
      %p28 = scmp.eq.s32.totalorder %s27, 0
      %s30 = sadd.s32 %s29, 1
      %s31 = scalar_select %p28, %s29, %s30
      %p34 = pneg %p28
      %p35 = scmp.eq.s32.totalorder %s19, 1
      %p36 = por %p34, %p35
      %p37 = scmp.ne.s32.totalorder %s29, %s32
      %p38 = scmp.eq.s32.totalorder %s19, 0
      %p39 = por %p37, %p38
      %p40 = scmp.ne.s32.totalorder %s29, %s32
      %p41 = scmp.eq.s32.totalorder %s24, 1
      %p42 = por %p40, %p41
      %p43 = scmp.ne.s32.totalorder %s32, %s33
      %p44 = scmp.eq.s32.totalorder %s24, 0
      %p45 = por %p43, %p44
      %p46 = scmp.ne.s32.totalorder %s32, %s33
      %p47 = scmp.eq.s32.totalorder %s25, 1
      %p48 = por %p46, %p47
      %p50 = scmp.ne.s32.totalorder %s33, %s49
      %p51 = scmp.eq.s32.totalorder %s25, 0
      %p52 = por %p50, %p51
      %s54 = sadd.s32 %s53, 1
      %p57 = scmp.eq.s32.totalorder %s19, 1
      %p58 = scmp.ne.s32.totalorder %s53, %s55
      %p59 = scmp.eq.s32.totalorder %s19, 0
      %p60 = por %p58, %p59
      %p61 = scmp.ne.s32.totalorder %s53, %s55
      %p62 = scmp.eq.s32.totalorder %s24, 1
      %p63 = por %p61, %p62
      %p64 = scmp.ne.s32.totalorder %s55, %s56
      %p65 = scmp.eq.s32.totalorder %s24, 0
      %p66 = por %p64, %p65
      %p67 = scmp.ne.s32.totalorder %s55, %s56
      %p68 = scmp.eq.s32.totalorder %s25, 1
      %p69 = por %p67, %p68
      %p71 = scmp.ne.s32.totalorder %s56, %s70
      %p72 = scmp.eq.s32.totalorder %s25, 0
      %p73 = por %p71, %p72
      %s75 = sadd.s32 %s74, 1
      %p78 = scmp.eq.s32.totalorder %s19, 1
      %p79 = scmp.ne.s32.totalorder %s74, %s76
      %p80 = scmp.eq.s32.totalorder %s19, 0
      %p81 = por %p79, %p80
      %p82 = scmp.ne.s32.totalorder %s74, %s76
      %p83 = scmp.eq.s32.totalorder %s24, 1
      %p84 = por %p82, %p83
      %p85 = scmp.ne.s32.totalorder %s76, %s77
      %p86 = scmp.eq.s32.totalorder %s24, 0
      %p87 = por %p85, %p86
      %p88 = scmp.ne.s32.totalorder %s76, %s77
      %p89 = scmp.eq.s32.totalorder %s25, 1
      %p90 = por %p88, %p89
      %p92 = scmp.ne.s32.totalorder %s77, %s91
      %p93 = scmp.eq.s32.totalorder %s25, 0
      %p94 = por %p92, %p93
      %s96 = sadd.s32 %s95, 1
      %p99 = scmp.eq.s32.totalorder %s19, 1
      %p100 = scmp.ne.s32.totalorder %s95, %s97
      %p101 = scmp.eq.s32.totalorder %s19, 0
      %p102 = por %p100, %p101
      %p103 = scmp.ne.s32.totalorder %s95, %s97
      %p104 = scmp.eq.s32.totalorder %s24, 1
      %p105 = por %p103, %p104
      %p106 = scmp.ne.s32.totalorder %s97, %s98
      %p107 = scmp.eq.s32.totalorder %s24, 0
      %p108 = por %p106, %p107
      %p109 = scmp.ne.s32.totalorder %s97, %s98
      %p110 = scmp.eq.s32.totalorder %s25, 1
      %p111 = por %p109, %p110
      %p113 = scmp.ne.s32.totalorder %s98, %s112
      %p114 = scmp.eq.s32.totalorder %s25, 0
      %p115 = por %p113, %p114
      %s117 = sadd.s32 %s116, 1
      %p120 = scmp.eq.s32.totalorder %s19, 1
      %p121 = scmp.ne.s32.totalorder %s116, %s118
      %p122 = scmp.eq.s32.totalorder %s19, 0
      %p123 = por %p121, %p122
      %p124 = scmp.ne.s32.totalorder %s116, %s118
      %p125 = scmp.eq.s32.totalorder %s24, 1
      %p126 = por %p124, %p125
      %p127 = scmp.ne.s32.totalorder %s118, %s119
      %p128 = scmp.eq.s32.totalorder %s24, 0
      %p129 = por %p127, %p128
      %p130 = scmp.ne.s32.totalorder %s118, %s119
      %p131 = scmp.eq.s32.totalorder %s25, 1
      %p132 = por %p130, %p131
      %p134 = scmp.ne.s32.totalorder %s119, %s133
      %p135 = scmp.eq.s32.totalorder %s25, 0
      %p136 = por %p134, %p135
      %s138 = sadd.s32 %s137, 1
      %p141 = scmp.eq.s32.totalorder %s19, 1
      %p142 = scmp.ne.s32.totalorder %s137, %s139
      %p143 = scmp.eq.s32.totalorder %s19, 0
      %p144 = por %p142, %p143
      %p145 = scmp.ne.s32.totalorder %s137, %s139
      %p146 = scmp.eq.s32.totalorder %s24, 1
      %p147 = por %p145, %p146
      %p148 = scmp.ne.s32.totalorder %s139, %s140
      %p149 = scmp.eq.s32.totalorder %s24, 0
      %p150 = por %p148, %p149
      %p151 = scmp.ne.s32.totalorder %s139, %s140
      %p152 = scmp.eq.s32.totalorder %s25, 1
      %p153 = por %p151, %p152
      %p155 = scmp.ne.s32.totalorder %s140, %s154
      %p156 = scmp.eq.s32.totalorder %s25, 0
      %p157 = por %p155, %p156
      %s159 = sadd.s32 %s158, 1
      %p162 = scmp.eq.s32.totalorder %s19, 1
      %p163 = scmp.ne.s32.totalorder %s158, %s160
      %p164 = scmp.eq.s32.totalorder %s19, 0
      %p165 = por %p163, %p164
      %p166 = scmp.ne.s32.totalorder %s158, %s160
      %p167 = scmp.eq.s32.totalorder %s24, 1
      %p168 = por %p166, %p167
      %p169 = scmp.ne.s32.totalorder %s160, %s161
      %p170 = scmp.eq.s32.totalorder %s24, 0
      %p171 = por %p169, %p170
      %p172 = scmp.ne.s32.totalorder %s160, %s161
      %p173 = scmp.eq.s32.totalorder %s25, 1
      %p174 = por %p172, %p173
      %p176 = scmp.ne.s32.totalorder %s161, %s175
      %p177 = scmp.eq.s32.totalorder %s25, 0
      %p178 = por %p176, %p177
      %s180 = sadd.s32 %s179, 1
      %p183 = scmp.eq.s32.totalorder %s19, 1
      %p184 = scmp.ne.s32.totalorder %s179, %s181
      %p185 = scmp.eq.s32.totalorder %s19, 0
      %p186 = por %p184, %p185
      %p187 = scmp.ne.s32.totalorder %s179, %s181
      %p188 = scmp.eq.s32.totalorder %s24, 1
      %p189 = por %p187, %p188
      %p190 = scmp.ne.s32.totalorder %s181, %s182
      %p191 = scmp.eq.s32.totalorder %s24, 0
      %p192 = por %p190, %p191
      %p193 = scmp.ne.s32.totalorder %s181, %s182
      %p194 = scmp.eq.s32.totalorder %s25, 1
      %p195 = por %p193, %p194
      %p197 = scmp.ne.s32.totalorder %s182, %s196
      %p198 = scmp.eq.s32.totalorder %s25, 0
      %p199 = por %p197, %p198
      %s201 = sadd.s32 %s200, 1
      %p204 = scmp.eq.s32.totalorder %s19, 1
      %p205 = scmp.ne.s32.totalorder %s200, %s202
      %p206 = scmp.eq.s32.totalorder %s19, 0
      %p207 = por %p205, %p206
      %p208 = scmp.ne.s32.totalorder %s200, %s202
      %p209 = scmp.eq.s32.totalorder %s24, 1
      %p210 = por %p208, %p209
      %p211 = scmp.ne.s32.totalorder %s202, %s203
      %p212 = scmp.eq.s32.totalorder %s24, 0
      %p213 = por %p211, %p212
      %p214 = scmp.ne.s32.totalorder %s202, %s203
      %p215 = scmp.eq.s32.totalorder %s25, 1
      %p216 = por %p214, %p215
      %p218 = scmp.ne.s32.totalorder %s203, %s217
      %p219 = scmp.eq.s32.totalorder %s25, 0
      %p220 = por %p218, %p219
      %s222 = sadd.s32 %s221, 1
      %p225 = scmp.eq.s32.totalorder %s19, 1
      %p226 = scmp.ne.s32.totalorder %s221, %s223
      %p227 = scmp.eq.s32.totalorder %s19, 0
      %p228 = por %p226, %p227
      %p229 = scmp.ne.s32.totalorder %s221, %s223
      %p230 = scmp.eq.s32.totalorder %s24, 1
      %p231 = por %p229, %p230
      %p232 = scmp.ne.s32.totalorder %s223, %s224
      %p233 = scmp.eq.s32.totalorder %s24, 0
      %p234 = por %p232, %p233
      %p235 = scmp.ne.s32.totalorder %s223, %s224
      %p236 = scmp.eq.s32.totalorder %s25, 1
      %p237 = por %p235, %p236
      %p239 = scmp.ne.s32.totalorder %s224, %s238
      %p240 = scmp.eq.s32.totalorder %s25, 0
      %p241 = por %p239, %p240
      %s242 = ssub.s32 %s19, %s26
      %p243 = scmp.eq.s32.totalorder %s242, 0
      %s245 = sadd.s32 %s244, 1
      %s246 = scalar_select %p243, %s244, %s245
      %p249 = pneg %p243
      %p250 = scmp.eq.s32.totalorder %s19, 1
      %p251 = por %p249, %p250
      %p252 = scmp.ne.s32.totalorder %s244, %s247
      %p253 = scmp.eq.s32.totalorder %s19, 0
      %p254 = por %p252, %p253
      %p255 = scmp.ne.s32.totalorder %s244, %s247
      %p256 = scmp.eq.s32.totalorder %s24, 1
      %p257 = por %p255, %p256
      %p258 = scmp.ne.s32.totalorder %s247, %s248
      %p259 = scmp.eq.s32.totalorder %s24, 0
      %p260 = por %p258, %p259
      %p261 = scmp.ne.s32.totalorder %s247, %s248
      %p262 = scmp.eq.s32.totalorder %s25, 1
      %p263 = por %p261, %p262
      %p265 = scmp.ne.s32.totalorder %s248, %s264
      %p266 = scmp.eq.s32.totalorder %s25, 0
      %p267 = por %p265, %p266
      %p268 = scmp.le.s32.totalorder 1, %s19
      %p269 = scmp.lt.s32.totalorder %s19, 3
      %p270 = pnand %p268, %p269
      %p271 = pneg %p270
      // Predicated region
      $region9: #{_lambda_.1} parent=5 // pred_check
        _
      $region10: #{_lambda_.1} parent=5 // pred_check_branch
        %273 = sbr.rel (%p270) target = $region12
      $region11: #{_lambda_.1} parent=5 // pred_region
        %s274 = ssub.s32 %s19, 1
        // Predicated region
        $region13: #{_lambda_.1} parent=11 // pred_check
          %p275 = pneg %p66
        $region14: #{_lambda_.1} parent=11 // pred_check_branch
          %277 = sbr.rel (%p275) target = $region16
        $region15: #{_lambda_.1} parent=11 // pred_region
          _
        $region16: #{_lambda_.1} parent=11 // pred_fallthru
          _
        // Predicated region
        $region17: #{_lambda_.1} parent=11 // pred_check
          %p278 = pneg %p87
        $region18: #{_lambda_.1} parent=11 // pred_check_branch
          %280 = sbr.rel (%p278) target = $region20
        $region19: #{_lambda_.1} parent=11 // pred_region
          _
        $region20: #{_lambda_.1} parent=11 // pred_fallthru
          _
        // Predicated region
        $region21: #{_lambda_.1} parent=11 // pred_check
          %p281 = pneg %p108
        $region22: #{_lambda_.1} parent=11 // pred_check_branch
          %283 = sbr.rel (%p281) target = $region24
        $region23: #{_lambda_.1} parent=11 // pred_region
          _
        $region24: #{_lambda_.1} parent=11 // pred_fallthru
          _
        // Predicated region
        $region25: #{_lambda_.1} parent=11 // pred_check
          %p284 = pneg %p129
        $region26: #{_lambda_.1} parent=11 // pred_check_branch
          %286 = sbr.rel (%p284) target = $region28
        $region27: #{_lambda_.1} parent=11 // pred_region
          _
        $region28: #{_lambda_.1} parent=11 // pred_fallthru
          _
        // Predicated region
        $region29: #{_lambda_.1} parent=11 // pred_check
          %p287 = pneg %p150
        $region30: #{_lambda_.1} parent=11 // pred_check_branch
          %289 = sbr.rel (%p287) target = $region32
        $region31: #{_lambda_.1} parent=11 // pred_region
          _
        $region32: #{_lambda_.1} parent=11 // pred_fallthru
          _
        // Predicated region
        $region33: #{_lambda_.1} parent=11 // pred_check
          %p290 = pneg %p171
        $region34: #{_lambda_.1} parent=11 // pred_check_branch
          %292 = sbr.rel (%p290) target = $region36
        $region35: #{_lambda_.1} parent=11 // pred_region
          _
        $region36: #{_lambda_.1} parent=11 // pred_fallthru
          _
        // Predicated region
        $region37: #{_lambda_.1} parent=11 // pred_check
          %p293 = pneg %p192
        $region38: #{_lambda_.1} parent=11 // pred_check_branch
          %295 = sbr.rel (%p293) target = $region40
        $region39: #{_lambda_.1} parent=11 // pred_region
          _
        $region40: #{_lambda_.1} parent=11 // pred_fallthru
          _
        // Predicated region
        $region41: #{_lambda_.1} parent=11 // pred_check
          %p296 = pneg %p213
        $region42: #{_lambda_.1} parent=11 // pred_check_branch
          %298 = sbr.rel (%p296) target = $region44
        $region43: #{_lambda_.1} parent=11 // pred_region
          _
        $region44: #{_lambda_.1} parent=11 // pred_fallthru
          _
        // Predicated region
        $region45: #{_lambda_.1} parent=11 // pred_check
          %p299 = pneg %p234
        $region46: #{_lambda_.1} parent=11 // pred_check_branch
          %301 = sbr.rel (%p299) target = $region48
        $region47: #{_lambda_.1} parent=11 // pred_region
          _
        $region48: #{_lambda_.1} parent=11 // pred_fallthru
          _
      $region12: #{_lambda_.1} parent=5 // pred_fallthru
        _
      %p302 = scmp.lt.s32.totalorder %s19, 2
      // Predicated region
      $region49: #{_lambda_.1} parent=5 // pred_check
        %p303 = pneg %p302
      $region50: #{_lambda_.1} parent=5 // pred_check_branch
        %305 = sbr.rel (%p303) target = $region52
      $region51: #{_lambda_.1} parent=5 // pred_region
        // Predicated region
        $region53: #{_lambda_.1} parent=51 // pred_check
          %p306 = pneg %p39
        $region54: #{_lambda_.1} parent=51 // pred_check_branch
          %308 = sbr.rel (%p306) target = $region56
        $region55: #{_lambda_.1} parent=51 // pred_region
          %s309 = smul.u32 8, %s19
          %p310 = scmp.lt.s32.totalorder %s309, 15
          %s311 = scalar_select %p310, %s309, 15
          %s312 = smul.addr %s311, 16
          %s313 = smul.addr %s312, 8
          %s314 = scalar_lea.vmem %s0, %s313
          %s315 = smul.u32 8, %s19
        $region56: #{_lambda_.1} parent=51 // pred_fallthru
          _
      $region52: #{_lambda_.1} parent=5 // pred_fallthru
        _
      %p316 = scmp.le.s32.totalorder 1, %s19
      %p317 = scmp.lt.s32.totalorder %s19, 3
      %p318 = pnand %p316, %p317
      %p319 = pneg %p318
      // Predicated region
      $region57: #{_lambda_.1} parent=5 // pred_check
        _
      $region58: #{_lambda_.1} parent=5 // pred_check_branch
        %321 = sbr.rel (%p318) target = $region60
      $region59: #{_lambda_.1} parent=5 // pred_region
        %s322 = ssub.s32 %s19, 1
        %s323 = smul.u32 8, %s24
        %p324 = scmp.lt.s32.totalorder %s323, 15
        %s325 = scalar_select %p324, %s323, 15
        %s326 = smul.addr %s325, 16
        %s327 = smul.addr %s326, 8
        %s328 = scalar_lea.vmem %s0, %s327
        %p329 = pneg %p45
        %p330 = pneg %p42
        %p331 = pneg %p66
        %p332 = pneg %p63
        %p333 = pneg %p87
        %p334 = pneg %p84
        %p335 = pneg %p108
        %p336 = pneg %p105
        %p337 = pneg %p129
        %p338 = pneg %p126
        %p339 = pneg %p150
        %p340 = pneg %p147
        %p341 = pneg %p171
        %p342 = pneg %p168
        %p343 = pneg %p192
        %p344 = pneg %p189
        %p345 = pneg %p213
        %p346 = pneg %p210
        %p347 = pneg %p234
        %p348 = pneg %p231
        %p349 = pneg %p260
        %p350 = pneg %p257
        %s351 = sand.u32 %s247, 1
        %s352 = scalar_lea.sflag [#allocation4], %s351
        %s353 = sand.u32 %s247, 1
        %s354 = smul.addr %s353, 8
        %s355 = scalar_lea.vmem [#allocation3], %s354
        %s356 = smul.u32 8, %s24
        %p357 = scmp.lt.s32.totalorder %s356, 15
        %s358 = scalar_select %p357, %s356, 15
        %s359 = smul.addr %s358, 16
        %s360 = smul.addr %s359, 8
        %s361 = scalar_lea.vmem %s0, %s360
        %s362 = smul.u32 8, %s24
        %v364 = vld [vmem:[%s361] sm:$0xff]
        %v365 = vld [vmem:[%s361 + $0x8] sm:$0xff]
        %v366 = vld [vmem:[%s361 + $0x10] sm:$0xff]
        %v367 = vld [vmem:[%s361 + $0x18] sm:$0xff]
        %v368 = vld [vmem:[%s361 + $0x20] sm:$0xff]
        %v369 = vld [vmem:[%s361 + $0x28] sm:$0xff]
        %v370 = vld [vmem:[%s361 + $0x30] sm:$0xff]
        %v371 = vld [vmem:[%s361 + $0x38] sm:$0xff]
        %v372 = vld [vmem:[%s361 + $0x40] sm:$0xff]
        %v373 = vld [vmem:[%s361 + $0x48] sm:$0xff]
        %v374 = vld [vmem:[%s361 + $0x50] sm:$0xff]
        %v375 = vld [vmem:[%s361 + $0x58] sm:$0xff]
        %v376 = vld [vmem:[%s361 + $0x60] sm:$0xff]
        %v377 = vld [vmem:[%s361 + $0x68] sm:$0xff]
        %v378 = vld [vmem:[%s361 + $0x70] sm:$0xff]
        %v379 = vld [vmem:[%s361 + $0x78] sm:$0xff]
        %v380 = vld [vmem:[%s361 + $0x80] sm:$0xff]
        %v381 = vld [vmem:[%s361 + $0x88] sm:$0xff]
        %v382 = vld [vmem:[%s361 + $0x90] sm:$0xff]
        %v383 = vld [vmem:[%s361 + $0x98] sm:$0xff]
        %v384 = vld [vmem:[%s361 + $0xa0] sm:$0xff]
        %v385 = vld [vmem:[%s361 + $0xa8] sm:$0xff]
        %v386 = vld [vmem:[%s361 + $0xb0] sm:$0xff]
        %v387 = vld [vmem:[%s361 + $0xb8] sm:$0xff]
        %v388 = vld [vmem:[%s361 + $0xc0] sm:$0xff]
        %v389 = vld [vmem:[%s361 + $0xc8] sm:$0xff]
        %v390 = vld [vmem:[%s361 + $0xd0] sm:$0xff]
        %v391 = vld [vmem:[%s361 + $0xd8] sm:$0xff]
        %v392 = vld [vmem:[%s361 + $0xe0] sm:$0xff]
        %v393 = vld [vmem:[%s361 + $0xe8] sm:$0xff]
        %v394 = vld [vmem:[%s361 + $0xf0] sm:$0xff]
        %v395 = vld [vmem:[%s361 + $0xf8] sm:$0xff]
        %v396 = vld [vmem:[%s361 + $0x100] sm:$0xff]
        %v397 = vld [vmem:[%s361 + $0x108] sm:$0xff]
        %v398 = vld [vmem:[%s361 + $0x110] sm:$0xff]
        %v399 = vld [vmem:[%s361 + $0x118] sm:$0xff]
        %v400 = vld [vmem:[%s361 + $0x120] sm:$0xff]
        %v401 = vld [vmem:[%s361 + $0x128] sm:$0xff]
        %v402 = vld [vmem:[%s361 + $0x130] sm:$0xff]
        %v403 = vld [vmem:[%s361 + $0x138] sm:$0xff]
        %v404 = vld [vmem:[%s361 + $0x140] sm:$0xff]
        %v405 = vld [vmem:[%s361 + $0x148] sm:$0xff]
        %v406 = vld [vmem:[%s361 + $0x150] sm:$0xff]
        %v407 = vld [vmem:[%s361 + $0x158] sm:$0xff]
        %v408 = vld [vmem:[%s361 + $0x160] sm:$0xff]
        %v409 = vld [vmem:[%s361 + $0x168] sm:$0xff]
        %v410 = vld [vmem:[%s361 + $0x170] sm:$0xff]
        %v411 = vld [vmem:[%s361 + $0x178] sm:$0xff]
        %v412 = vld [vmem:[%s361 + $0x180] sm:$0xff]
        %v413 = vld [vmem:[%s361 + $0x188] sm:$0xff]
        %v414 = vld [vmem:[%s361 + $0x190] sm:$0xff]
        %v415 = vld [vmem:[%s361 + $0x198] sm:$0xff]
        %v416 = vld [vmem:[%s361 + $0x1a0] sm:$0xff]
        %v417 = vld [vmem:[%s361 + $0x1a8] sm:$0xff]
        %v418 = vld [vmem:[%s361 + $0x1b0] sm:$0xff]
        %v419 = vld [vmem:[%s361 + $0x1b8] sm:$0xff]
        %v420 = vld [vmem:[%s361 + $0x1c0] sm:$0xff]
        %v421 = vld [vmem:[%s361 + $0x1c8] sm:$0xff]
        %v422 = vld [vmem:[%s361 + $0x1d0] sm:$0xff]
        %v423 = vld [vmem:[%s361 + $0x1d8] sm:$0xff]
        %v424 = vld [vmem:[%s361 + $0x1e0] sm:$0xff]
        %v425 = vld [vmem:[%s361 + $0x1e8] sm:$0xff]
        %v426 = vld [vmem:[%s361 + $0x1f0] sm:$0xff]
        %v427 = vld [vmem:[%s361 + $0x1f8] sm:$0xff]
        %v428 = vld [vmem:[%s361 + $0x200] sm:$0xff]
        %v429 = vld [vmem:[%s361 + $0x208] sm:$0xff]
        %v430 = vld [vmem:[%s361 + $0x210] sm:$0xff]
        %v431 = vld [vmem:[%s361 + $0x218] sm:$0xff]
        %v432 = vld [vmem:[%s361 + $0x220] sm:$0xff]
        %v433 = vld [vmem:[%s361 + $0x228] sm:$0xff]
        %v434 = vld [vmem:[%s361 + $0x230] sm:$0xff]
        %v435 = vld [vmem:[%s361 + $0x238] sm:$0xff]
        %v436 = vld [vmem:[%s361 + $0x240] sm:$0xff]
        %v437 = vld [vmem:[%s361 + $0x248] sm:$0xff]
        %v438 = vld [vmem:[%s361 + $0x250] sm:$0xff]
        %v439 = vld [vmem:[%s361 + $0x258] sm:$0xff]
        %v440 = vld [vmem:[%s361 + $0x260] sm:$0xff]
        %v441 = vld [vmem:[%s361 + $0x268] sm:$0xff]
        %v442 = vld [vmem:[%s361 + $0x270] sm:$0xff]
        %v443 = vld [vmem:[%s361 + $0x278] sm:$0xff]
        %v444 = vld [vmem:[%s361 + $0x280] sm:$0xff]
        %v445 = vld [vmem:[%s361 + $0x288] sm:$0xff]
        %v446 = vld [vmem:[%s361 + $0x290] sm:$0xff]
        %v447 = vld [vmem:[%s361 + $0x298] sm:$0xff]
        %v448 = vld [vmem:[%s361 + $0x2a0] sm:$0xff]
        %v449 = vld [vmem:[%s361 + $0x2a8] sm:$0xff]
        %v450 = vld [vmem:[%s361 + $0x2b0] sm:$0xff]
        %v451 = vld [vmem:[%s361 + $0x2b8] sm:$0xff]
        %v452 = vld [vmem:[%s361 + $0x2c0] sm:$0xff]
        %v453 = vld [vmem:[%s361 + $0x2c8] sm:$0xff]
        %v454 = vld [vmem:[%s361 + $0x2d0] sm:$0xff]
        %v455 = vld [vmem:[%s361 + $0x2d8] sm:$0xff]
        %v456 = vld [vmem:[%s361 + $0x2e0] sm:$0xff]
        %v457 = vld [vmem:[%s361 + $0x2e8] sm:$0xff]
        %v458 = vld [vmem:[%s361 + $0x2f0] sm:$0xff]
        %v459 = vld [vmem:[%s361 + $0x2f8] sm:$0xff]
        %v460 = vld [vmem:[%s361 + $0x300] sm:$0xff]
        %v461 = vld [vmem:[%s361 + $0x308] sm:$0xff]
        %v462 = vld [vmem:[%s361 + $0x310] sm:$0xff]
        %v463 = vld [vmem:[%s361 + $0x318] sm:$0xff]
        %v464 = vld [vmem:[%s361 + $0x320] sm:$0xff]
        %v465 = vld [vmem:[%s361 + $0x328] sm:$0xff]
        %v466 = vld [vmem:[%s361 + $0x330] sm:$0xff]
        %v467 = vld [vmem:[%s361 + $0x338] sm:$0xff]
        %v468 = vld [vmem:[%s361 + $0x340] sm:$0xff]
        %v469 = vld [vmem:[%s361 + $0x348] sm:$0xff]
        %v470 = vld [vmem:[%s361 + $0x350] sm:$0xff]
        %v471 = vld [vmem:[%s361 + $0x358] sm:$0xff]
        %v472 = vld [vmem:[%s361 + $0x360] sm:$0xff]
        %v473 = vld [vmem:[%s361 + $0x368] sm:$0xff]
        %v474 = vld [vmem:[%s361 + $0x370] sm:$0xff]
        %v475 = vld [vmem:[%s361 + $0x378] sm:$0xff]
        %v476 = vld [vmem:[%s361 + $0x380] sm:$0xff]
        %v477 = vld [vmem:[%s361 + $0x388] sm:$0xff]
        %v478 = vld [vmem:[%s361 + $0x390] sm:$0xff]
        %v479 = vld [vmem:[%s361 + $0x398] sm:$0xff]
        %v480 = vld [vmem:[%s361 + $0x3a0] sm:$0xff]
        %v481 = vld [vmem:[%s361 + $0x3a8] sm:$0xff]
        %v482 = vld [vmem:[%s361 + $0x3b0] sm:$0xff]
        %v483 = vld [vmem:[%s361 + $0x3b8] sm:$0xff]
        %v484 = vld [vmem:[%s361 + $0x3c0] sm:$0xff]
        %v485 = vld [vmem:[%s361 + $0x3c8] sm:$0xff]
        %v486 = vld [vmem:[%s361 + $0x3d0] sm:$0xff]
        %v487 = vld [vmem:[%s361 + $0x3d8] sm:$0xff]
        %v488 = vld [vmem:[%s361 + $0x3e0] sm:$0xff]
        %v489 = vld [vmem:[%s361 + $0x3e8] sm:$0xff]
        %v490 = vld [vmem:[%s361 + $0x3f0] sm:$0xff]
        %v491 = vld [vmem:[%s361 + $0x3f8] sm:$0xff]
        %v492 = vpack.c.bf16 %v365, %v364
        %v493 = vpack.c.bf16 %v367, %v366
        %v494 = vpack.c.bf16 %v369, %v368
        %v495 = vpack.c.bf16 %v371, %v370
        %v496 = vpack.c.bf16 %v373, %v372
        %v497 = vpack.c.bf16 %v375, %v374
        %v498 = vpack.c.bf16 %v377, %v376
        %v499 = vpack.c.bf16 %v379, %v378
        %v500 = vpack.c.bf16 %v381, %v380
        %v501 = vpack.c.bf16 %v383, %v382
        %v502 = vpack.c.bf16 %v385, %v384
        %v503 = vpack.c.bf16 %v387, %v386
        %v504 = vpack.c.bf16 %v389, %v388
        %v505 = vpack.c.bf16 %v391, %v390
        %v506 = vpack.c.bf16 %v393, %v392
        %v507 = vpack.c.bf16 %v395, %v394
        %v508 = vpack.c.bf16 %v397, %v396
        %v509 = vpack.c.bf16 %v399, %v398
        %v510 = vpack.c.bf16 %v401, %v400
        %v511 = vpack.c.bf16 %v403, %v402
        %v512 = vpack.c.bf16 %v405, %v404
        %v513 = vpack.c.bf16 %v407, %v406
        %v514 = vpack.c.bf16 %v409, %v408
        %v515 = vpack.c.bf16 %v411, %v410
        %v516 = vpack.c.bf16 %v413, %v412
        %v517 = vpack.c.bf16 %v415, %v414
        %v518 = vpack.c.bf16 %v417, %v416
        %v519 = vpack.c.bf16 %v419, %v418
        %v520 = vpack.c.bf16 %v421, %v420
        %v521 = vpack.c.bf16 %v423, %v422
        %v522 = vpack.c.bf16 %v425, %v424
        %v523 = vpack.c.bf16 %v427, %v426
        %v524 = vpack.c.bf16 %v429, %v428
        %v525 = vpack.c.bf16 %v431, %v430
        %v526 = vpack.c.bf16 %v433, %v432
        %v527 = vpack.c.bf16 %v435, %v434
        %v528 = vpack.c.bf16 %v437, %v436
        %v529 = vpack.c.bf16 %v439, %v438
        %v530 = vpack.c.bf16 %v441, %v440
        %v531 = vpack.c.bf16 %v443, %v442
        %v532 = vpack.c.bf16 %v445, %v444
        %v533 = vpack.c.bf16 %v447, %v446
        %v534 = vpack.c.bf16 %v449, %v448
        %v535 = vpack.c.bf16 %v451, %v450
        %v536 = vpack.c.bf16 %v453, %v452
        %v537 = vpack.c.bf16 %v455, %v454
        %v538 = vpack.c.bf16 %v457, %v456
        %v539 = vpack.c.bf16 %v459, %v458
        %v540 = vpack.c.bf16 %v461, %v460
        %v541 = vpack.c.bf16 %v463, %v462
        %v542 = vpack.c.bf16 %v465, %v464
        %v543 = vpack.c.bf16 %v467, %v466
        %v544 = vpack.c.bf16 %v469, %v468
        %v545 = vpack.c.bf16 %v471, %v470
        %v546 = vpack.c.bf16 %v473, %v472
        %v547 = vpack.c.bf16 %v475, %v474
        %v548 = vpack.c.bf16 %v477, %v476
        %v549 = vpack.c.bf16 %v479, %v478
        %v550 = vpack.c.bf16 %v481, %v480
        %v551 = vpack.c.bf16 %v483, %v482
        %v552 = vpack.c.bf16 %v485, %v484
        %v553 = vpack.c.bf16 %v487, %v486
        %v554 = vpack.c.bf16 %v489, %v488
        %v555 = vpack.c.bf16 %v491, %v490
        %v556 = vld [vmem:[%s1] sm:$0xf]
        %v557 = vld [vmem:[%s1 + $0x4] sm:$0xf]
        %v558 = vld [vmem:[%s1 + $0x8] sm:$0xf]
        %v559 = vld [vmem:[%s1 + $0xc] sm:$0xf]
        %v560 = vld [vmem:[%s1 + $0x10] sm:$0xf]
        %v561 = vld [vmem:[%s1 + $0x14] sm:$0xf]
        %v562 = vld [vmem:[%s1 + $0x18] sm:$0xf]
        %v563 = vld [vmem:[%s1 + $0x1c] sm:$0xf]
        %v564 = vld [vmem:[%s1 + $0x20] sm:$0xf]
        %v565 = vld [vmem:[%s1 + $0x24] sm:$0xf]
        %v566 = vld [vmem:[%s1 + $0x28] sm:$0xf]
        %v567 = vld [vmem:[%s1 + $0x2c] sm:$0xf]
        %v568 = vld [vmem:[%s1 + $0x30] sm:$0xf]
        %v569 = vld [vmem:[%s1 + $0x34] sm:$0xf]
        %v570 = vld [vmem:[%s1 + $0x38] sm:$0xf]
        %v571 = vld [vmem:[%s1 + $0x3c] sm:$0xf]
        %v572 = vld [vmem:[%s1 + $0x40] sm:$0xf]
        %v573 = vld [vmem:[%s1 + $0x44] sm:$0xf]
        %v592 = vunpack.c.l.b16 %v556
        %v593 = vunpack.c.l.b16 %v557
        %v594 = vunpack.c.l.b16 %v558
        %v595 = vunpack.c.l.b16 %v559
        %v596 = vunpack.c.l.b16 %v560
        %v597 = vunpack.c.l.b16 %v561
        %v598 = vunpack.c.l.b16 %v562
        %v599 = vunpack.c.l.b16 %v563
        %v600 = vunpack.c.l.b16 %v564
        %v601 = vunpack.c.l.b16 %v565
        %v602 = vunpack.c.l.b16 %v566
        %v603 = vunpack.c.l.b16 %v567
        %v604 = vunpack.c.l.b16 %v568
        %v605 = vunpack.c.l.b16 %v569
        %v606 = vunpack.c.l.b16 %v570
        %v607 = vunpack.c.l.b16 %v571
        %v608 = vunpack.c.l.b16 %v572
        %v609 = vunpack.c.l.b16 %v573
        %v610 = vpack.c.b16 %v593, %v592
        %v611 = vpack.c.b16 %v595, %v594
        %v612 = vpack.c.b16 %v597, %v596
        %v613 = vpack.c.b16 %v599, %v598
        %v614 = vpack.c.b16 %v601, %v600
        %v615 = vpack.c.b16 %v603, %v602
        %v616 = vpack.c.b16 %v605, %v604
        %v617 = vpack.c.b16 %v607, %v606
        %v618 = vpack.c.b16 %v609, %v608
        %vm619 = vcmask 293888
        %v621 = vsel %vm619, %v610, 0
        %v624 = vsel %vm619, %v611, 0
        %v627 = vsel %vm619, %v612, 0
        %v630 = vsel %vm619, %v613, 0
        %v633 = vsel %vm619, %v614, 0
        %v636 = vsel %vm619, %v615, 0
        %v639 = vsel %vm619, %v616, 0
        %v642 = vsel %vm619, %v617, 0
        %v645 = vsel %vm619, %v618, 0
        %v648 = vsel %vm619, %v492, 0
        %v651 = vsel %vm619, %v493, 0
        %v654 = vsel %vm619, %v494, 0
        %v657 = vsel %vm619, %v495, 0
        %v660 = vsel %vm619, %v496, 0
        %v663 = vsel %vm619, %v497, 0
        %v666 = vsel %vm619, %v498, 0
        %v669 = vsel %vm619, %v499, 0
        %v672 = vsel %vm619, %v500, 0
        %v675 = vsel %vm619, %v501, 0
        %v678 = vsel %vm619, %v502, 0
        %v681 = vsel %vm619, %v503, 0
        %v684 = vsel %vm619, %v504, 0
        %v687 = vsel %vm619, %v505, 0
        %v690 = vsel %vm619, %v506, 0
        %v693 = vsel %vm619, %v507, 0
        %v696 = vsel %vm619, %v508, 0
        %v699 = vsel %vm619, %v509, 0
        %v702 = vsel %vm619, %v510, 0
        %v705 = vsel %vm619, %v511, 0
        %v708 = vsel %vm619, %v512, 0
        %v711 = vsel %vm619, %v513, 0
        %v714 = vsel %vm619, %v514, 0
        %v717 = vsel %vm619, %v515, 0
        %v720 = vsel %vm619, %v516, 0
        %v723 = vsel %vm619, %v517, 0
        %v726 = vsel %vm619, %v518, 0
        %v729 = vsel %vm619, %v519, 0
        %v732 = vsel %vm619, %v520, 0
        %v735 = vsel %vm619, %v521, 0
        %v738 = vsel %vm619, %v522, 0
        %v741 = vsel %vm619, %v523, 0
        %v744 = vsel %vm619, %v524, 0
        %v747 = vsel %vm619, %v525, 0
        %v750 = vsel %vm619, %v526, 0
        %v753 = vsel %vm619, %v527, 0
        %v756 = vsel %vm619, %v528, 0
        %v759 = vsel %vm619, %v529, 0
        %v762 = vsel %vm619, %v530, 0
        %v765 = vsel %vm619, %v531, 0
        %v768 = vsel %vm619, %v532, 0
        %v771 = vsel %vm619, %v533, 0
        %v774 = vsel %vm619, %v534, 0
        %v777 = vsel %vm619, %v535, 0
        %v780 = vsel %vm619, %v536, 0
        %v783 = vsel %vm619, %v537, 0
        %v786 = vsel %vm619, %v538, 0
        %v789 = vsel %vm619, %v539, 0
        %v792 = vsel %vm619, %v540, 0
        %v795 = vsel %vm619, %v541, 0
        %v798 = vsel %vm619, %v542, 0
        %v801 = vsel %vm619, %v543, 0
        %v804 = vsel %vm619, %v544, 0
        %v807 = vsel %vm619, %v545, 0
        %v810 = vsel %vm619, %v546, 0
        %v813 = vsel %vm619, %v547, 0
        %v816 = vsel %vm619, %v548, 0
        %v819 = vsel %vm619, %v549, 0
        %v822 = vsel %vm619, %v550, 0
        %v825 = vsel %vm619, %v551, 0
        %v828 = vsel %vm619, %v552, 0
        %v831 = vsel %vm619, %v553, 0
        %v834 = vsel %vm619, %v554, 0
        %v837 = vsel %vm619, %v555, 0
        %839 = vmatprep.subr.bf16.mxu0 0
        %840 = vmatpush1.bf16.xpose.msra.mxu0 %v648
        %841 = vmatprep.subr.bf16.mxu0 0
        %842 = vmatpush1.bf16.xpose.msra.mxu0 %v651
        %843 = vmatprep.subr.bf16.mxu0 0
        %844 = vmatpush1.bf16.xpose.msra.mxu0 %v654
        %845 = vmatprep.subr.bf16.mxu0 0
        %846 = vmatpush1.bf16.xpose.msra.mxu0 %v657
        %847 = vmatprep.subr.bf16.mxu0 0
        %848 = vmatpush1.bf16.xpose.msra.mxu0 %v660
        %849 = vmatprep.subr.bf16.mxu0 0
        %850 = vmatpush1.bf16.xpose.msra.mxu0 %v663
        %851 = vmatprep.subr.bf16.mxu0 0
        %852 = vmatpush1.bf16.xpose.msra.mxu0 %v666
        %853 = vmatprep.subr.bf16.mxu0 0
        %854 = vmatpush1.bf16.xpose.msra.mxu0 %v669
        %855 = vmatprep.subr.bf16.mxu0 0
        %856 = vmatpush1.bf16.xpose.msra.mxu0 %v672
        %857 = vmatprep.subr.bf16.mxu0 0
        %858 = vmatpush1.bf16.xpose.msra.mxu0 %v675
        %859 = vmatprep.subr.bf16.mxu0 0
        %860 = vmatpush1.bf16.xpose.msra.mxu0 %v678
        %861 = vmatprep.subr.bf16.mxu0 0
        %862 = vmatpush1.bf16.xpose.msra.mxu0 %v681
        %863 = vmatprep.subr.bf16.mxu0 0
        %864 = vmatpush1.bf16.xpose.msra.mxu0 %v684
        %865 = vmatprep.subr.bf16.mxu0 0
        %866 = vmatpush1.bf16.xpose.msra.mxu0 %v687
        %867 = vmatprep.subr.bf16.mxu0 0
        %868 = vmatpush1.bf16.xpose.msra.mxu0 %v690
        %869 = vmatprep.subr.bf16.mxu0 0
        %870 = vmatpush1.bf16.xpose.msra.mxu0 %v693
        %871 = vmatprep.mubr.bf16.mxu0 0
        %872 = vmatmul.mubr.bf16.gmra.mrb[0].mxu0 %v621
        %v873 = vpop.f32.mrb[0].mxu0
        %v874 = vadd.f32 0.0, %v873
        %v875 = vpop.f32.mrb[0].mxu0
        %v876 = vadd.f32 0.0, %v875
        %v877 = vpop.f32.mrb[0].mxu0
        %v878 = vadd.f32 0.0, %v877
        %v879 = vpop.f32.mrb[0].mxu0
        %v880 = vadd.f32 0.0, %v879
        %881 = vmatprep.mubr.bf16.mxu0 0
        %882 = vmatmul.mubr.bf16.gmra.mrb[0].mxu0 %v624
        %v883 = vpop.f32.mrb[0].mxu0
        %v884 = vadd.f32 0.0, %v883
        %v885 = vpop.f32.mrb[0].mxu0
        %v886 = vadd.f32 0.0, %v885
        %v887 = vpop.f32.mrb[0].mxu0
        %v888 = vadd.f32 0.0, %v887
        %v889 = vpop.f32.mrb[0].mxu0
        %v890 = vadd.f32 0.0, %v889
        %891 = vmatprep.mubr.bf16.mxu0 0
        %892 = vmatmul.mubr.bf16.gmra.mrb[0].mxu0 %v627
        %v893 = vpop.f32.mrb[0].mxu0
        %v894 = vadd.f32 0.0, %v893
        %v895 = vpop.f32.mrb[0].mxu0
        %v896 = vadd.f32 0.0, %v895
        %v897 = vpop.f32.mrb[0].mxu0
        %v898 = vadd.f32 0.0, %v897
        %v899 = vpop.f32.mrb[0].mxu0
        %v900 = vadd.f32 0.0, %v899
        %901 = vmatprep.mubr.bf16.mxu0 0
        %902 = vmatmul.mubr.bf16.gmra.mrb[0].mxu0 %v630
        %v903 = vpop.f32.mrb[0].mxu0
        %v904 = vadd.f32 0.0, %v903
        %v905 = vpop.f32.mrb[0].mxu0
        %v906 = vadd.f32 0.0, %v905
        %v907 = vpop.f32.mrb[0].mxu0
        %v908 = vadd.f32 0.0, %v907
        %v909 = vpop.f32.mrb[0].mxu0
        %v910 = vadd.f32 0.0, %v909
        %911 = vmatprep.mubr.bf16.mxu0 0
        %912 = vmatmul.mubr.bf16.gmra.mrb[0].mxu0 %v633
        %v913 = vpop.f32.mrb[0].mxu0
        %v914 = vadd.f32 0.0, %v913
        %v915 = vpop.f32.mrb[0].mxu0
        %v916 = vadd.f32 0.0, %v915
        %v917 = vpop.f32.mrb[0].mxu0
        %v918 = vadd.f32 0.0, %v917
        %v919 = vpop.f32.mrb[0].mxu0
        %v920 = vadd.f32 0.0, %v919
        %921 = vmatprep.mubr.bf16.mxu0 0
        %922 = vmatmul.mubr.bf16.gmra.mrb[0].mxu0 %v636
        %v923 = vpop.f32.mrb[0].mxu0
        %v924 = vadd.f32 0.0, %v923
        %v925 = vpop.f32.mrb[0].mxu0
        %v926 = vadd.f32 0.0, %v925
        %v927 = vpop.f32.mrb[0].mxu0
        %v928 = vadd.f32 0.0, %v927
        %v929 = vpop.f32.mrb[0].mxu0
        %v930 = vadd.f32 0.0, %v929
        %931 = vmatprep.mubr.bf16.mxu0 0
        %932 = vmatmul.mubr.bf16.gmra.mrb[0].mxu0 %v639
        %v933 = vpop.f32.mrb[0].mxu0
        %v934 = vadd.f32 0.0, %v933
        %v935 = vpop.f32.mrb[0].mxu0
        %v936 = vadd.f32 0.0, %v935
        %v937 = vpop.f32.mrb[0].mxu0
        %v938 = vadd.f32 0.0, %v937
        %v939 = vpop.f32.mrb[0].mxu0
        %v940 = vadd.f32 0.0, %v939
        %941 = vmatprep.mubr.bf16.mxu0 0
        %942 = vmatmul.mubr.bf16.gmra.mrb[0].mxu0 %v642
        %v943 = vpop.f32.mrb[0].mxu0
        %v944 = vadd.f32 0.0, %v943
        %v945 = vpop.f32.mrb[0].mxu0
        %v946 = vadd.f32 0.0, %v945
        %v947 = vpop.f32.mrb[0].mxu0
        %v948 = vadd.f32 0.0, %v947
        %v949 = vpop.f32.mrb[0].mxu0
        %v950 = vadd.f32 0.0, %v949
        %951 = vmatprep.mubr.bf16.mxu0 0
        %952 = vmatmul.mubr.bf16.gmra.mrb[0].mxu0 %v645
        %v953 = vpop.f32.mrb[0].mxu0
        %v954 = vadd.f32 0.0, %v953
        %v955 = vpop.f32.mrb[0].mxu0
        %v956 = vadd.f32 0.0, %v955
        %v957 = vpop.f32.mrb[0].mxu0
        %v958 = vadd.f32 0.0, %v957
        %v959 = vpop.f32.mrb[0].mxu0
        %v960 = vadd.f32 0.0, %v959
        %961 = vdwg.mxu0
        %962 = vmatprep.subr.bf16.mxu0 0
        %963 = vmatpush1.bf16.xpose.msra.mxu0 %v696
        %964 = vmatprep.subr.bf16.mxu0 0
        %965 = vmatpush1.bf16.xpose.msra.mxu0 %v699
        %966 = vmatprep.subr.bf16.mxu0 0
        %967 = vmatpush1.bf16.xpose.msra.mxu0 %v702
        %968 = vmatprep.subr.bf16.mxu0 0
        %969 = vmatpush1.bf16.xpose.msra.mxu0 %v705
        %970 = vmatprep.subr.bf16.mxu0 0
        %971 = vmatpush1.bf16.xpose.msra.mxu0 %v708
        %972 = vmatprep.subr.bf16.mxu0 0
        %973 = vmatpush1.bf16.xpose.msra.mxu0 %v711
        %974 = vmatprep.subr.bf16.mxu0 0
        %975 = vmatpush1.bf16.xpose.msra.mxu0 %v714
        %976 = vmatprep.subr.bf16.mxu0 0
        %977 = vmatpush1.bf16.xpose.msra.mxu0 %v717
        %978 = vmatprep.subr.bf16.mxu0 0
        %979 = vmatpush1.bf16.xpose.msra.mxu0 %v720
        %980 = vmatprep.subr.bf16.mxu0 0
        %981 = vmatpush1.bf16.xpose.msra.mxu0 %v723
        %982 = vmatprep.subr.bf16.mxu0 0
        %983 = vmatpush1.bf16.xpose.msra.mxu0 %v726
        %984 = vmatprep.subr.bf16.mxu0 0
        %985 = vmatpush1.bf16.xpose.msra.mxu0 %v729
        %986 = vmatprep.subr.bf16.mxu0 0
        %987 = vmatpush1.bf16.xpose.msra.mxu0 %v732
        %988 = vmatprep.subr.bf16.mxu0 0
        %989 = vmatpush1.bf16.xpose.msra.mxu0 %v735
        %990 = vmatprep.subr.bf16.mxu0 0
        %991 = vmatpush1.bf16.xpose.msra.mxu0 %v738
        %992 = vmatprep.subr.bf16.mxu0 0
        %993 = vmatpush1.bf16.xpose.msra.mxu0 %v741
        %994 = vmatprep.mubr.bf16.mxu0 0
        %995 = vmatmul.mubr.bf16.gmra.mrb[0].mxu0 %v621
        %v996 = vpop.f32.mrb[0].mxu0
        %v997 = vadd.f32 0.0, %v996
        %v998 = vpop.f32.mrb[0].mxu0
        %v999 = vadd.f32 0.0, %v998
        %v1000 = vpop.f32.mrb[0].mxu0
        %v1001 = vadd.f32 0.0, %v1000
        %v1002 = vpop.f32.mrb[0].mxu0
        %v1003 = vadd.f32 0.0, %v1002
        %1004 = vmatprep.mubr.bf16.mxu0 0
        %1005 = vmatmul.mubr.bf16.gmra.mrb[0].mxu0 %v624
        %v1006 = vpop.f32.mrb[0].mxu0
        %v1007 = vadd.f32 0.0, %v1006
        %v1008 = vpop.f32.mrb[0].mxu0
        %v1009 = vadd.f32 0.0, %v1008
        %v1010 = vpop.f32.mrb[0].mxu0
        %v1011 = vadd.f32 0.0, %v1010
        %v1012 = vpop.f32.mrb[0].mxu0
        %v1013 = vadd.f32 0.0, %v1012
        %1014 = vmatprep.mubr.bf16.mxu0 0
        %1015 = vmatmul.mubr.bf16.gmra.mrb[0].mxu0 %v627
        %v1016 = vpop.f32.mrb[0].mxu0
        %v1017 = vadd.f32 0.0, %v1016
        %v1018 = vpop.f32.mrb[0].mxu0
        %v1019 = vadd.f32 0.0, %v1018
        %v1020 = vpop.f32.mrb[0].mxu0
        %v1021 = vadd.f32 0.0, %v1020
        %v1022 = vpop.f32.mrb[0].mxu0
        %v1023 = vadd.f32 0.0, %v1022
        %1024 = vmatprep.mubr.bf16.mxu0 0
        %1025 = vmatmul.mubr.bf16.gmra.mrb[0].mxu0 %v630
        %v1026 = vpop.f32.mrb[0].mxu0
        %v1027 = vadd.f32 0.0, %v1026
        %v1028 = vpop.f32.mrb[0].mxu0
        %v1029 = vadd.f32 0.0, %v1028
        %v1030 = vpop.f32.mrb[0].mxu0
        %v1031 = vadd.f32 0.0, %v1030
        %v1032 = vpop.f32.mrb[0].mxu0
        %v1033 = vadd.f32 0.0, %v1032
        %1034 = vmatprep.mubr.bf16.mxu0 0
        %1035 = vmatmul.mubr.bf16.gmra.mrb[0].mxu0 %v633
        %v1036 = vpop.f32.mrb[0].mxu0
        %v1037 = vadd.f32 0.0, %v1036
        %v1038 = vpop.f32.mrb[0].mxu0
        %v1039 = vadd.f32 0.0, %v1038
        %v1040 = vpop.f32.mrb[0].mxu0
        %v1041 = vadd.f32 0.0, %v1040
        %v1042 = vpop.f32.mrb[0].mxu0
        %v1043 = vadd.f32 0.0, %v1042
        %1044 = vmatprep.mubr.bf16.mxu0 0
        %1045 = vmatmul.mubr.bf16.gmra.mrb[0].mxu0 %v636
        %v1046 = vpop.f32.mrb[0].mxu0
        %v1047 = vadd.f32 0.0, %v1046
        %v1048 = vpop.f32.mrb[0].mxu0
        %v1049 = vadd.f32 0.0, %v1048
        %v1050 = vpop.f32.mrb[0].mxu0
        %v1051 = vadd.f32 0.0, %v1050
        %v1052 = vpop.f32.mrb[0].mxu0
        %v1053 = vadd.f32 0.0, %v1052
        %1054 = vmatprep.mubr.bf16.mxu0 0
        %1055 = vmatmul.mubr.bf16.gmra.mrb[0].mxu0 %v639
        %v1056 = vpop.f32.mrb[0].mxu0
        %v1057 = vadd.f32 0.0, %v1056
        %v1058 = vpop.f32.mrb[0].mxu0
        %v1059 = vadd.f32 0.0, %v1058
        %v1060 = vpop.f32.mrb[0].mxu0
        %v1061 = vadd.f32 0.0, %v1060
        %v1062 = vpop.f32.mrb[0].mxu0
        %v1063 = vadd.f32 0.0, %v1062
        %1064 = vmatprep.mubr.bf16.mxu0 0
        %1065 = vmatmul.mubr.bf16.gmra.mrb[0].mxu0 %v642
        %v1066 = vpop.f32.mrb[0].mxu0
        %v1067 = vadd.f32 0.0, %v1066
        %v1068 = vpop.f32.mrb[0].mxu0
        %v1069 = vadd.f32 0.0, %v1068
        %v1070 = vpop.f32.mrb[0].mxu0
        %v1071 = vadd.f32 0.0, %v1070
        %v1072 = vpop.f32.mrb[0].mxu0
        %v1073 = vadd.f32 0.0, %v1072
        %1074 = vmatprep.mubr.bf16.mxu0 0
        %1075 = vmatmul.mubr.bf16.gmra.mrb[0].mxu0 %v645
        %v1076 = vpop.f32.mrb[0].mxu0
        %v1077 = vadd.f32 0.0, %v1076
        %v1078 = vpop.f32.mrb[0].mxu0
        %v1079 = vadd.f32 0.0, %v1078
        %v1080 = vpop.f32.mrb[0].mxu0
        %v1081 = vadd.f32 0.0, %v1080
        %v1082 = vpop.f32.mrb[0].mxu0
        %v1083 = vadd.f32 0.0, %v1082
        %1084 = vdwg.mxu0
        %1085 = vmatprep.subr.bf16.mxu0 0
        %1086 = vmatpush1.bf16.xpose.msra.mxu0 %v744
        %1087 = vmatprep.subr.bf16.mxu0 0
        %1088 = vmatpush1.bf16.xpose.msra.mxu0 %v747
        %1089 = vmatprep.subr.bf16.mxu0 0
        %1090 = vmatpush1.bf16.xpose.msra.mxu0 %v750
        %1091 = vmatprep.subr.bf16.mxu0 0
        %1092 = vmatpush1.bf16.xpose.msra.mxu0 %v753
        %1093 = vmatprep.subr.bf16.mxu0 0
        %1094 = vmatpush1.bf16.xpose.msra.mxu0 %v756
        %1095 = vmatprep.subr.bf16.mxu0 0
        %1096 = vmatpush1.bf16.xpose.msra.mxu0 %v759
        %1097 = vmatprep.subr.bf16.mxu0 0
        %1098 = vmatpush1.bf16.xpose.msra.mxu0 %v762
        %1099 = vmatprep.subr.bf16.mxu0 0
        %1100 = vmatpush1.bf16.xpose.msra.mxu0 %v765
        %1101 = vmatprep.subr.bf16.mxu0 0
        %1102 = vmatpush1.bf16.xpose.msra.mxu0 %v768
        %1103 = vmatprep.subr.bf16.mxu0 0
        %1104 = vmatpush1.bf16.xpose.msra.mxu0 %v771
        %1105 = vmatprep.subr.bf16.mxu0 0
        %1106 = vmatpush1.bf16.xpose.msra.mxu0 %v774
        %1107 = vmatprep.subr.bf16.mxu0 0
        %1108 = vmatpush1.bf16.xpose.msra.mxu0 %v777
        %1109 = vmatprep.subr.bf16.mxu0 0
        %1110 = vmatpush1.bf16.xpose.msra.mxu0 %v780
        %1111 = vmatprep.subr.bf16.mxu0 0
        %1112 = vmatpush1.bf16.xpose.msra.mxu0 %v783
        %1113 = vmatprep.subr.bf16.mxu0 0
        %1114 = vmatpush1.bf16.xpose.msra.mxu0 %v786
        %1115 = vmatprep.subr.bf16.mxu0 0
        %1116 = vmatpush1.bf16.xpose.msra.mxu0 %v789
        %1117 = vmatprep.mubr.bf16.mxu0 0
        %1118 = vmatmul.mubr.bf16.gmra.mrb[0].mxu0 %v621
        %v1119 = vpop.f32.mrb[0].mxu0
        %v1120 = vadd.f32 0.0, %v1119
        %v1121 = vpop.f32.mrb[0].mxu0
        %v1122 = vadd.f32 0.0, %v1121
        %v1123 = vpop.f32.mrb[0].mxu0
        %v1124 = vadd.f32 0.0, %v1123
        %v1125 = vpop.f32.mrb[0].mxu0
        %v1126 = vadd.f32 0.0, %v1125
        %1127 = vmatprep.mubr.bf16.mxu0 0
        %1128 = vmatmul.mubr.bf16.gmra.mrb[0].mxu0 %v624
        %v1129 = vpop.f32.mrb[0].mxu0
        %v1130 = vadd.f32 0.0, %v1129
        %v1131 = vpop.f32.mrb[0].mxu0
        %v1132 = vadd.f32 0.0, %v1131
        %v1133 = vpop.f32.mrb[0].mxu0
        %v1134 = vadd.f32 0.0, %v1133
        %v1135 = vpop.f32.mrb[0].mxu0
        %v1136 = vadd.f32 0.0, %v1135
        %1137 = vmatprep.mubr.bf16.mxu0 0
        %1138 = vmatmul.mubr.bf16.gmra.mrb[0].mxu0 %v627
        %v1139 = vpop.f32.mrb[0].mxu0
        %v1140 = vadd.f32 0.0, %v1139
        %v1141 = vpop.f32.mrb[0].mxu0
        %v1142 = vadd.f32 0.0, %v1141
        %v1143 = vpop.f32.mrb[0].mxu0
        %v1144 = vadd.f32 0.0, %v1143
        %v1145 = vpop.f32.mrb[0].mxu0
        %v1146 = vadd.f32 0.0, %v1145
        %1147 = vmatprep.mubr.bf16.mxu0 0
        %1148 = vmatmul.mubr.bf16.gmra.mrb[0].mxu0 %v630
        %v1149 = vpop.f32.mrb[0].mxu0
        %v1150 = vadd.f32 0.0, %v1149
        %v1151 = vpop.f32.mrb[0].mxu0
        %v1152 = vadd.f32 0.0, %v1151
        %v1153 = vpop.f32.mrb[0].mxu0
        %v1154 = vadd.f32 0.0, %v1153
        %v1155 = vpop.f32.mrb[0].mxu0
        %v1156 = vadd.f32 0.0, %v1155
        %1157 = vmatprep.mubr.bf16.mxu0 0
        %1158 = vmatmul.mubr.bf16.gmra.mrb[0].mxu0 %v633
        %v1159 = vpop.f32.mrb[0].mxu0
        %v1160 = vadd.f32 0.0, %v1159
        %v1161 = vpop.f32.mrb[0].mxu0
        %v1162 = vadd.f32 0.0, %v1161
        %v1163 = vpop.f32.mrb[0].mxu0
        %v1164 = vadd.f32 0.0, %v1163
        %v1165 = vpop.f32.mrb[0].mxu0
        %v1166 = vadd.f32 0.0, %v1165
        %1167 = vmatprep.mubr.bf16.mxu0 0
        %1168 = vmatmul.mubr.bf16.gmra.mrb[0].mxu0 %v636
        %v1169 = vpop.f32.mrb[0].mxu0
        %v1170 = vadd.f32 0.0, %v1169
        %v1171 = vpop.f32.mrb[0].mxu0
        %v1172 = vadd.f32 0.0, %v1171
        %v1173 = vpop.f32.mrb[0].mxu0
        %v1174 = vadd.f32 0.0, %v1173
        %v1175 = vpop.f32.mrb[0].mxu0
        %v1176 = vadd.f32 0.0, %v1175
        %1177 = vmatprep.mubr.bf16.mxu0 0
        %1178 = vmatmul.mubr.bf16.gmra.mrb[0].mxu0 %v639
        %v1179 = vpop.f32.mrb[0].mxu0
        %v1180 = vadd.f32 0.0, %v1179
        %v1181 = vpop.f32.mrb[0].mxu0
        %v1182 = vadd.f32 0.0, %v1181
        %v1183 = vpop.f32.mrb[0].mxu0
        %v1184 = vadd.f32 0.0, %v1183
        %v1185 = vpop.f32.mrb[0].mxu0
        %v1186 = vadd.f32 0.0, %v1185
        %1187 = vmatprep.mubr.bf16.mxu0 0
        %1188 = vmatmul.mubr.bf16.gmra.mrb[0].mxu0 %v642
        %v1189 = vpop.f32.mrb[0].mxu0
        %v1190 = vadd.f32 0.0, %v1189
        %v1191 = vpop.f32.mrb[0].mxu0
        %v1192 = vadd.f32 0.0, %v1191
        %v1193 = vpop.f32.mrb[0].mxu0
        %v1194 = vadd.f32 0.0, %v1193
        %v1195 = vpop.f32.mrb[0].mxu0
        %v1196 = vadd.f32 0.0, %v1195
        %1197 = vmatprep.mubr.bf16.mxu0 0
        %1198 = vmatmul.mubr.bf16.gmra.mrb[0].mxu0 %v645
        %v1199 = vpop.f32.mrb[0].mxu0
        %v1200 = vadd.f32 0.0, %v1199
        %v1201 = vpop.f32.mrb[0].mxu0
        %v1202 = vadd.f32 0.0, %v1201
        %v1203 = vpop.f32.mrb[0].mxu0
        %v1204 = vadd.f32 0.0, %v1203
        %v1205 = vpop.f32.mrb[0].mxu0
        %v1206 = vadd.f32 0.0, %v1205
        %1207 = vdwg.mxu0
        %1208 = vmatprep.subr.bf16.mxu0 0
        %1209 = vmatpush1.bf16.xpose.msra.mxu0 %v792
        %1210 = vmatprep.subr.bf16.mxu0 0
        %1211 = vmatpush1.bf16.xpose.msra.mxu0 %v795
        %1212 = vmatprep.subr.bf16.mxu0 0
        %1213 = vmatpush1.bf16.xpose.msra.mxu0 %v798
        %1214 = vmatprep.subr.bf16.mxu0 0
        %1215 = vmatpush1.bf16.xpose.msra.mxu0 %v801
        %1216 = vmatprep.subr.bf16.mxu0 0
        %1217 = vmatpush1.bf16.xpose.msra.mxu0 %v804
        %1218 = vmatprep.subr.bf16.mxu0 0
        %1219 = vmatpush1.bf16.xpose.msra.mxu0 %v807
        %1220 = vmatprep.subr.bf16.mxu0 0
        %1221 = vmatpush1.bf16.xpose.msra.mxu0 %v810
        %1222 = vmatprep.subr.bf16.mxu0 0
        %1223 = vmatpush1.bf16.xpose.msra.mxu0 %v813
        %1224 = vmatprep.subr.bf16.mxu0 0
        %1225 = vmatpush1.bf16.xpose.msra.mxu0 %v816
        %1226 = vmatprep.subr.bf16.mxu0 0
        %1227 = vmatpush1.bf16.xpose.msra.mxu0 %v819
        %1228 = vmatprep.subr.bf16.mxu0 0
        %1229 = vmatpush1.bf16.xpose.msra.mxu0 %v822
        %1230 = vmatprep.subr.bf16.mxu0 0
        %1231 = vmatpush1.bf16.xpose.msra.mxu0 %v825
        %1232 = vmatprep.subr.bf16.mxu0 0
        %1233 = vmatpush1.bf16.xpose.msra.mxu0 %v828
        %1234 = vmatprep.subr.bf16.mxu0 0
        %1235 = vmatpush1.bf16.xpose.msra.mxu0 %v831
        %1236 = vmatprep.subr.bf16.mxu0 0
        %1237 = vmatpush1.bf16.xpose.msra.mxu0 %v834
        %1238 = vmatprep.subr.bf16.mxu0 0
        %1239 = vmatpush1.bf16.xpose.msra.mxu0 %v837
        %1240 = vmatprep.mubr.bf16.mxu0 0
        %1241 = vmatmul.mubr.bf16.gmra.mrb[0].mxu0 %v621
        %v1242 = vpop.f32.mrb[0].mxu0
        %v1243 = vadd.f32 0.0, %v1242
        %v1244 = vpop.f32.mrb[0].mxu0
        %v1245 = vadd.f32 0.0, %v1244
        %v1246 = vpop.f32.mrb[0].mxu0
        %v1247 = vadd.f32 0.0, %v1246
        %v1248 = vpop.f32.mrb[0].mxu0
        %v1249 = vadd.f32 0.0, %v1248
        %1250 = vmatprep.mubr.bf16.mxu0 0
        %1251 = vmatmul.mubr.bf16.gmra.mrb[0].mxu0 %v624
        %v1252 = vpop.f32.mrb[0].mxu0
        %v1253 = vadd.f32 0.0, %v1252
        %v1254 = vpop.f32.mrb[0].mxu0
        %v1255 = vadd.f32 0.0, %v1254
        %v1256 = vpop.f32.mrb[0].mxu0
        %v1257 = vadd.f32 0.0, %v1256
        %v1258 = vpop.f32.mrb[0].mxu0
        %v1259 = vadd.f32 0.0, %v1258
        %1260 = vmatprep.mubr.bf16.mxu0 0
        %1261 = vmatmul.mubr.bf16.gmra.mrb[0].mxu0 %v627
        %v1262 = vpop.f32.mrb[0].mxu0
        %v1263 = vadd.f32 0.0, %v1262
        %v1264 = vpop.f32.mrb[0].mxu0
        %v1265 = vadd.f32 0.0, %v1264
        %v1266 = vpop.f32.mrb[0].mxu0
        %v1267 = vadd.f32 0.0, %v1266
        %v1268 = vpop.f32.mrb[0].mxu0
        %v1269 = vadd.f32 0.0, %v1268
        %1270 = vmatprep.mubr.bf16.mxu0 0
        %1271 = vmatmul.mubr.bf16.gmra.mrb[0].mxu0 %v630
        %v1272 = vpop.f32.mrb[0].mxu0
        %v1273 = vadd.f32 0.0, %v1272
        %v1274 = vpop.f32.mrb[0].mxu0
        %v1275 = vadd.f32 0.0, %v1274
        %v1276 = vpop.f32.mrb[0].mxu0
        %v1277 = vadd.f32 0.0, %v1276
        %v1278 = vpop.f32.mrb[0].mxu0
        %v1279 = vadd.f32 0.0, %v1278
        %1280 = vmatprep.mubr.bf16.mxu0 0
        %1281 = vmatmul.mubr.bf16.gmra.mrb[0].mxu0 %v633
        %v1282 = vpop.f32.mrb[0].mxu0
        %v1283 = vadd.f32 0.0, %v1282
        %v1284 = vpop.f32.mrb[0].mxu0
        %v1285 = vadd.f32 0.0, %v1284
        %v1286 = vpop.f32.mrb[0].mxu0
        %v1287 = vadd.f32 0.0, %v1286
        %v1288 = vpop.f32.mrb[0].mxu0
        %v1289 = vadd.f32 0.0, %v1288
        %1290 = vmatprep.mubr.bf16.mxu0 0
        %1291 = vmatmul.mubr.bf16.gmra.mrb[0].mxu0 %v636
        %v1292 = vpop.f32.mrb[0].mxu0
        %v1293 = vadd.f32 0.0, %v1292
        %v1294 = vpop.f32.mrb[0].mxu0
        %v1295 = vadd.f32 0.0, %v1294
        %v1296 = vpop.f32.mrb[0].mxu0
        %v1297 = vadd.f32 0.0, %v1296
        %v1298 = vpop.f32.mrb[0].mxu0
        %v1299 = vadd.f32 0.0, %v1298
        %1300 = vmatprep.mubr.bf16.mxu0 0
        %1301 = vmatmul.mubr.bf16.gmra.mrb[0].mxu0 %v639
        %v1302 = vpop.f32.mrb[0].mxu0
        %v1303 = vadd.f32 0.0, %v1302
        %v1304 = vpop.f32.mrb[0].mxu0
        %v1305 = vadd.f32 0.0, %v1304
        %v1306 = vpop.f32.mrb[0].mxu0
        %v1307 = vadd.f32 0.0, %v1306
        %v1308 = vpop.f32.mrb[0].mxu0
        %v1309 = vadd.f32 0.0, %v1308
        %1310 = vmatprep.mubr.bf16.mxu0 0
        %1311 = vmatmul.mubr.bf16.gmra.mrb[0].mxu0 %v642
        %v1312 = vpop.f32.mrb[0].mxu0
        %v1313 = vadd.f32 0.0, %v1312
        %v1314 = vpop.f32.mrb[0].mxu0
        %v1315 = vadd.f32 0.0, %v1314
        %v1316 = vpop.f32.mrb[0].mxu0
        %v1317 = vadd.f32 0.0, %v1316
        %v1318 = vpop.f32.mrb[0].mxu0
        %v1319 = vadd.f32 0.0, %v1318
        %1320 = vmatprep.mubr.bf16.mxu0 0
        %1321 = vmatmul.mubr.bf16.gmra.mrb[0].mxu0 %v645
        %v1322 = vpop.f32.mrb[0].mxu0
        %v1323 = vadd.f32 0.0, %v1322
        %v1324 = vpop.f32.mrb[0].mxu0
        %v1325 = vadd.f32 0.0, %v1324
        %v1326 = vpop.f32.mrb[0].mxu0
        %v1327 = vadd.f32 0.0, %v1326
        %v1328 = vpop.f32.mrb[0].mxu0
        %v1329 = vadd.f32 0.0, %v1328
        %1330 = vdwg.mxu0
        %v1331 = vld [vmem:[%s2] sm:$0xff]
        %v1332 = vld [vmem:[%s2 + $0x8] sm:$0xff]
        %v1333 = vld [vmem:[%s2 + $0x10] sm:$0xff]
        %v1334 = vld [vmem:[%s2 + $0x18] sm:$0xff]
        %v1335 = vld [vmem:[%s2 + $0x20] sm:$0xff]
        %v1336 = vld [vmem:[%s2 + $0x28] sm:$0xff]
        %v1337 = vld [vmem:[%s2 + $0x30] sm:$0xff]
        %v1338 = vld [vmem:[%s2 + $0x38] sm:$0xff]
        %v1339 = vld [vmem:[%s2 + $0x40] sm:$0x1]
        %v1340 = vld [vmem:[%s2 + $0x48] sm:$0x1]
        %v1341 = vld [vmem:[%s2 + $0x50] sm:$0x1]
        %v1342 = vld [vmem:[%s2 + $0x58] sm:$0x1]
        %v1343 = vld [vmem:[%s2 + $0x60] sm:$0x1]
        %v1344 = vld [vmem:[%s2 + $0x68] sm:$0x1]
        %v1345 = vld [vmem:[%s2 + $0x70] sm:$0x1]
        %v1346 = vld [vmem:[%s2 + $0x78] sm:$0x1]
        %v1347 = vlaneseq
        %v1348 = vshrl.u32 %v1347, 7
        %v1349 = vsub.s32 0, %v1348
        %v1350 = vrot.slane %v1331, %v1349
        %v1351 = vlaneseq
        %v1352 = vshrl.u32 %v1351, 7
        %v1353 = vsub.s32 0, %v1352
        %v1354 = vrot.slane %v1332, %v1353
        %v1355 = vlaneseq
        %v1356 = vshrl.u32 %v1355, 7
        %v1357 = vsub.s32 0, %v1356
        %v1358 = vrot.slane %v1333, %v1357
        %v1359 = vlaneseq
        %v1360 = vshrl.u32 %v1359, 7
        %v1361 = vsub.s32 0, %v1360
        %v1362 = vrot.slane %v1334, %v1361
        %v1363 = vlaneseq
        %v1364 = vshrl.u32 %v1363, 7
        %v1365 = vsub.s32 0, %v1364
        %v1366 = vrot.slane %v1335, %v1365
        %v1367 = vlaneseq
        %v1368 = vshrl.u32 %v1367, 7
        %v1369 = vsub.s32 0, %v1368
        %v1370 = vrot.slane %v1336, %v1369
        %v1371 = vlaneseq
        %v1372 = vshrl.u32 %v1371, 7
        %v1373 = vsub.s32 0, %v1372
        %v1374 = vrot.slane %v1337, %v1373
        %v1375 = vlaneseq
        %v1376 = vshrl.u32 %v1375, 7
        %v1377 = vsub.s32 0, %v1376
        %v1378 = vrot.slane %v1338, %v1377
        %v1379 = vmul.f32 %v874, %v1350
        %v1380 = vmul.f32 %v876, %v1354
        %v1381 = vmul.f32 %v997, %v1358
        %v1382 = vmul.f32 %v999, %v1362
        %v1383 = vmul.f32 %v1120, %v1366
        %v1384 = vmul.f32 %v1122, %v1370
        %v1385 = vmul.f32 %v1243, %v1374
        %v1386 = vmul.f32 %v1245, %v1378
        %v1387 = vmul.f32 %v878, %v1350
        %v1388 = vmul.f32 %v880, %v1354
        %v1389 = vmul.f32 %v1001, %v1358
        %v1390 = vmul.f32 %v1003, %v1362
        %v1391 = vmul.f32 %v1124, %v1366
        %v1392 = vmul.f32 %v1126, %v1370
        %v1393 = vmul.f32 %v1247, %v1374
        %v1394 = vmul.f32 %v1249, %v1378
        %v1395 = vlaneseq
        %v1396 = vshrl.u32 %v1395, 7
        %v1397 = vsub.s32 1, %v1396
        %v1398 = vrot.slane %v1331, %v1397
        %v1399 = vlaneseq
        %v1400 = vshrl.u32 %v1399, 7
        %v1401 = vsub.s32 1, %v1400
        %v1402 = vrot.slane %v1332, %v1401
        %v1403 = vlaneseq
        %v1404 = vshrl.u32 %v1403, 7
        %v1405 = vsub.s32 1, %v1404
        %v1406 = vrot.slane %v1333, %v1405
        %v1407 = vlaneseq
        %v1408 = vshrl.u32 %v1407, 7
        %v1409 = vsub.s32 1, %v1408
        %v1410 = vrot.slane %v1334, %v1409
        %v1411 = vlaneseq
        %v1412 = vshrl.u32 %v1411, 7
        %v1413 = vsub.s32 1, %v1412
        %v1414 = vrot.slane %v1335, %v1413
        %v1415 = vlaneseq
        %v1416 = vshrl.u32 %v1415, 7
        %v1417 = vsub.s32 1, %v1416
        %v1418 = vrot.slane %v1336, %v1417
        %v1419 = vlaneseq
        %v1420 = vshrl.u32 %v1419, 7
        %v1421 = vsub.s32 1, %v1420
        %v1422 = vrot.slane %v1337, %v1421
        %v1423 = vlaneseq
        %v1424 = vshrl.u32 %v1423, 7
        %v1425 = vsub.s32 1, %v1424
        %v1426 = vrot.slane %v1338, %v1425
        %v1427 = vmul.f32 %v884, %v1398
        %v1428 = vmul.f32 %v886, %v1402
        %v1429 = vmul.f32 %v1007, %v1406
        %v1430 = vmul.f32 %v1009, %v1410
        %v1431 = vmul.f32 %v1130, %v1414
        %v1432 = vmul.f32 %v1132, %v1418
        %v1433 = vmul.f32 %v1253, %v1422
        %v1434 = vmul.f32 %v1255, %v1426
        %v1435 = vmul.f32 %v888, %v1398
        %v1436 = vmul.f32 %v890, %v1402
        %v1437 = vmul.f32 %v1011, %v1406
        %v1438 = vmul.f32 %v1013, %v1410
        %v1439 = vmul.f32 %v1134, %v1414
        %v1440 = vmul.f32 %v1136, %v1418
        %v1441 = vmul.f32 %v1257, %v1422
        %v1442 = vmul.f32 %v1259, %v1426
        %v1443 = vadd.f32 %v1379, %v1427
        %v1444 = vadd.f32 %v1380, %v1428
        %v1445 = vadd.f32 %v1381, %v1429
        %v1446 = vadd.f32 %v1382, %v1430
        %v1447 = vadd.f32 %v1383, %v1431
        %v1448 = vadd.f32 %v1384, %v1432
        %v1449 = vadd.f32 %v1385, %v1433
        %v1450 = vadd.f32 %v1386, %v1434
        %v1451 = vadd.f32 %v1387, %v1435
        %v1452 = vadd.f32 %v1388, %v1436
        %v1453 = vadd.f32 %v1389, %v1437
        %v1454 = vadd.f32 %v1390, %v1438
        %v1455 = vadd.f32 %v1391, %v1439
        %v1456 = vadd.f32 %v1392, %v1440
        %v1457 = vadd.f32 %v1393, %v1441
        %v1458 = vadd.f32 %v1394, %v1442
        %v1459 = vlaneseq
        %v1460 = vshrl.u32 %v1459, 7
        %v1461 = vsub.s32 2, %v1460
        %v1462 = vrot.slane %v1331, %v1461
        %v1463 = vlaneseq
        %v1464 = vshrl.u32 %v1463, 7
        %v1465 = vsub.s32 2, %v1464
        %v1466 = vrot.slane %v1332, %v1465
        %v1467 = vlaneseq
        %v1468 = vshrl.u32 %v1467, 7
        %v1469 = vsub.s32 2, %v1468
        %v1470 = vrot.slane %v1333, %v1469
        %v1471 = vlaneseq
        %v1472 = vshrl.u32 %v1471, 7
        %v1473 = vsub.s32 2, %v1472
        %v1474 = vrot.slane %v1334, %v1473
        %v1475 = vlaneseq
        %v1476 = vshrl.u32 %v1475, 7
        %v1477 = vsub.s32 2, %v1476
        %v1478 = vrot.slane %v1335, %v1477
        %v1479 = vlaneseq
        %v1480 = vshrl.u32 %v1479, 7
        %v1481 = vsub.s32 2, %v1480
        %v1482 = vrot.slane %v1336, %v1481
        %v1483 = vlaneseq
        %v1484 = vshrl.u32 %v1483, 7
        %v1485 = vsub.s32 2, %v1484
        %v1486 = vrot.slane %v1337, %v1485
        %v1487 = vlaneseq
        %v1488 = vshrl.u32 %v1487, 7
        %v1489 = vsub.s32 2, %v1488
        %v1490 = vrot.slane %v1338, %v1489
        %v1491 = vmul.f32 %v894, %v1462
        %v1492 = vmul.f32 %v896, %v1466
        %v1493 = vmul.f32 %v1017, %v1470
        %v1494 = vmul.f32 %v1019, %v1474
        %v1495 = vmul.f32 %v1140, %v1478
        %v1496 = vmul.f32 %v1142, %v1482
        %v1497 = vmul.f32 %v1263, %v1486
        %v1498 = vmul.f32 %v1265, %v1490
        %v1499 = vmul.f32 %v898, %v1462
        %v1500 = vmul.f32 %v900, %v1466
        %v1501 = vmul.f32 %v1021, %v1470
        %v1502 = vmul.f32 %v1023, %v1474
        %v1503 = vmul.f32 %v1144, %v1478
        %v1504 = vmul.f32 %v1146, %v1482
        %v1505 = vmul.f32 %v1267, %v1486
        %v1506 = vmul.f32 %v1269, %v1490
        %v1507 = vadd.f32 %v1443, %v1491
        %v1508 = vadd.f32 %v1444, %v1492
        %v1509 = vadd.f32 %v1445, %v1493
        %v1510 = vadd.f32 %v1446, %v1494
        %v1511 = vadd.f32 %v1447, %v1495
        %v1512 = vadd.f32 %v1448, %v1496
        %v1513 = vadd.f32 %v1449, %v1497
        %v1514 = vadd.f32 %v1450, %v1498
        %v1515 = vadd.f32 %v1451, %v1499
        %v1516 = vadd.f32 %v1452, %v1500
        %v1517 = vadd.f32 %v1453, %v1501
        %v1518 = vadd.f32 %v1454, %v1502
        %v1519 = vadd.f32 %v1455, %v1503
        %v1520 = vadd.f32 %v1456, %v1504
        %v1521 = vadd.f32 %v1457, %v1505
        %v1522 = vadd.f32 %v1458, %v1506
        %v1523 = vlaneseq
        %v1524 = vshrl.u32 %v1523, 7
        %v1525 = vsub.s32 3, %v1524
        %v1526 = vrot.slane %v1331, %v1525
        %v1527 = vlaneseq
        %v1528 = vshrl.u32 %v1527, 7
        %v1529 = vsub.s32 3, %v1528
        %v1530 = vrot.slane %v1332, %v1529
        %v1531 = vlaneseq
        %v1532 = vshrl.u32 %v1531, 7
        %v1533 = vsub.s32 3, %v1532
        %v1534 = vrot.slane %v1333, %v1533
        %v1535 = vlaneseq
        %v1536 = vshrl.u32 %v1535, 7
        %v1537 = vsub.s32 3, %v1536
        %v1538 = vrot.slane %v1334, %v1537
        %v1539 = vlaneseq
        %v1540 = vshrl.u32 %v1539, 7
        %v1541 = vsub.s32 3, %v1540
        %v1542 = vrot.slane %v1335, %v1541
        %v1543 = vlaneseq
        %v1544 = vshrl.u32 %v1543, 7
        %v1545 = vsub.s32 3, %v1544
        %v1546 = vrot.slane %v1336, %v1545
        %v1547 = vlaneseq
        %v1548 = vshrl.u32 %v1547, 7
        %v1549 = vsub.s32 3, %v1548
        %v1550 = vrot.slane %v1337, %v1549
        %v1551 = vlaneseq
        %v1552 = vshrl.u32 %v1551, 7
        %v1553 = vsub.s32 3, %v1552
        %v1554 = vrot.slane %v1338, %v1553
        %v1555 = vmul.f32 %v904, %v1526
        %v1556 = vmul.f32 %v906, %v1530
        %v1557 = vmul.f32 %v1027, %v1534
        %v1558 = vmul.f32 %v1029, %v1538
        %v1559 = vmul.f32 %v1150, %v1542
        %v1560 = vmul.f32 %v1152, %v1546
        %v1561 = vmul.f32 %v1273, %v1550
        %v1562 = vmul.f32 %v1275, %v1554
        %v1563 = vmul.f32 %v908, %v1526
        %v1564 = vmul.f32 %v910, %v1530
        %v1565 = vmul.f32 %v1031, %v1534
        %v1566 = vmul.f32 %v1033, %v1538
        %v1567 = vmul.f32 %v1154, %v1542
        %v1568 = vmul.f32 %v1156, %v1546
        %v1569 = vmul.f32 %v1277, %v1550
        %v1570 = vmul.f32 %v1279, %v1554
        %v1571 = vadd.f32 %v1507, %v1555
        %v1572 = vadd.f32 %v1508, %v1556
        %v1573 = vadd.f32 %v1509, %v1557
        %v1574 = vadd.f32 %v1510, %v1558
        %v1575 = vadd.f32 %v1511, %v1559
        %v1576 = vadd.f32 %v1512, %v1560
        %v1577 = vadd.f32 %v1513, %v1561
        %v1578 = vadd.f32 %v1514, %v1562
        %v1579 = vadd.f32 %v1515, %v1563
        %v1580 = vadd.f32 %v1516, %v1564
        %v1581 = vadd.f32 %v1517, %v1565
        %v1582 = vadd.f32 %v1518, %v1566
        %v1583 = vadd.f32 %v1519, %v1567
        %v1584 = vadd.f32 %v1520, %v1568
        %v1585 = vadd.f32 %v1521, %v1569
        %v1586 = vadd.f32 %v1522, %v1570
        %v1587 = vlaneseq
        %v1588 = vshrl.u32 %v1587, 7
        %v1589 = vsub.s32 4, %v1588
        %v1590 = vrot.slane %v1331, %v1589
        %v1591 = vlaneseq
        %v1592 = vshrl.u32 %v1591, 7
        %v1593 = vsub.s32 4, %v1592
        %v1594 = vrot.slane %v1332, %v1593
        %v1595 = vlaneseq
        %v1596 = vshrl.u32 %v1595, 7
        %v1597 = vsub.s32 4, %v1596
        %v1598 = vrot.slane %v1333, %v1597
        %v1599 = vlaneseq
        %v1600 = vshrl.u32 %v1599, 7
        %v1601 = vsub.s32 4, %v1600
        %v1602 = vrot.slane %v1334, %v1601
        %v1603 = vlaneseq
        %v1604 = vshrl.u32 %v1603, 7
        %v1605 = vsub.s32 4, %v1604
        %v1606 = vrot.slane %v1335, %v1605
        %v1607 = vlaneseq
        %v1608 = vshrl.u32 %v1607, 7
        %v1609 = vsub.s32 4, %v1608
        %v1610 = vrot.slane %v1336, %v1609
        %v1611 = vlaneseq
        %v1612 = vshrl.u32 %v1611, 7
        %v1613 = vsub.s32 4, %v1612
        %v1614 = vrot.slane %v1337, %v1613
        %v1615 = vlaneseq
        %v1616 = vshrl.u32 %v1615, 7
        %v1617 = vsub.s32 4, %v1616
        %v1618 = vrot.slane %v1338, %v1617
        %v1619 = vmul.f32 %v914, %v1590
        %v1620 = vmul.f32 %v916, %v1594
        %v1621 = vmul.f32 %v1037, %v1598
        %v1622 = vmul.f32 %v1039, %v1602
        %v1623 = vmul.f32 %v1160, %v1606
        %v1624 = vmul.f32 %v1162, %v1610
        %v1625 = vmul.f32 %v1283, %v1614
        %v1626 = vmul.f32 %v1285, %v1618
        %v1627 = vmul.f32 %v918, %v1590
        %v1628 = vmul.f32 %v920, %v1594
        %v1629 = vmul.f32 %v1041, %v1598
        %v1630 = vmul.f32 %v1043, %v1602
        %v1631 = vmul.f32 %v1164, %v1606
        %v1632 = vmul.f32 %v1166, %v1610
        %v1633 = vmul.f32 %v1287, %v1614
        %v1634 = vmul.f32 %v1289, %v1618
        %v1635 = vadd.f32 %v1571, %v1619
        %v1636 = vadd.f32 %v1572, %v1620
        %v1637 = vadd.f32 %v1573, %v1621
        %v1638 = vadd.f32 %v1574, %v1622
        %v1639 = vadd.f32 %v1575, %v1623
        %v1640 = vadd.f32 %v1576, %v1624
        %v1641 = vadd.f32 %v1577, %v1625
        %v1642 = vadd.f32 %v1578, %v1626
        %v1643 = vadd.f32 %v1579, %v1627
        %v1644 = vadd.f32 %v1580, %v1628
        %v1645 = vadd.f32 %v1581, %v1629
        %v1646 = vadd.f32 %v1582, %v1630
        %v1647 = vadd.f32 %v1583, %v1631
        %v1648 = vadd.f32 %v1584, %v1632
        %v1649 = vadd.f32 %v1585, %v1633
        %v1650 = vadd.f32 %v1586, %v1634
        %v1651 = vlaneseq
        %v1652 = vshrl.u32 %v1651, 7
        %v1653 = vsub.s32 5, %v1652
        %v1654 = vrot.slane %v1331, %v1653
        %v1655 = vlaneseq
        %v1656 = vshrl.u32 %v1655, 7
        %v1657 = vsub.s32 5, %v1656
        %v1658 = vrot.slane %v1332, %v1657
        %v1659 = vlaneseq
        %v1660 = vshrl.u32 %v1659, 7
        %v1661 = vsub.s32 5, %v1660
        %v1662 = vrot.slane %v1333, %v1661
        %v1663 = vlaneseq
        %v1664 = vshrl.u32 %v1663, 7
        %v1665 = vsub.s32 5, %v1664
        %v1666 = vrot.slane %v1334, %v1665
        %v1667 = vlaneseq
        %v1668 = vshrl.u32 %v1667, 7
        %v1669 = vsub.s32 5, %v1668
        %v1670 = vrot.slane %v1335, %v1669
        %v1671 = vlaneseq
        %v1672 = vshrl.u32 %v1671, 7
        %v1673 = vsub.s32 5, %v1672
        %v1674 = vrot.slane %v1336, %v1673
        %v1675 = vlaneseq
        %v1676 = vshrl.u32 %v1675, 7
        %v1677 = vsub.s32 5, %v1676
        %v1678 = vrot.slane %v1337, %v1677
        %v1679 = vlaneseq
        %v1680 = vshrl.u32 %v1679, 7
        %v1681 = vsub.s32 5, %v1680
        %v1682 = vrot.slane %v1338, %v1681
        %v1683 = vmul.f32 %v924, %v1654
        %v1684 = vmul.f32 %v926, %v1658
        %v1685 = vmul.f32 %v1047, %v1662
        %v1686 = vmul.f32 %v1049, %v1666
        %v1687 = vmul.f32 %v1170, %v1670
        %v1688 = vmul.f32 %v1172, %v1674
        %v1689 = vmul.f32 %v1293, %v1678
        %v1690 = vmul.f32 %v1295, %v1682
        %v1691 = vmul.f32 %v928, %v1654
        %v1692 = vmul.f32 %v930, %v1658
        %v1693 = vmul.f32 %v1051, %v1662
        %v1694 = vmul.f32 %v1053, %v1666
        %v1695 = vmul.f32 %v1174, %v1670
        %v1696 = vmul.f32 %v1176, %v1674
        %v1697 = vmul.f32 %v1297, %v1678
        %v1698 = vmul.f32 %v1299, %v1682
        %v1699 = vadd.f32 %v1635, %v1683
        %v1700 = vadd.f32 %v1636, %v1684
        %v1701 = vadd.f32 %v1637, %v1685
        %v1702 = vadd.f32 %v1638, %v1686
        %v1703 = vadd.f32 %v1639, %v1687
        %v1704 = vadd.f32 %v1640, %v1688
        %v1705 = vadd.f32 %v1641, %v1689
        %v1706 = vadd.f32 %v1642, %v1690
        %v1707 = vadd.f32 %v1643, %v1691
        %v1708 = vadd.f32 %v1644, %v1692
        %v1709 = vadd.f32 %v1645, %v1693
        %v1710 = vadd.f32 %v1646, %v1694
        %v1711 = vadd.f32 %v1647, %v1695
        %v1712 = vadd.f32 %v1648, %v1696
        %v1713 = vadd.f32 %v1649, %v1697
        %v1714 = vadd.f32 %v1650, %v1698
        %v1715 = vlaneseq
        %v1716 = vshrl.u32 %v1715, 7
        %v1717 = vsub.s32 6, %v1716
        %v1718 = vrot.slane %v1331, %v1717
        %v1719 = vlaneseq
        %v1720 = vshrl.u32 %v1719, 7
        %v1721 = vsub.s32 6, %v1720
        %v1722 = vrot.slane %v1332, %v1721
        %v1723 = vlaneseq
        %v1724 = vshrl.u32 %v1723, 7
        %v1725 = vsub.s32 6, %v1724
        %v1726 = vrot.slane %v1333, %v1725
        %v1727 = vlaneseq
        %v1728 = vshrl.u32 %v1727, 7
        %v1729 = vsub.s32 6, %v1728
        %v1730 = vrot.slane %v1334, %v1729
        %v1731 = vlaneseq
        %v1732 = vshrl.u32 %v1731, 7
        %v1733 = vsub.s32 6, %v1732
        %v1734 = vrot.slane %v1335, %v1733
        %v1735 = vlaneseq
        %v1736 = vshrl.u32 %v1735, 7
        %v1737 = vsub.s32 6, %v1736
        %v1738 = vrot.slane %v1336, %v1737
        %v1739 = vlaneseq
        %v1740 = vshrl.u32 %v1739, 7
        %v1741 = vsub.s32 6, %v1740
        %v1742 = vrot.slane %v1337, %v1741
        %v1743 = vlaneseq
        %v1744 = vshrl.u32 %v1743, 7
        %v1745 = vsub.s32 6, %v1744
        %v1746 = vrot.slane %v1338, %v1745
        %v1747 = vmul.f32 %v934, %v1718
        %v1748 = vmul.f32 %v936, %v1722
        %v1749 = vmul.f32 %v1057, %v1726
        %v1750 = vmul.f32 %v1059, %v1730
        %v1751 = vmul.f32 %v1180, %v1734
        %v1752 = vmul.f32 %v1182, %v1738
        %v1753 = vmul.f32 %v1303, %v1742
        %v1754 = vmul.f32 %v1305, %v1746
        %v1755 = vmul.f32 %v938, %v1718
        %v1756 = vmul.f32 %v940, %v1722
        %v1757 = vmul.f32 %v1061, %v1726
        %v1758 = vmul.f32 %v1063, %v1730
        %v1759 = vmul.f32 %v1184, %v1734
        %v1760 = vmul.f32 %v1186, %v1738
        %v1761 = vmul.f32 %v1307, %v1742
        %v1762 = vmul.f32 %v1309, %v1746
        %v1763 = vadd.f32 %v1699, %v1747
        %v1764 = vadd.f32 %v1700, %v1748
        %v1765 = vadd.f32 %v1701, %v1749
        %v1766 = vadd.f32 %v1702, %v1750
        %v1767 = vadd.f32 %v1703, %v1751
        %v1768 = vadd.f32 %v1704, %v1752
        %v1769 = vadd.f32 %v1705, %v1753
        %v1770 = vadd.f32 %v1706, %v1754
        %v1771 = vadd.f32 %v1707, %v1755
        %v1772 = vadd.f32 %v1708, %v1756
        %v1773 = vadd.f32 %v1709, %v1757
        %v1774 = vadd.f32 %v1710, %v1758
        %v1775 = vadd.f32 %v1711, %v1759
        %v1776 = vadd.f32 %v1712, %v1760
        %v1777 = vadd.f32 %v1713, %v1761
        %v1778 = vadd.f32 %v1714, %v1762
        %v1779 = vlaneseq
        %v1780 = vshrl.u32 %v1779, 7
        %v1781 = vsub.s32 7, %v1780
        %v1782 = vrot.slane %v1331, %v1781
        %v1783 = vlaneseq
        %v1784 = vshrl.u32 %v1783, 7
        %v1785 = vsub.s32 7, %v1784
        %v1786 = vrot.slane %v1332, %v1785
        %v1787 = vlaneseq
        %v1788 = vshrl.u32 %v1787, 7
        %v1789 = vsub.s32 7, %v1788
        %v1790 = vrot.slane %v1333, %v1789
        %v1791 = vlaneseq
        %v1792 = vshrl.u32 %v1791, 7
        %v1793 = vsub.s32 7, %v1792
        %v1794 = vrot.slane %v1334, %v1793
        %v1795 = vlaneseq
        %v1796 = vshrl.u32 %v1795, 7
        %v1797 = vsub.s32 7, %v1796
        %v1798 = vrot.slane %v1335, %v1797
        %v1799 = vlaneseq
        %v1800 = vshrl.u32 %v1799, 7
        %v1801 = vsub.s32 7, %v1800
        %v1802 = vrot.slane %v1336, %v1801
        %v1803 = vlaneseq
        %v1804 = vshrl.u32 %v1803, 7
        %v1805 = vsub.s32 7, %v1804
        %v1806 = vrot.slane %v1337, %v1805
        %v1807 = vlaneseq
        %v1808 = vshrl.u32 %v1807, 7
        %v1809 = vsub.s32 7, %v1808
        %v1810 = vrot.slane %v1338, %v1809
        %v1811 = vmul.f32 %v944, %v1782
        %v1812 = vmul.f32 %v946, %v1786
        %v1813 = vmul.f32 %v1067, %v1790
        %v1814 = vmul.f32 %v1069, %v1794
        %v1815 = vmul.f32 %v1190, %v1798
        %v1816 = vmul.f32 %v1192, %v1802
        %v1817 = vmul.f32 %v1313, %v1806
        %v1818 = vmul.f32 %v1315, %v1810
        %v1819 = vmul.f32 %v948, %v1782
        %v1820 = vmul.f32 %v950, %v1786
        %v1821 = vmul.f32 %v1071, %v1790
        %v1822 = vmul.f32 %v1073, %v1794
        %v1823 = vmul.f32 %v1194, %v1798
        %v1824 = vmul.f32 %v1196, %v1802
        %v1825 = vmul.f32 %v1317, %v1806
        %v1826 = vmul.f32 %v1319, %v1810
        %v1827 = vadd.f32 %v1763, %v1811
        %v1828 = vadd.f32 %v1764, %v1812
        %v1829 = vadd.f32 %v1765, %v1813
        %v1830 = vadd.f32 %v1766, %v1814
        %v1831 = vadd.f32 %v1767, %v1815
        %v1832 = vadd.f32 %v1768, %v1816
        %v1833 = vadd.f32 %v1769, %v1817
        %v1834 = vadd.f32 %v1770, %v1818
        %v1835 = vadd.f32 %v1771, %v1819
        %v1836 = vadd.f32 %v1772, %v1820
        %v1837 = vadd.f32 %v1773, %v1821
        %v1838 = vadd.f32 %v1774, %v1822
        %v1839 = vadd.f32 %v1775, %v1823
        %v1840 = vadd.f32 %v1776, %v1824
        %v1841 = vadd.f32 %v1777, %v1825
        %v1842 = vadd.f32 %v1778, %v1826
        %v1843 = vlaneseq
        %v1844 = vshrl.u32 %v1843, 7
        %v1845 = vsub.s32 0, %v1844
        %v1846 = vrot.slane %v1339, %v1845
        %v1847 = vlaneseq
        %v1848 = vshrl.u32 %v1847, 7
        %v1849 = vsub.s32 0, %v1848
        %v1850 = vrot.slane %v1340, %v1849
        %v1851 = vlaneseq
        %v1852 = vshrl.u32 %v1851, 7
        %v1853 = vsub.s32 0, %v1852
        %v1854 = vrot.slane %v1341, %v1853
        %v1855 = vlaneseq
        %v1856 = vshrl.u32 %v1855, 7
        %v1857 = vsub.s32 0, %v1856
        %v1858 = vrot.slane %v1342, %v1857
        %v1859 = vlaneseq
        %v1860 = vshrl.u32 %v1859, 7
        %v1861 = vsub.s32 0, %v1860
        %v1862 = vrot.slane %v1343, %v1861
        %v1863 = vlaneseq
        %v1864 = vshrl.u32 %v1863, 7
        %v1865 = vsub.s32 0, %v1864
        %v1866 = vrot.slane %v1344, %v1865
        %v1867 = vlaneseq
        %v1868 = vshrl.u32 %v1867, 7
        %v1869 = vsub.s32 0, %v1868
        %v1870 = vrot.slane %v1345, %v1869
        %v1871 = vlaneseq
        %v1872 = vshrl.u32 %v1871, 7
        %v1873 = vsub.s32 0, %v1872
        %v1874 = vrot.slane %v1346, %v1873
        %v1875 = vmul.f32 %v954, %v1846
        %v1876 = vmul.f32 %v956, %v1850
        %v1877 = vmul.f32 %v1077, %v1854
        %v1878 = vmul.f32 %v1079, %v1858
        %v1879 = vmul.f32 %v1200, %v1862
        %v1880 = vmul.f32 %v1202, %v1866
        %v1881 = vmul.f32 %v1323, %v1870
        %v1882 = vmul.f32 %v1325, %v1874
        %v1883 = vmul.f32 %v958, %v1846
        %v1884 = vmul.f32 %v960, %v1850
        %v1885 = vmul.f32 %v1081, %v1854
        %v1886 = vmul.f32 %v1083, %v1858
        %v1887 = vmul.f32 %v1204, %v1862
        %v1888 = vmul.f32 %v1206, %v1866
        %v1889 = vmul.f32 %v1327, %v1870
        %v1890 = vmul.f32 %v1329, %v1874
        %v1891 = vadd.f32 %v1827, %v1875
        %v1892 = vadd.f32 %v1828, %v1876
        %v1893 = vadd.f32 %v1829, %v1877
        %v1894 = vadd.f32 %v1830, %v1878
        %v1895 = vadd.f32 %v1831, %v1879
        %v1896 = vadd.f32 %v1832, %v1880
        %v1897 = vadd.f32 %v1833, %v1881
        %v1898 = vadd.f32 %v1834, %v1882
        %v1899 = vadd.f32 %v1835, %v1883
        %v1900 = vadd.f32 %v1836, %v1884
        %v1901 = vadd.f32 %v1837, %v1885
        %v1902 = vadd.f32 %v1838, %v1886
        %v1903 = vadd.f32 %v1839, %v1887
        %v1904 = vadd.f32 %v1840, %v1888
        %v1905 = vadd.f32 %v1841, %v1889
        %v1906 = vadd.f32 %v1842, %v1890
        %v1907 = vld [vmem:[%s3] sm:$0x77]
        %v1908 = vld [vmem:[%s3 + $0x8] sm:$0x77]
        %v1909 = vld [vmem:[%s3 + $0x10] sm:$0x77]
        %v1910 = vld [vmem:[%s3 + $0x18] sm:$0x77]
        %v1915 = vlaneseq
        %v1916 = vshrl.u32 %v1915, 7
        %v1917 = vsub.s32 0, %v1916
        %v1918 = vrot.slane %v1907, %v1917
        %v1919 = vlaneseq
        %v1920 = vshrl.u32 %v1919, 7
        %v1921 = vsub.s32 4, %v1920
        %v1922 = vrot.slane %v1907, %v1921
        %v1923 = vlaneseq
        %v1924 = vshrl.u32 %v1923, 7
        %v1925 = vsub.s32 0, %v1924
        %v1926 = vrot.slane %v1908, %v1925
        %v1927 = vlaneseq
        %v1928 = vshrl.u32 %v1927, 7
        %v1929 = vsub.s32 4, %v1928
        %v1930 = vrot.slane %v1908, %v1929
        %v1931 = vlaneseq
        %v1932 = vshrl.u32 %v1931, 7
        %v1933 = vsub.s32 0, %v1932
        %v1934 = vrot.slane %v1909, %v1933
        %v1935 = vlaneseq
        %v1936 = vshrl.u32 %v1935, 7
        %v1937 = vsub.s32 4, %v1936
        %v1938 = vrot.slane %v1909, %v1937
        %v1939 = vlaneseq
        %v1940 = vshrl.u32 %v1939, 7
        %v1941 = vsub.s32 0, %v1940
        %v1942 = vrot.slane %v1910, %v1941
        %v1943 = vlaneseq
        %v1944 = vshrl.u32 %v1943, 7
        %v1945 = vsub.s32 4, %v1944
        %v1946 = vrot.slane %v1910, %v1945
        %v1955 = vlaneseq
        %v1956 = vshrl.u32 %v1955, 7
        %v1957 = vsub.s32 0, %v1956
        %v1958 = vrot.slane %v1918, %v1957
        %v1959 = vlaneseq
        %v1960 = vshrl.u32 %v1959, 7
        %v1961 = vsub.s32 0, %v1960
        %v1962 = vrot.slane %v1922, %v1961
        %v1963 = vlaneseq
        %v1964 = vshrl.u32 %v1963, 7
        %v1965 = vsub.s32 0, %v1964
        %v1966 = vrot.slane %v1926, %v1965
        %v1967 = vlaneseq
        %v1968 = vshrl.u32 %v1967, 7
        %v1969 = vsub.s32 0, %v1968
        %v1970 = vrot.slane %v1930, %v1969
        %v1971 = vlaneseq
        %v1972 = vshrl.u32 %v1971, 7
        %v1973 = vsub.s32 0, %v1972
        %v1974 = vrot.slane %v1934, %v1973
        %v1975 = vlaneseq
        %v1976 = vshrl.u32 %v1975, 7
        %v1977 = vsub.s32 0, %v1976
        %v1978 = vrot.slane %v1938, %v1977
        %v1979 = vlaneseq
        %v1980 = vshrl.u32 %v1979, 7
        %v1981 = vsub.s32 0, %v1980
        %v1982 = vrot.slane %v1942, %v1981
        %v1983 = vlaneseq
        %v1984 = vshrl.u32 %v1983, 7
        %v1985 = vsub.s32 0, %v1984
        %v1986 = vrot.slane %v1946, %v1985
        %v1987 = vadd.f32 %v1891, %v1958
        %v1988 = vadd.f32 %v1892, %v1962
        %v1989 = vadd.f32 %v1893, %v1966
        %v1990 = vadd.f32 %v1894, %v1970
        %v1991 = vadd.f32 %v1895, %v1974
        %v1992 = vadd.f32 %v1896, %v1978
        %v1993 = vadd.f32 %v1897, %v1982
        %v1994 = vadd.f32 %v1898, %v1986
        %v1995 = vadd.f32 %v1899, %v1958
        %v1996 = vadd.f32 %v1900, %v1962
        %v1997 = vadd.f32 %v1901, %v1966
        %v1998 = vadd.f32 %v1902, %v1970
        %v1999 = vadd.f32 %v1903, %v1974
        %v2000 = vadd.f32 %v1904, %v1978
        %v2001 = vadd.f32 %v1905, %v1982
        %v2002 = vadd.f32 %v1906, %v1986
        %v2003 = vmax.f32 %v1987, 0.0
        %v2004 = vmax.f32 %v1988, 0.0
        %v2005 = vmax.f32 %v1989, 0.0
        %v2006 = vmax.f32 %v1990, 0.0
        %v2007 = vmax.f32 %v1991, 0.0
        %v2008 = vmax.f32 %v1992, 0.0
        %v2009 = vmax.f32 %v1993, 0.0
        %v2010 = vmax.f32 %v1994, 0.0
        %v2011 = vmax.f32 %v1995, 0.0
        %v2012 = vmax.f32 %v1996, 0.0
        %v2013 = vmax.f32 %v1997, 0.0
        %v2014 = vmax.f32 %v1998, 0.0
        %v2015 = vmax.f32 %v1999, 0.0
        %v2016 = vmax.f32 %v2000, 0.0
        %v2017 = vmax.f32 %v2001, 0.0
        %v2018 = vmax.f32 %v2002, 0.0
        %v2019 = vlaneseq
        %v2020 = vshrl.u32 %v2019, 7
        %v2021 = vsub.s32 1, %v2020
        %v2022 = vrot.slane %v1907, %v2021
        %v2023 = vlaneseq
        %v2024 = vshrl.u32 %v2023, 7
        %v2025 = vsub.s32 5, %v2024
        %v2026 = vrot.slane %v1907, %v2025
        %v2027 = vlaneseq
        %v2028 = vshrl.u32 %v2027, 7
        %v2029 = vsub.s32 1, %v2028
        %v2030 = vrot.slane %v1908, %v2029
        %v2031 = vlaneseq
        %v2032 = vshrl.u32 %v2031, 7
        %v2033 = vsub.s32 5, %v2032
        %v2034 = vrot.slane %v1908, %v2033
        %v2035 = vlaneseq
        %v2036 = vshrl.u32 %v2035, 7
        %v2037 = vsub.s32 1, %v2036
        %v2038 = vrot.slane %v1909, %v2037
        %v2039 = vlaneseq
        %v2040 = vshrl.u32 %v2039, 7
        %v2041 = vsub.s32 5, %v2040
        %v2042 = vrot.slane %v1909, %v2041
        %v2043 = vlaneseq
        %v2044 = vshrl.u32 %v2043, 7
        %v2045 = vsub.s32 1, %v2044
        %v2046 = vrot.slane %v1910, %v2045
        %v2047 = vlaneseq
        %v2048 = vshrl.u32 %v2047, 7
        %v2049 = vsub.s32 5, %v2048
        %v2050 = vrot.slane %v1910, %v2049
        %v2059 = vlaneseq
        %v2060 = vshrl.u32 %v2059, 7
        %v2061 = vsub.s32 1, %v2060
        %v2062 = vrot.slane %v2022, %v2061
        %v2063 = vlaneseq
        %v2064 = vshrl.u32 %v2063, 7
        %v2065 = vsub.s32 1, %v2064
        %v2066 = vrot.slane %v2026, %v2065
        %v2067 = vlaneseq
        %v2068 = vshrl.u32 %v2067, 7
        %v2069 = vsub.s32 1, %v2068
        %v2070 = vrot.slane %v2030, %v2069
        %v2071 = vlaneseq
        %v2072 = vshrl.u32 %v2071, 7
        %v2073 = vsub.s32 1, %v2072
        %v2074 = vrot.slane %v2034, %v2073
        %v2075 = vlaneseq
        %v2076 = vshrl.u32 %v2075, 7
        %v2077 = vsub.s32 1, %v2076
        %v2078 = vrot.slane %v2038, %v2077
        %v2079 = vlaneseq
        %v2080 = vshrl.u32 %v2079, 7
        %v2081 = vsub.s32 1, %v2080
        %v2082 = vrot.slane %v2042, %v2081
        %v2083 = vlaneseq
        %v2084 = vshrl.u32 %v2083, 7
        %v2085 = vsub.s32 1, %v2084
        %v2086 = vrot.slane %v2046, %v2085
        %v2087 = vlaneseq
        %v2088 = vshrl.u32 %v2087, 7
        %v2089 = vsub.s32 1, %v2088
        %v2090 = vrot.slane %v2050, %v2089
        %v2091 = vmul.f32 %v2003, %v2062
        %v2092 = vmul.f32 %v2004, %v2066
        %v2093 = vmul.f32 %v2005, %v2070
        %v2094 = vmul.f32 %v2006, %v2074
        %v2095 = vmul.f32 %v2007, %v2078
        %v2096 = vmul.f32 %v2008, %v2082
        %v2097 = vmul.f32 %v2009, %v2086
        %v2098 = vmul.f32 %v2010, %v2090
        %v2099 = vmul.f32 %v2011, %v2062
        %v2100 = vmul.f32 %v2012, %v2066
        %v2101 = vmul.f32 %v2013, %v2070
        %v2102 = vmul.f32 %v2014, %v2074
        %v2103 = vmul.f32 %v2015, %v2078
        %v2104 = vmul.f32 %v2016, %v2082
        %v2105 = vmul.f32 %v2017, %v2086
        %v2106 = vmul.f32 %v2018, %v2090
        %v2107 = vlaneseq
        %v2108 = vshrl.u32 %v2107, 7
        %v2109 = vsub.s32 2, %v2108
        %v2110 = vrot.slane %v1907, %v2109
        %v2111 = vlaneseq
        %v2112 = vshrl.u32 %v2111, 7
        %v2113 = vsub.s32 6, %v2112
        %v2114 = vrot.slane %v1907, %v2113
        %v2115 = vlaneseq
        %v2116 = vshrl.u32 %v2115, 7
        %v2117 = vsub.s32 2, %v2116
        %v2118 = vrot.slane %v1908, %v2117
        %v2119 = vlaneseq
        %v2120 = vshrl.u32 %v2119, 7
        %v2121 = vsub.s32 6, %v2120
        %v2122 = vrot.slane %v1908, %v2121
        %v2123 = vlaneseq
        %v2124 = vshrl.u32 %v2123, 7
        %v2125 = vsub.s32 2, %v2124
        %v2126 = vrot.slane %v1909, %v2125
        %v2127 = vlaneseq
        %v2128 = vshrl.u32 %v2127, 7
        %v2129 = vsub.s32 6, %v2128
        %v2130 = vrot.slane %v1909, %v2129
        %v2131 = vlaneseq
        %v2132 = vshrl.u32 %v2131, 7
        %v2133 = vsub.s32 2, %v2132
        %v2134 = vrot.slane %v1910, %v2133
        %v2135 = vlaneseq
        %v2136 = vshrl.u32 %v2135, 7
        %v2137 = vsub.s32 6, %v2136
        %v2138 = vrot.slane %v1910, %v2137
        %v2147 = vlaneseq
        %v2148 = vshrl.u32 %v2147, 7
        %v2149 = vsub.s32 2, %v2148
        %v2150 = vrot.slane %v2110, %v2149
        %v2151 = vlaneseq
        %v2152 = vshrl.u32 %v2151, 7
        %v2153 = vsub.s32 2, %v2152
        %v2154 = vrot.slane %v2114, %v2153
        %v2155 = vlaneseq
        %v2156 = vshrl.u32 %v2155, 7
        %v2157 = vsub.s32 2, %v2156
        %v2158 = vrot.slane %v2118, %v2157
        %v2159 = vlaneseq
        %v2160 = vshrl.u32 %v2159, 7
        %v2161 = vsub.s32 2, %v2160
        %v2162 = vrot.slane %v2122, %v2161
        %v2163 = vlaneseq
        %v2164 = vshrl.u32 %v2163, 7
        %v2165 = vsub.s32 2, %v2164
        %v2166 = vrot.slane %v2126, %v2165
        %v2167 = vlaneseq
        %v2168 = vshrl.u32 %v2167, 7
        %v2169 = vsub.s32 2, %v2168
        %v2170 = vrot.slane %v2130, %v2169
        %v2171 = vlaneseq
        %v2172 = vshrl.u32 %v2171, 7
        %v2173 = vsub.s32 2, %v2172
        %v2174 = vrot.slane %v2134, %v2173
        %v2175 = vlaneseq
        %v2176 = vshrl.u32 %v2175, 7
        %v2177 = vsub.s32 2, %v2176
        %v2178 = vrot.slane %v2138, %v2177
        %v2179 = vadd.f32 %v2091, %v2150
        %v2180 = vadd.f32 %v2092, %v2154
        %v2181 = vadd.f32 %v2093, %v2158
        %v2182 = vadd.f32 %v2094, %v2162
        %v2183 = vadd.f32 %v2095, %v2166
        %v2184 = vadd.f32 %v2096, %v2170
        %v2185 = vadd.f32 %v2097, %v2174
        %v2186 = vadd.f32 %v2098, %v2178
        %v2187 = vadd.f32 %v2099, %v2150
        %v2188 = vadd.f32 %v2100, %v2154
        %v2189 = vadd.f32 %v2101, %v2158
        %v2190 = vadd.f32 %v2102, %v2162
        %v2191 = vadd.f32 %v2103, %v2166
        %v2192 = vadd.f32 %v2104, %v2170
        %v2193 = vadd.f32 %v2105, %v2174
        %v2194 = vadd.f32 %v2106, %v2178
        %v2195 = vpack.c.bf16 %v2187, %v2179
        %2196 = vst [vmem:[#allocation2] sm:$0xff] %v2195
        %v2197 = vpack.c.bf16 %v2188, %v2180
        %s2198 = scalar_lea.vmem [#allocation2], 8
        %2199 = vst [vmem:[%s2198] sm:$0xff] %v2197
        %v2200 = vpack.c.bf16 %v2189, %v2181
        %s2201 = scalar_lea.vmem [#allocation2], 16
        %2202 = vst [vmem:[%s2201] sm:$0xff] %v2200
        %v2203 = vpack.c.bf16 %v2190, %v2182
        %s2204 = scalar_lea.vmem [#allocation2], 24
        %2205 = vst [vmem:[%s2204] sm:$0xff] %v2203
        %v2206 = vpack.c.bf16 %v2191, %v2183
        %s2207 = scalar_lea.vmem [#allocation2], 32
        %2208 = vst [vmem:[%s2207] sm:$0xff] %v2206
        %v2209 = vpack.c.bf16 %v2192, %v2184
        %s2210 = scalar_lea.vmem [#allocation2], 40
        %2211 = vst [vmem:[%s2210] sm:$0xff] %v2209
        %v2212 = vpack.c.bf16 %v2193, %v2185
        %s2213 = scalar_lea.vmem [#allocation2], 48
        %2214 = vst [vmem:[%s2213] sm:$0xff] %v2212
        %v2215 = vpack.c.bf16 %v2194, %v2186
        %s2216 = scalar_lea.vmem [#allocation2], 56
        %2217 = vst [vmem:[%s2216] sm:$0xff] %v2215
        %v2218 = vld [vmem:[#allocation2] sm:$0xff]
        %v2219 = vld [vmem:[#allocation2 + $0x8] sm:$0xff]
        %v2220 = vld [vmem:[#allocation2 + $0x10] sm:$0xff]
        %v2221 = vld [vmem:[#allocation2 + $0x18] sm:$0xff]
        %v2222 = vld [vmem:[#allocation2 + $0x20] sm:$0xff]
        %v2223 = vld [vmem:[#allocation2 + $0x28] sm:$0xff]
        %v2224 = vld [vmem:[#allocation2 + $0x30] sm:$0xff]
        %v2225 = vld [vmem:[#allocation2 + $0x38] sm:$0xff]
        %v2226 = vld [vmem:[%s4] sm:$0xff]
        %v2227 = vld [vmem:[%s4 + $0x8] sm:$0xff]
        %v2228 = vld [vmem:[%s4 + $0x10] sm:$0xff]
        %v2229 = vld [vmem:[%s4 + $0x18] sm:$0xff]
        %v2230 = vld [vmem:[%s4 + $0x20] sm:$0xff]
        %v2231 = vld [vmem:[%s4 + $0x28] sm:$0xff]
        %v2232 = vld [vmem:[%s4 + $0x30] sm:$0xff]
        %v2233 = vld [vmem:[%s4 + $0x38] sm:$0xff]
        %v2234 = vld [vmem:[%s4 + $0x40] sm:$0xff]
        %v2235 = vld [vmem:[%s4 + $0x48] sm:$0xff]
        %v2236 = vld [vmem:[%s4 + $0x50] sm:$0xff]
        %v2237 = vld [vmem:[%s4 + $0x58] sm:$0xff]
        %v2238 = vld [vmem:[%s4 + $0x60] sm:$0xff]
        %v2239 = vld [vmem:[%s4 + $0x68] sm:$0xff]
        %v2240 = vld [vmem:[%s4 + $0x70] sm:$0xff]
        %v2241 = vld [vmem:[%s4 + $0x78] sm:$0xff]
        %v2242 = vld [vmem:[%s4 + $0x80] sm:$0xff]
        %v2243 = vld [vmem:[%s4 + $0x88] sm:$0xff]
        %v2244 = vld [vmem:[%s4 + $0x90] sm:$0xff]
        %v2245 = vld [vmem:[%s4 + $0x98] sm:$0xff]
        %v2246 = vld [vmem:[%s4 + $0xa0] sm:$0xff]
        %v2247 = vld [vmem:[%s4 + $0xa8] sm:$0xff]
        %v2248 = vld [vmem:[%s4 + $0xb0] sm:$0xff]
        %v2249 = vld [vmem:[%s4 + $0xb8] sm:$0xff]
        %v2250 = vld [vmem:[%s4 + $0xc0] sm:$0xff]
        %v2251 = vld [vmem:[%s4 + $0xc8] sm:$0xff]
        %v2252 = vld [vmem:[%s4 + $0xd0] sm:$0xff]
        %v2253 = vld [vmem:[%s4 + $0xd8] sm:$0xff]
        %v2254 = vld [vmem:[%s4 + $0xe0] sm:$0xff]
        %v2255 = vld [vmem:[%s4 + $0xe8] sm:$0xff]
        %v2256 = vld [vmem:[%s4 + $0xf0] sm:$0xff]
        %v2257 = vld [vmem:[%s4 + $0xf8] sm:$0xff]
        %v2258 = vld [vmem:[%s4 + $0x100] sm:$0xff]
        %v2259 = vld [vmem:[%s4 + $0x108] sm:$0xff]
        %v2260 = vld [vmem:[%s4 + $0x110] sm:$0xff]
        %v2261 = vld [vmem:[%s4 + $0x118] sm:$0xff]
        %v2262 = vld [vmem:[%s4 + $0x120] sm:$0xff]
        %v2263 = vld [vmem:[%s4 + $0x128] sm:$0xff]
        %v2264 = vld [vmem:[%s4 + $0x130] sm:$0xff]
        %v2265 = vld [vmem:[%s4 + $0x138] sm:$0xff]
        %v2266 = vld [vmem:[%s4 + $0x140] sm:$0xff]
        %v2267 = vld [vmem:[%s4 + $0x148] sm:$0xff]
        %v2268 = vld [vmem:[%s4 + $0x150] sm:$0xff]
        %v2269 = vld [vmem:[%s4 + $0x158] sm:$0xff]
        %v2270 = vld [vmem:[%s4 + $0x160] sm:$0xff]
        %v2271 = vld [vmem:[%s4 + $0x168] sm:$0xff]
        %v2272 = vld [vmem:[%s4 + $0x170] sm:$0xff]
        %v2273 = vld [vmem:[%s4 + $0x178] sm:$0xff]
        %v2274 = vld [vmem:[%s4 + $0x180] sm:$0xff]
        %v2275 = vld [vmem:[%s4 + $0x188] sm:$0xff]
        %v2276 = vld [vmem:[%s4 + $0x190] sm:$0xff]
        %v2277 = vld [vmem:[%s4 + $0x198] sm:$0xff]
        %v2278 = vld [vmem:[%s4 + $0x1a0] sm:$0xff]
        %v2279 = vld [vmem:[%s4 + $0x1a8] sm:$0xff]
        %v2280 = vld [vmem:[%s4 + $0x1b0] sm:$0xff]
        %v2281 = vld [vmem:[%s4 + $0x1b8] sm:$0xff]
        %v2282 = vld [vmem:[%s4 + $0x1c0] sm:$0xff]
        %v2283 = vld [vmem:[%s4 + $0x1c8] sm:$0xff]
        %v2284 = vld [vmem:[%s4 + $0x1d0] sm:$0xff]
        %v2285 = vld [vmem:[%s4 + $0x1d8] sm:$0xff]
        %v2286 = vld [vmem:[%s4 + $0x1e0] sm:$0xff]
        %v2287 = vld [vmem:[%s4 + $0x1e8] sm:$0xff]
        %v2288 = vld [vmem:[%s4 + $0x1f0] sm:$0xff]
        %v2289 = vld [vmem:[%s4 + $0x1f8] sm:$0xff]
        %v2354 = vunpack.c.l.b16 %v2226
        %v2355 = vunpack.c.h.b16 %v2226
        %v2356 = vunpack.c.l.b16 %v2227
        %v2357 = vunpack.c.h.b16 %v2227
        %v2358 = vunpack.c.l.b16 %v2228
        %v2359 = vunpack.c.h.b16 %v2228
        %v2360 = vunpack.c.l.b16 %v2229
        %v2361 = vunpack.c.h.b16 %v2229
        %v2362 = vunpack.c.l.b16 %v2230
        %v2363 = vunpack.c.h.b16 %v2230
        %v2364 = vunpack.c.l.b16 %v2231
        %v2365 = vunpack.c.h.b16 %v2231
        %v2366 = vunpack.c.l.b16 %v2232
        %v2367 = vunpack.c.h.b16 %v2232
        %v2368 = vunpack.c.l.b16 %v2233
        %v2369 = vunpack.c.h.b16 %v2233
        %v2370 = vunpack.c.l.b16 %v2234
        %v2371 = vunpack.c.h.b16 %v2234
        %v2372 = vunpack.c.l.b16 %v2235
        %v2373 = vunpack.c.h.b16 %v2235
        %v2374 = vunpack.c.l.b16 %v2236
        %v2375 = vunpack.c.h.b16 %v2236
        %v2376 = vunpack.c.l.b16 %v2237
        %v2377 = vunpack.c.h.b16 %v2237
        %v2378 = vunpack.c.l.b16 %v2238
        %v2379 = vunpack.c.h.b16 %v2238
        %v2380 = vunpack.c.l.b16 %v2239
        %v2381 = vunpack.c.h.b16 %v2239
        %v2382 = vunpack.c.l.b16 %v2240
        %v2383 = vunpack.c.h.b16 %v2240
        %v2384 = vunpack.c.l.b16 %v2241
        %v2385 = vunpack.c.h.b16 %v2241
        %v2386 = vunpack.c.l.b16 %v2242
        %v2387 = vunpack.c.h.b16 %v2242
        %v2388 = vunpack.c.l.b16 %v2243
        %v2389 = vunpack.c.h.b16 %v2243
        %v2390 = vunpack.c.l.b16 %v2244
        %v2391 = vunpack.c.h.b16 %v2244
        %v2392 = vunpack.c.l.b16 %v2245
        %v2393 = vunpack.c.h.b16 %v2245
        %v2394 = vunpack.c.l.b16 %v2246
        %v2395 = vunpack.c.h.b16 %v2246
        %v2396 = vunpack.c.l.b16 %v2247
        %v2397 = vunpack.c.h.b16 %v2247
        %v2398 = vunpack.c.l.b16 %v2248
        %v2399 = vunpack.c.h.b16 %v2248
        %v2400 = vunpack.c.l.b16 %v2249
        %v2401 = vunpack.c.h.b16 %v2249
        %v2402 = vunpack.c.l.b16 %v2250
        %v2403 = vunpack.c.h.b16 %v2250
        %v2404 = vunpack.c.l.b16 %v2251
        %v2405 = vunpack.c.h.b16 %v2251
        %v2406 = vunpack.c.l.b16 %v2252
        %v2407 = vunpack.c.h.b16 %v2252
        %v2408 = vunpack.c.l.b16 %v2253
        %v2409 = vunpack.c.h.b16 %v2253
        %v2410 = vunpack.c.l.b16 %v2254
        %v2411 = vunpack.c.h.b16 %v2254
        %v2412 = vunpack.c.l.b16 %v2255
        %v2413 = vunpack.c.h.b16 %v2255
        %v2414 = vunpack.c.l.b16 %v2256
        %v2415 = vunpack.c.h.b16 %v2256
        %v2416 = vunpack.c.l.b16 %v2257
        %v2417 = vunpack.c.h.b16 %v2257
        %v2418 = vunpack.c.l.b16 %v2258
        %v2419 = vunpack.c.h.b16 %v2258
        %v2420 = vunpack.c.l.b16 %v2259
        %v2421 = vunpack.c.h.b16 %v2259
        %v2422 = vunpack.c.l.b16 %v2260
        %v2423 = vunpack.c.h.b16 %v2260
        %v2424 = vunpack.c.l.b16 %v2261
        %v2425 = vunpack.c.h.b16 %v2261
        %v2426 = vunpack.c.l.b16 %v2262
        %v2427 = vunpack.c.h.b16 %v2262
        %v2428 = vunpack.c.l.b16 %v2263
        %v2429 = vunpack.c.h.b16 %v2263
        %v2430 = vunpack.c.l.b16 %v2264
        %v2431 = vunpack.c.h.b16 %v2264
        %v2432 = vunpack.c.l.b16 %v2265
        %v2433 = vunpack.c.h.b16 %v2265
        %v2434 = vunpack.c.l.b16 %v2266
        %v2435 = vunpack.c.h.b16 %v2266
        %v2436 = vunpack.c.l.b16 %v2267
        %v2437 = vunpack.c.h.b16 %v2267
        %v2438 = vunpack.c.l.b16 %v2268
        %v2439 = vunpack.c.h.b16 %v2268
        %v2440 = vunpack.c.l.b16 %v2269
        %v2441 = vunpack.c.h.b16 %v2269
        %v2442 = vunpack.c.l.b16 %v2270
        %v2443 = vunpack.c.h.b16 %v2270
        %v2444 = vunpack.c.l.b16 %v2271
        %v2445 = vunpack.c.h.b16 %v2271
        %v2446 = vunpack.c.l.b16 %v2272
        %v2447 = vunpack.c.h.b16 %v2272
        %v2448 = vunpack.c.l.b16 %v2273
        %v2449 = vunpack.c.h.b16 %v2273
        %v2450 = vunpack.c.l.b16 %v2274
        %v2451 = vunpack.c.h.b16 %v2274
        %v2452 = vunpack.c.l.b16 %v2275
        %v2453 = vunpack.c.h.b16 %v2275
        %v2454 = vunpack.c.l.b16 %v2276
        %v2455 = vunpack.c.h.b16 %v2276
        %v2456 = vunpack.c.l.b16 %v2277
        %v2457 = vunpack.c.h.b16 %v2277
        %v2458 = vunpack.c.l.b16 %v2278
        %v2459 = vunpack.c.h.b16 %v2278
        %v2460 = vunpack.c.l.b16 %v2279
        %v2461 = vunpack.c.h.b16 %v2279
        %v2462 = vunpack.c.l.b16 %v2280
        %v2463 = vunpack.c.h.b16 %v2280
        %v2464 = vunpack.c.l.b16 %v2281
        %v2465 = vunpack.c.h.b16 %v2281
        %v2466 = vunpack.c.l.b16 %v2282
        %v2467 = vunpack.c.h.b16 %v2282
        %v2468 = vunpack.c.l.b16 %v2283
        %v2469 = vunpack.c.h.b16 %v2283
        %v2470 = vunpack.c.l.b16 %v2284
        %v2471 = vunpack.c.h.b16 %v2284
        %v2472 = vunpack.c.l.b16 %v2285
        %v2473 = vunpack.c.h.b16 %v2285
        %v2474 = vunpack.c.l.b16 %v2286
        %v2475 = vunpack.c.h.b16 %v2286
        %v2476 = vunpack.c.l.b16 %v2287
        %v2477 = vunpack.c.h.b16 %v2287
        %v2478 = vunpack.c.l.b16 %v2288
        %v2479 = vunpack.c.h.b16 %v2288
        %v2480 = vunpack.c.l.b16 %v2289
        %v2481 = vunpack.c.h.b16 %v2289
        %v2482 = vpack.c.b16 %v2362, %v2354
        %v2483 = vpack.c.b16 %v2363, %v2355
        %v2484 = vpack.c.b16 %v2364, %v2356
        %v2485 = vpack.c.b16 %v2365, %v2357
        %v2486 = vpack.c.b16 %v2366, %v2358
        %v2487 = vpack.c.b16 %v2367, %v2359
        %v2488 = vpack.c.b16 %v2368, %v2360
        %v2489 = vpack.c.b16 %v2369, %v2361
        %v2490 = vpack.c.b16 %v2378, %v2370
        %v2491 = vpack.c.b16 %v2379, %v2371
        %v2492 = vpack.c.b16 %v2380, %v2372
        %v2493 = vpack.c.b16 %v2381, %v2373
        %v2494 = vpack.c.b16 %v2382, %v2374
        %v2495 = vpack.c.b16 %v2383, %v2375
        %v2496 = vpack.c.b16 %v2384, %v2376
        %v2497 = vpack.c.b16 %v2385, %v2377
        %v2498 = vpack.c.b16 %v2394, %v2386
        %v2499 = vpack.c.b16 %v2395, %v2387
        %v2500 = vpack.c.b16 %v2396, %v2388
        %v2501 = vpack.c.b16 %v2397, %v2389
        %v2502 = vpack.c.b16 %v2398, %v2390
        %v2503 = vpack.c.b16 %v2399, %v2391
        %v2504 = vpack.c.b16 %v2400, %v2392
        %v2505 = vpack.c.b16 %v2401, %v2393
        %v2506 = vpack.c.b16 %v2410, %v2402
        %v2507 = vpack.c.b16 %v2411, %v2403
        %v2508 = vpack.c.b16 %v2412, %v2404
        %v2509 = vpack.c.b16 %v2413, %v2405
        %v2510 = vpack.c.b16 %v2414, %v2406
        %v2511 = vpack.c.b16 %v2415, %v2407
        %v2512 = vpack.c.b16 %v2416, %v2408
        %v2513 = vpack.c.b16 %v2417, %v2409
        %v2514 = vpack.c.b16 %v2426, %v2418
        %v2515 = vpack.c.b16 %v2427, %v2419
        %v2516 = vpack.c.b16 %v2428, %v2420
        %v2517 = vpack.c.b16 %v2429, %v2421
        %v2518 = vpack.c.b16 %v2430, %v2422
        %v2519 = vpack.c.b16 %v2431, %v2423
        %v2520 = vpack.c.b16 %v2432, %v2424
        %v2521 = vpack.c.b16 %v2433, %v2425
        %v2522 = vpack.c.b16 %v2442, %v2434
        %v2523 = vpack.c.b16 %v2443, %v2435
        %v2524 = vpack.c.b16 %v2444, %v2436
        %v2525 = vpack.c.b16 %v2445, %v2437
        %v2526 = vpack.c.b16 %v2446, %v2438
        %v2527 = vpack.c.b16 %v2447, %v2439
        %v2528 = vpack.c.b16 %v2448, %v2440
        %v2529 = vpack.c.b16 %v2449, %v2441
        %v2530 = vpack.c.b16 %v2458, %v2450
        %v2531 = vpack.c.b16 %v2459, %v2451
        %v2532 = vpack.c.b16 %v2460, %v2452
        %v2533 = vpack.c.b16 %v2461, %v2453
        %v2534 = vpack.c.b16 %v2462, %v2454
        %v2535 = vpack.c.b16 %v2463, %v2455
        %v2536 = vpack.c.b16 %v2464, %v2456
        %v2537 = vpack.c.b16 %v2465, %v2457
        %v2538 = vpack.c.b16 %v2474, %v2466
        %v2539 = vpack.c.b16 %v2475, %v2467
        %v2540 = vpack.c.b16 %v2476, %v2468
        %v2541 = vpack.c.b16 %v2477, %v2469
        %v2542 = vpack.c.b16 %v2478, %v2470
        %v2543 = vpack.c.b16 %v2479, %v2471
        %v2544 = vpack.c.b16 %v2480, %v2472
        %v2545 = vpack.c.b16 %v2481, %v2473
        %2610 = vmatprep.subr.bf16.mxu0 %v2483
        %2611 = vmatpush1.bf16.msra.mxu0 %v2482
        %2612 = vmatprep.subr.bf16.mxu0 %v2491
        %2613 = vmatpush1.bf16.msra.mxu0 %v2490
        %2614 = vmatprep.subr.bf16.mxu0 %v2499
        %2615 = vmatpush1.bf16.msra.mxu0 %v2498
        %2616 = vmatprep.subr.bf16.mxu0 %v2507
        %2617 = vmatpush1.bf16.msra.mxu0 %v2506
        %2618 = vmatprep.subr.bf16.mxu0 %v2515
        %2619 = vmatpush1.bf16.msra.mxu0 %v2514
        %2620 = vmatprep.subr.bf16.mxu0 %v2523
        %2621 = vmatpush1.bf16.msra.mxu0 %v2522
        %2622 = vmatprep.subr.bf16.mxu0 %v2531
        %2623 = vmatpush1.bf16.msra.mxu0 %v2530
        %2624 = vmatprep.subr.bf16.mxu0 %v2539
        %2625 = vmatpush1.bf16.msra.mxu0 %v2538
        %2626 = vmatprep.subr.bf16.mxu0 0
        %2627 = vmatpush1.bf16.msra.mxu0 0
        %2628 = vmatprep.subr.bf16.mxu0 0
        %2629 = vmatpush1.bf16.msra.mxu0 0
        %2630 = vmatprep.subr.bf16.mxu0 0
        %2631 = vmatpush1.bf16.msra.mxu0 0
        %2632 = vmatprep.subr.bf16.mxu0 0
        %2633 = vmatpush1.bf16.msra.mxu0 0
        %2634 = vmatprep.subr.bf16.mxu0 0
        %2635 = vmatpush1.bf16.msra.mxu0 0
        %2636 = vmatprep.subr.bf16.mxu0 0
        %2637 = vmatpush1.bf16.msra.mxu0 0
        %2638 = vmatprep.subr.bf16.mxu0 0
        %2639 = vmatpush1.bf16.msra.mxu0 0
        %2640 = vmatprep.subr.bf16.mxu0 0
        %2641 = vmatpush1.bf16.msra.mxu0 0
        %2642 = vmatprep.mubr.bf16.mxu0 0
        %2643 = vmatmul.mubr.bf16.gmra.mrb[0].mxu0 %v2218
        %v2644 = vpop.f32.mrb[0].mxu0
        %v2645 = vadd.f32 0.0, %v2644
        %v2646 = vpop.f32.mrb[0].mxu0
        %v2647 = vadd.f32 0.0, %v2646
        %v2648 = vpop.f32.mrb[0].mxu0
        %v2649 = vadd.f32 0.0, %v2648
        %v2650 = vpop.f32.mrb[0].mxu0
        %v2651 = vadd.f32 0.0, %v2650
        %2652 = vmatprep.mubr.bf16.mxu0 0
        %2653 = vmatmul.mubr.bf16.gmra.mrb[0].mxu0 %v2219
        %v2654 = vpop.f32.mrb[0].mxu0
        %v2655 = vadd.f32 0.0, %v2654
        %v2656 = vpop.f32.mrb[0].mxu0
        %v2657 = vadd.f32 0.0, %v2656
        %v2658 = vpop.f32.mrb[0].mxu0
        %v2659 = vadd.f32 0.0, %v2658
        %v2660 = vpop.f32.mrb[0].mxu0
        %v2661 = vadd.f32 0.0, %v2660
        %2662 = vmatprep.mubr.bf16.mxu0 0
        %2663 = vmatmul.mubr.bf16.gmra.mrb[0].mxu0 %v2220
        %v2664 = vpop.f32.mrb[0].mxu0
        %v2665 = vadd.f32 0.0, %v2664
        %v2666 = vpop.f32.mrb[0].mxu0
        %v2667 = vadd.f32 0.0, %v2666
        %v2668 = vpop.f32.mrb[0].mxu0
        %v2669 = vadd.f32 0.0, %v2668
        %v2670 = vpop.f32.mrb[0].mxu0
        %v2671 = vadd.f32 0.0, %v2670
        %2672 = vmatprep.mubr.bf16.mxu0 0
        %2673 = vmatmul.mubr.bf16.gmra.mrb[0].mxu0 %v2221
        %v2674 = vpop.f32.mrb[0].mxu0
        %v2675 = vadd.f32 0.0, %v2674
        %v2676 = vpop.f32.mrb[0].mxu0
        %v2677 = vadd.f32 0.0, %v2676
        %v2678 = vpop.f32.mrb[0].mxu0
        %v2679 = vadd.f32 0.0, %v2678
        %v2680 = vpop.f32.mrb[0].mxu0
        %v2681 = vadd.f32 0.0, %v2680
        %2682 = vmatprep.mubr.bf16.mxu0 0
        %2683 = vmatmul.mubr.bf16.gmra.mrb[0].mxu0 %v2222
        %v2684 = vpop.f32.mrb[0].mxu0
        %v2685 = vadd.f32 0.0, %v2684
        %v2686 = vpop.f32.mrb[0].mxu0
        %v2687 = vadd.f32 0.0, %v2686
        %v2688 = vpop.f32.mrb[0].mxu0
        %v2689 = vadd.f32 0.0, %v2688
        %v2690 = vpop.f32.mrb[0].mxu0
        %v2691 = vadd.f32 0.0, %v2690
        %2692 = vmatprep.mubr.bf16.mxu0 0
        %2693 = vmatmul.mubr.bf16.gmra.mrb[0].mxu0 %v2223
        %v2694 = vpop.f32.mrb[0].mxu0
        %v2695 = vadd.f32 0.0, %v2694
        %v2696 = vpop.f32.mrb[0].mxu0
        %v2697 = vadd.f32 0.0, %v2696
        %v2698 = vpop.f32.mrb[0].mxu0
        %v2699 = vadd.f32 0.0, %v2698
        %v2700 = vpop.f32.mrb[0].mxu0
        %v2701 = vadd.f32 0.0, %v2700
        %2702 = vmatprep.mubr.bf16.mxu0 0
        %2703 = vmatmul.mubr.bf16.gmra.mrb[0].mxu0 %v2224
        %v2704 = vpop.f32.mrb[0].mxu0
        %v2705 = vadd.f32 0.0, %v2704
        %v2706 = vpop.f32.mrb[0].mxu0
        %v2707 = vadd.f32 0.0, %v2706
        %v2708 = vpop.f32.mrb[0].mxu0
        %v2709 = vadd.f32 0.0, %v2708
        %v2710 = vpop.f32.mrb[0].mxu0
        %v2711 = vadd.f32 0.0, %v2710
        %2712 = vmatprep.mubr.bf16.mxu0 0
        %2713 = vmatmul.mubr.bf16.gmra.mrb[0].mxu0 %v2225
        %v2714 = vpop.f32.mrb[0].mxu0
        %v2715 = vadd.f32 0.0, %v2714
        %v2716 = vpop.f32.mrb[0].mxu0
        %v2717 = vadd.f32 0.0, %v2716
        %v2718 = vpop.f32.mrb[0].mxu0
        %v2719 = vadd.f32 0.0, %v2718
        %v2720 = vpop.f32.mrb[0].mxu0
        %v2721 = vadd.f32 0.0, %v2720
        %2722 = vdwg.mxu0
        %2723 = vmatprep.subr.bf16.mxu0 %v2485
        %2724 = vmatpush1.bf16.msra.mxu0 %v2484
        %2725 = vmatprep.subr.bf16.mxu0 %v2493
        %2726 = vmatpush1.bf16.msra.mxu0 %v2492
        %2727 = vmatprep.subr.bf16.mxu0 %v2501
        %2728 = vmatpush1.bf16.msra.mxu0 %v2500
        %2729 = vmatprep.subr.bf16.mxu0 %v2509
        %2730 = vmatpush1.bf16.msra.mxu0 %v2508
        %2731 = vmatprep.subr.bf16.mxu0 %v2517
        %2732 = vmatpush1.bf16.msra.mxu0 %v2516
        %2733 = vmatprep.subr.bf16.mxu0 %v2525
        %2734 = vmatpush1.bf16.msra.mxu0 %v2524
        %2735 = vmatprep.subr.bf16.mxu0 %v2533
        %2736 = vmatpush1.bf16.msra.mxu0 %v2532
        %2737 = vmatprep.subr.bf16.mxu0 %v2541
        %2738 = vmatpush1.bf16.msra.mxu0 %v2540
        %2739 = vmatprep.subr.bf16.mxu0 0
        %2740 = vmatpush1.bf16.msra.mxu0 0
        %2741 = vmatprep.subr.bf16.mxu0 0
        %2742 = vmatpush1.bf16.msra.mxu0 0
        %2743 = vmatprep.subr.bf16.mxu0 0
        %2744 = vmatpush1.bf16.msra.mxu0 0
        %2745 = vmatprep.subr.bf16.mxu0 0
        %2746 = vmatpush1.bf16.msra.mxu0 0
        %2747 = vmatprep.subr.bf16.mxu0 0
        %2748 = vmatpush1.bf16.msra.mxu0 0
        %2749 = vmatprep.subr.bf16.mxu0 0
        %2750 = vmatpush1.bf16.msra.mxu0 0
        %2751 = vmatprep.subr.bf16.mxu0 0
        %2752 = vmatpush1.bf16.msra.mxu0 0
        %2753 = vmatprep.subr.bf16.mxu0 0
        %2754 = vmatpush1.bf16.msra.mxu0 0
        %2755 = vmatprep.mubr.bf16.mxu0 0
        %2756 = vmatmul.mubr.bf16.gmra.mrb[0].mxu0 %v2218
        %v2757 = vpop.f32.mrb[0].mxu0
        %v2758 = vadd.f32 0.0, %v2757
        %v2759 = vpop.f32.mrb[0].mxu0
        %v2760 = vadd.f32 0.0, %v2759
        %v2761 = vpop.f32.mrb[0].mxu0
        %v2762 = vadd.f32 0.0, %v2761
        %v2763 = vpop.f32.mrb[0].mxu0
        %v2764 = vadd.f32 0.0, %v2763
        %2765 = vmatprep.mubr.bf16.mxu0 0
        %2766 = vmatmul.mubr.bf16.gmra.mrb[0].mxu0 %v2219
        %v2767 = vpop.f32.mrb[0].mxu0
        %v2768 = vadd.f32 0.0, %v2767
        %v2769 = vpop.f32.mrb[0].mxu0
        %v2770 = vadd.f32 0.0, %v2769
        %v2771 = vpop.f32.mrb[0].mxu0
        %v2772 = vadd.f32 0.0, %v2771
        %v2773 = vpop.f32.mrb[0].mxu0
        %v2774 = vadd.f32 0.0, %v2773
        %2775 = vmatprep.mubr.bf16.mxu0 0
        %2776 = vmatmul.mubr.bf16.gmra.mrb[0].mxu0 %v2220
        %v2777 = vpop.f32.mrb[0].mxu0
        %v2778 = vadd.f32 0.0, %v2777
        %v2779 = vpop.f32.mrb[0].mxu0
        %v2780 = vadd.f32 0.0, %v2779
        %v2781 = vpop.f32.mrb[0].mxu0
        %v2782 = vadd.f32 0.0, %v2781
        %v2783 = vpop.f32.mrb[0].mxu0
        %v2784 = vadd.f32 0.0, %v2783
        %2785 = vmatprep.mubr.bf16.mxu0 0
        %2786 = vmatmul.mubr.bf16.gmra.mrb[0].mxu0 %v2221
        %v2787 = vpop.f32.mrb[0].mxu0
        %v2788 = vadd.f32 0.0, %v2787
        %v2789 = vpop.f32.mrb[0].mxu0
        %v2790 = vadd.f32 0.0, %v2789
        %v2791 = vpop.f32.mrb[0].mxu0
        %v2792 = vadd.f32 0.0, %v2791
        %v2793 = vpop.f32.mrb[0].mxu0
        %v2794 = vadd.f32 0.0, %v2793
        %2795 = vmatprep.mubr.bf16.mxu0 0
        %2796 = vmatmul.mubr.bf16.gmra.mrb[0].mxu0 %v2222
        %v2797 = vpop.f32.mrb[0].mxu0
        %v2798 = vadd.f32 0.0, %v2797
        %v2799 = vpop.f32.mrb[0].mxu0
        %v2800 = vadd.f32 0.0, %v2799
        %v2801 = vpop.f32.mrb[0].mxu0
        %v2802 = vadd.f32 0.0, %v2801
        %v2803 = vpop.f32.mrb[0].mxu0
        %v2804 = vadd.f32 0.0, %v2803
        %2805 = vmatprep.mubr.bf16.mxu0 0
        %2806 = vmatmul.mubr.bf16.gmra.mrb[0].mxu0 %v2223
        %v2807 = vpop.f32.mrb[0].mxu0
        %v2808 = vadd.f32 0.0, %v2807
        %v2809 = vpop.f32.mrb[0].mxu0
        %v2810 = vadd.f32 0.0, %v2809
        %v2811 = vpop.f32.mrb[0].mxu0
        %v2812 = vadd.f32 0.0, %v2811
        %v2813 = vpop.f32.mrb[0].mxu0
        %v2814 = vadd.f32 0.0, %v2813
        %2815 = vmatprep.mubr.bf16.mxu0 0
        %2816 = vmatmul.mubr.bf16.gmra.mrb[0].mxu0 %v2224
        %v2817 = vpop.f32.mrb[0].mxu0
        %v2818 = vadd.f32 0.0, %v2817
        %v2819 = vpop.f32.mrb[0].mxu0
        %v2820 = vadd.f32 0.0, %v2819
        %v2821 = vpop.f32.mrb[0].mxu0
        %v2822 = vadd.f32 0.0, %v2821
        %v2823 = vpop.f32.mrb[0].mxu0
        %v2824 = vadd.f32 0.0, %v2823
        %2825 = vmatprep.mubr.bf16.mxu0 0
        %2826 = vmatmul.mubr.bf16.gmra.mrb[0].mxu0 %v2225
        %v2827 = vpop.f32.mrb[0].mxu0
        %v2828 = vadd.f32 0.0, %v2827
        %v2829 = vpop.f32.mrb[0].mxu0
        %v2830 = vadd.f32 0.0, %v2829
        %v2831 = vpop.f32.mrb[0].mxu0
        %v2832 = vadd.f32 0.0, %v2831
        %v2833 = vpop.f32.mrb[0].mxu0
        %v2834 = vadd.f32 0.0, %v2833
        %2835 = vdwg.mxu0
        %2836 = vmatprep.subr.bf16.mxu0 %v2487
        %2837 = vmatpush1.bf16.msra.mxu0 %v2486
        %2838 = vmatprep.subr.bf16.mxu0 %v2495
        %2839 = vmatpush1.bf16.msra.mxu0 %v2494
        %2840 = vmatprep.subr.bf16.mxu0 %v2503
        %2841 = vmatpush1.bf16.msra.mxu0 %v2502
        %2842 = vmatprep.subr.bf16.mxu0 %v2511
        %2843 = vmatpush1.bf16.msra.mxu0 %v2510
        %2844 = vmatprep.subr.bf16.mxu0 %v2519
        %2845 = vmatpush1.bf16.msra.mxu0 %v2518
        %2846 = vmatprep.subr.bf16.mxu0 %v2527
        %2847 = vmatpush1.bf16.msra.mxu0 %v2526
        %2848 = vmatprep.subr.bf16.mxu0 %v2535
        %2849 = vmatpush1.bf16.msra.mxu0 %v2534
        %2850 = vmatprep.subr.bf16.mxu0 %v2543
        %2851 = vmatpush1.bf16.msra.mxu0 %v2542
        %2852 = vmatprep.subr.bf16.mxu0 0
        %2853 = vmatpush1.bf16.msra.mxu0 0
        %2854 = vmatprep.subr.bf16.mxu0 0
        %2855 = vmatpush1.bf16.msra.mxu0 0
        %2856 = vmatprep.subr.bf16.mxu0 0
        %2857 = vmatpush1.bf16.msra.mxu0 0
        %2858 = vmatprep.subr.bf16.mxu0 0
        %2859 = vmatpush1.bf16.msra.mxu0 0
        %2860 = vmatprep.subr.bf16.mxu0 0
        %2861 = vmatpush1.bf16.msra.mxu0 0
        %2862 = vmatprep.subr.bf16.mxu0 0
        %2863 = vmatpush1.bf16.msra.mxu0 0
        %2864 = vmatprep.subr.bf16.mxu0 0
        %2865 = vmatpush1.bf16.msra.mxu0 0
        %2866 = vmatprep.subr.bf16.mxu0 0
        %2867 = vmatpush1.bf16.msra.mxu0 0
        %2868 = vmatprep.mubr.bf16.mxu0 0
        %2869 = vmatmul.mubr.bf16.gmra.mrb[0].mxu0 %v2218
        %v2870 = vpop.f32.mrb[0].mxu0
        %v2871 = vadd.f32 0.0, %v2870
        %v2872 = vpop.f32.mrb[0].mxu0
        %v2873 = vadd.f32 0.0, %v2872
        %v2874 = vpop.f32.mrb[0].mxu0
        %v2875 = vadd.f32 0.0, %v2874
        %v2876 = vpop.f32.mrb[0].mxu0
        %v2877 = vadd.f32 0.0, %v2876
        %2878 = vmatprep.mubr.bf16.mxu0 0
        %2879 = vmatmul.mubr.bf16.gmra.mrb[0].mxu0 %v2219
        %v2880 = vpop.f32.mrb[0].mxu0
        %v2881 = vadd.f32 0.0, %v2880
        %v2882 = vpop.f32.mrb[0].mxu0
        %v2883 = vadd.f32 0.0, %v2882
        %v2884 = vpop.f32.mrb[0].mxu0
        %v2885 = vadd.f32 0.0, %v2884
        %v2886 = vpop.f32.mrb[0].mxu0
        %v2887 = vadd.f32 0.0, %v2886
        %2888 = vmatprep.mubr.bf16.mxu0 0
        %2889 = vmatmul.mubr.bf16.gmra.mrb[0].mxu0 %v2220
        %v2890 = vpop.f32.mrb[0].mxu0
        %v2891 = vadd.f32 0.0, %v2890
        %v2892 = vpop.f32.mrb[0].mxu0
        %v2893 = vadd.f32 0.0, %v2892
        %v2894 = vpop.f32.mrb[0].mxu0
        %v2895 = vadd.f32 0.0, %v2894
        %v2896 = vpop.f32.mrb[0].mxu0
        %v2897 = vadd.f32 0.0, %v2896
        %2898 = vmatprep.mubr.bf16.mxu0 0
        %2899 = vmatmul.mubr.bf16.gmra.mrb[0].mxu0 %v2221
        %v2900 = vpop.f32.mrb[0].mxu0
        %v2901 = vadd.f32 0.0, %v2900
        %v2902 = vpop.f32.mrb[0].mxu0
        %v2903 = vadd.f32 0.0, %v2902
        %v2904 = vpop.f32.mrb[0].mxu0
        %v2905 = vadd.f32 0.0, %v2904
        %v2906 = vpop.f32.mrb[0].mxu0
        %v2907 = vadd.f32 0.0, %v2906
        %2908 = vmatprep.mubr.bf16.mxu0 0
        %2909 = vmatmul.mubr.bf16.gmra.mrb[0].mxu0 %v2222
        %v2910 = vpop.f32.mrb[0].mxu0
        %v2911 = vadd.f32 0.0, %v2910
        %v2912 = vpop.f32.mrb[0].mxu0
        %v2913 = vadd.f32 0.0, %v2912
        %v2914 = vpop.f32.mrb[0].mxu0
        %v2915 = vadd.f32 0.0, %v2914
        %v2916 = vpop.f32.mrb[0].mxu0
        %v2917 = vadd.f32 0.0, %v2916
        %2918 = vmatprep.mubr.bf16.mxu0 0
        %2919 = vmatmul.mubr.bf16.gmra.mrb[0].mxu0 %v2223
        %v2920 = vpop.f32.mrb[0].mxu0
        %v2921 = vadd.f32 0.0, %v2920
        %v2922 = vpop.f32.mrb[0].mxu0
        %v2923 = vadd.f32 0.0, %v2922
        %v2924 = vpop.f32.mrb[0].mxu0
        %v2925 = vadd.f32 0.0, %v2924
        %v2926 = vpop.f32.mrb[0].mxu0
        %v2927 = vadd.f32 0.0, %v2926
        %2928 = vmatprep.mubr.bf16.mxu0 0
        %2929 = vmatmul.mubr.bf16.gmra.mrb[0].mxu0 %v2224
        %v2930 = vpop.f32.mrb[0].mxu0
        %v2931 = vadd.f32 0.0, %v2930
        %v2932 = vpop.f32.mrb[0].mxu0
        %v2933 = vadd.f32 0.0, %v2932
        %v2934 = vpop.f32.mrb[0].mxu0
        %v2935 = vadd.f32 0.0, %v2934
        %v2936 = vpop.f32.mrb[0].mxu0
        %v2937 = vadd.f32 0.0, %v2936
        %2938 = vmatprep.mubr.bf16.mxu0 0
        %2939 = vmatmul.mubr.bf16.gmra.mrb[0].mxu0 %v2225
        %v2940 = vpop.f32.mrb[0].mxu0
        %v2941 = vadd.f32 0.0, %v2940
        %v2942 = vpop.f32.mrb[0].mxu0
        %v2943 = vadd.f32 0.0, %v2942
        %v2944 = vpop.f32.mrb[0].mxu0
        %v2945 = vadd.f32 0.0, %v2944
        %v2946 = vpop.f32.mrb[0].mxu0
        %v2947 = vadd.f32 0.0, %v2946
        %2948 = vdwg.mxu0
        %2949 = vmatprep.subr.bf16.mxu0 %v2489
        %2950 = vmatpush1.bf16.msra.mxu0 %v2488
        %2951 = vmatprep.subr.bf16.mxu0 %v2497
        %2952 = vmatpush1.bf16.msra.mxu0 %v2496
        %2953 = vmatprep.subr.bf16.mxu0 %v2505
        %2954 = vmatpush1.bf16.msra.mxu0 %v2504
        %2955 = vmatprep.subr.bf16.mxu0 %v2513
        %2956 = vmatpush1.bf16.msra.mxu0 %v2512
        %2957 = vmatprep.subr.bf16.mxu0 %v2521
        %2958 = vmatpush1.bf16.msra.mxu0 %v2520
        %2959 = vmatprep.subr.bf16.mxu0 %v2529
        %2960 = vmatpush1.bf16.msra.mxu0 %v2528
        %2961 = vmatprep.subr.bf16.mxu0 %v2537
        %2962 = vmatpush1.bf16.msra.mxu0 %v2536
        %2963 = vmatprep.subr.bf16.mxu0 %v2545
        %2964 = vmatpush1.bf16.msra.mxu0 %v2544
        %2965 = vmatprep.subr.bf16.mxu0 0
        %2966 = vmatpush1.bf16.msra.mxu0 0
        %2967 = vmatprep.subr.bf16.mxu0 0
        %2968 = vmatpush1.bf16.msra.mxu0 0
        %2969 = vmatprep.subr.bf16.mxu0 0
        %2970 = vmatpush1.bf16.msra.mxu0 0
        %2971 = vmatprep.subr.bf16.mxu0 0
        %2972 = vmatpush1.bf16.msra.mxu0 0
        %2973 = vmatprep.subr.bf16.mxu0 0
        %2974 = vmatpush1.bf16.msra.mxu0 0
        %2975 = vmatprep.subr.bf16.mxu0 0
        %2976 = vmatpush1.bf16.msra.mxu0 0
        %2977 = vmatprep.subr.bf16.mxu0 0
        %2978 = vmatpush1.bf16.msra.mxu0 0
        %2979 = vmatprep.subr.bf16.mxu0 0
        %2980 = vmatpush1.bf16.msra.mxu0 0
        %2981 = vmatprep.mubr.bf16.mxu0 0
        %2982 = vmatmul.mubr.bf16.gmra.mrb[0].mxu0 %v2218
        %v2983 = vpop.f32.mrb[0].mxu0
        %v2984 = vadd.f32 0.0, %v2983
        %v2985 = vpop.f32.mrb[0].mxu0
        %v2986 = vadd.f32 0.0, %v2985
        %v2987 = vpop.f32.mrb[0].mxu0
        %v2988 = vadd.f32 0.0, %v2987
        %v2989 = vpop.f32.mrb[0].mxu0
        %v2990 = vadd.f32 0.0, %v2989
        %2991 = vmatprep.mubr.bf16.mxu0 0
        %2992 = vmatmul.mubr.bf16.gmra.mrb[0].mxu0 %v2219
        %v2993 = vpop.f32.mrb[0].mxu0
        %v2994 = vadd.f32 0.0, %v2993
        %v2995 = vpop.f32.mrb[0].mxu0
        %v2996 = vadd.f32 0.0, %v2995
        %v2997 = vpop.f32.mrb[0].mxu0
        %v2998 = vadd.f32 0.0, %v2997
        %v2999 = vpop.f32.mrb[0].mxu0
        %v3000 = vadd.f32 0.0, %v2999
        %3001 = vmatprep.mubr.bf16.mxu0 0
        %3002 = vmatmul.mubr.bf16.gmra.mrb[0].mxu0 %v2220
        %v3003 = vpop.f32.mrb[0].mxu0
        %v3004 = vadd.f32 0.0, %v3003
        %v3005 = vpop.f32.mrb[0].mxu0
        %v3006 = vadd.f32 0.0, %v3005
        %v3007 = vpop.f32.mrb[0].mxu0
        %v3008 = vadd.f32 0.0, %v3007
        %v3009 = vpop.f32.mrb[0].mxu0
        %v3010 = vadd.f32 0.0, %v3009
        %3011 = vmatprep.mubr.bf16.mxu0 0
        %3012 = vmatmul.mubr.bf16.gmra.mrb[0].mxu0 %v2221
        %v3013 = vpop.f32.mrb[0].mxu0
        %v3014 = vadd.f32 0.0, %v3013
        %v3015 = vpop.f32.mrb[0].mxu0
        %v3016 = vadd.f32 0.0, %v3015
        %v3017 = vpop.f32.mrb[0].mxu0
        %v3018 = vadd.f32 0.0, %v3017
        %v3019 = vpop.f32.mrb[0].mxu0
        %v3020 = vadd.f32 0.0, %v3019
        %3021 = vmatprep.mubr.bf16.mxu0 0
        %3022 = vmatmul.mubr.bf16.gmra.mrb[0].mxu0 %v2222
        %v3023 = vpop.f32.mrb[0].mxu0
        %v3024 = vadd.f32 0.0, %v3023
        %v3025 = vpop.f32.mrb[0].mxu0
        %v3026 = vadd.f32 0.0, %v3025
        %v3027 = vpop.f32.mrb[0].mxu0
        %v3028 = vadd.f32 0.0, %v3027
        %v3029 = vpop.f32.mrb[0].mxu0
        %v3030 = vadd.f32 0.0, %v3029
        %3031 = vmatprep.mubr.bf16.mxu0 0
        %3032 = vmatmul.mubr.bf16.gmra.mrb[0].mxu0 %v2223
        %v3033 = vpop.f32.mrb[0].mxu0
        %v3034 = vadd.f32 0.0, %v3033
        %v3035 = vpop.f32.mrb[0].mxu0
        %v3036 = vadd.f32 0.0, %v3035
        %v3037 = vpop.f32.mrb[0].mxu0
        %v3038 = vadd.f32 0.0, %v3037
        %v3039 = vpop.f32.mrb[0].mxu0
        %v3040 = vadd.f32 0.0, %v3039
        %3041 = vmatprep.mubr.bf16.mxu0 0
        %3042 = vmatmul.mubr.bf16.gmra.mrb[0].mxu0 %v2224
        %v3043 = vpop.f32.mrb[0].mxu0
        %v3044 = vadd.f32 0.0, %v3043
        %v3045 = vpop.f32.mrb[0].mxu0
        %v3046 = vadd.f32 0.0, %v3045
        %v3047 = vpop.f32.mrb[0].mxu0
        %v3048 = vadd.f32 0.0, %v3047
        %v3049 = vpop.f32.mrb[0].mxu0
        %v3050 = vadd.f32 0.0, %v3049
        %3051 = vmatprep.mubr.bf16.mxu0 0
        %3052 = vmatmul.mubr.bf16.gmra.mrb[0].mxu0 %v2225
        %v3053 = vpop.f32.mrb[0].mxu0
        %v3054 = vadd.f32 0.0, %v3053
        %v3055 = vpop.f32.mrb[0].mxu0
        %v3056 = vadd.f32 0.0, %v3055
        %v3057 = vpop.f32.mrb[0].mxu0
        %v3058 = vadd.f32 0.0, %v3057
        %v3059 = vpop.f32.mrb[0].mxu0
        %v3060 = vadd.f32 0.0, %v3059
        %3061 = vdwg.mxu0
        %v3062 = vld [vmem:[%s5] sm:$0xff]
        %v3064 = vlaneseq
        %v3065 = vshrl.u32 %v3064, 7
        %v3066 = vsub.s32 0, %v3065
        %v3067 = vrot.slane %v3062, %v3066
        %v3068 = vlaneseq
        %v3069 = vshrl.u32 %v3068, 7
        %v3070 = vsub.s32 1, %v3069
        %v3071 = vrot.slane %v3062, %v3070
        %v3072 = vlaneseq
        %v3073 = vshrl.u32 %v3072, 7
        %v3074 = vsub.s32 2, %v3073
        %v3075 = vrot.slane %v3062, %v3074
        %v3076 = vlaneseq
        %v3077 = vshrl.u32 %v3076, 7
        %v3078 = vsub.s32 3, %v3077
        %v3079 = vrot.slane %v3062, %v3078
        %v3080 = vlaneseq
        %v3081 = vshrl.u32 %v3080, 7
        %v3082 = vsub.s32 4, %v3081
        %v3083 = vrot.slane %v3062, %v3082
        %v3084 = vlaneseq
        %v3085 = vshrl.u32 %v3084, 7
        %v3086 = vsub.s32 5, %v3085
        %v3087 = vrot.slane %v3062, %v3086
        %v3088 = vlaneseq
        %v3089 = vshrl.u32 %v3088, 7
        %v3090 = vsub.s32 6, %v3089
        %v3091 = vrot.slane %v3062, %v3090
        %v3092 = vlaneseq
        %v3093 = vshrl.u32 %v3092, 7
        %v3094 = vsub.s32 7, %v3093
        %v3095 = vrot.slane %v3062, %v3094
        %v3104 = vadd.f32 %v2645, %v3067
        %v3105 = vadd.f32 %v2647, %v3071
        %v3106 = vadd.f32 %v2758, %v3075
        %v3107 = vadd.f32 %v2760, %v3079
        %v3108 = vadd.f32 %v2871, %v3083
        %v3109 = vadd.f32 %v2873, %v3087
        %v3110 = vadd.f32 %v2984, %v3091
        %v3111 = vadd.f32 %v2986, %v3095
        %v3112 = vadd.f32 %v2649, %v3067
        %v3113 = vadd.f32 %v2651, %v3071
        %v3114 = vadd.f32 %v2762, %v3075
        %v3115 = vadd.f32 %v2764, %v3079
        %v3116 = vadd.f32 %v2875, %v3083
        %v3117 = vadd.f32 %v2877, %v3087
        %v3118 = vadd.f32 %v2988, %v3091
        %v3119 = vadd.f32 %v2990, %v3095
        %v3120 = vadd.f32 %v2655, %v3067
        %v3121 = vadd.f32 %v2657, %v3071
        %v3122 = vadd.f32 %v2768, %v3075
        %v3123 = vadd.f32 %v2770, %v3079
        %v3124 = vadd.f32 %v2881, %v3083
        %v3125 = vadd.f32 %v2883, %v3087
        %v3126 = vadd.f32 %v2994, %v3091
        %v3127 = vadd.f32 %v2996, %v3095
        %v3128 = vadd.f32 %v2659, %v3067
        %v3129 = vadd.f32 %v2661, %v3071
        %v3130 = vadd.f32 %v2772, %v3075
        %v3131 = vadd.f32 %v2774, %v3079
        %v3132 = vadd.f32 %v2885, %v3083
        %v3133 = vadd.f32 %v2887, %v3087
        %v3134 = vadd.f32 %v2998, %v3091
        %v3135 = vadd.f32 %v3000, %v3095
        %v3136 = vadd.f32 %v2665, %v3067
        %v3137 = vadd.f32 %v2667, %v3071
        %v3138 = vadd.f32 %v2778, %v3075
        %v3139 = vadd.f32 %v2780, %v3079
        %v3140 = vadd.f32 %v2891, %v3083
        %v3141 = vadd.f32 %v2893, %v3087
        %v3142 = vadd.f32 %v3004, %v3091
        %v3143 = vadd.f32 %v3006, %v3095
        %v3144 = vadd.f32 %v2669, %v3067
        %v3145 = vadd.f32 %v2671, %v3071
        %v3146 = vadd.f32 %v2782, %v3075
        %v3147 = vadd.f32 %v2784, %v3079
        %v3148 = vadd.f32 %v2895, %v3083
        %v3149 = vadd.f32 %v2897, %v3087
        %v3150 = vadd.f32 %v3008, %v3091
        %v3151 = vadd.f32 %v3010, %v3095
        %v3152 = vadd.f32 %v2675, %v3067
        %v3153 = vadd.f32 %v2677, %v3071
        %v3154 = vadd.f32 %v2788, %v3075
        %v3155 = vadd.f32 %v2790, %v3079
        %v3156 = vadd.f32 %v2901, %v3083
        %v3157 = vadd.f32 %v2903, %v3087
        %v3158 = vadd.f32 %v3014, %v3091
        %v3159 = vadd.f32 %v3016, %v3095
        %v3160 = vadd.f32 %v2679, %v3067
        %v3161 = vadd.f32 %v2681, %v3071
        %v3162 = vadd.f32 %v2792, %v3075
        %v3163 = vadd.f32 %v2794, %v3079
        %v3164 = vadd.f32 %v2905, %v3083
        %v3165 = vadd.f32 %v2907, %v3087
        %v3166 = vadd.f32 %v3018, %v3091
        %v3167 = vadd.f32 %v3020, %v3095
        %v3168 = vadd.f32 %v2685, %v3067
        %v3169 = vadd.f32 %v2687, %v3071
        %v3170 = vadd.f32 %v2798, %v3075
        %v3171 = vadd.f32 %v2800, %v3079
        %v3172 = vadd.f32 %v2911, %v3083
        %v3173 = vadd.f32 %v2913, %v3087
        %v3174 = vadd.f32 %v3024, %v3091
        %v3175 = vadd.f32 %v3026, %v3095
        %v3176 = vadd.f32 %v2689, %v3067
        %v3177 = vadd.f32 %v2691, %v3071
        %v3178 = vadd.f32 %v2802, %v3075
        %v3179 = vadd.f32 %v2804, %v3079
        %v3180 = vadd.f32 %v2915, %v3083
        %v3181 = vadd.f32 %v2917, %v3087
        %v3182 = vadd.f32 %v3028, %v3091
        %v3183 = vadd.f32 %v3030, %v3095
        %v3184 = vadd.f32 %v2695, %v3067
        %v3185 = vadd.f32 %v2697, %v3071
        %v3186 = vadd.f32 %v2808, %v3075
        %v3187 = vadd.f32 %v2810, %v3079
        %v3188 = vadd.f32 %v2921, %v3083
        %v3189 = vadd.f32 %v2923, %v3087
        %v3190 = vadd.f32 %v3034, %v3091
        %v3191 = vadd.f32 %v3036, %v3095
        %v3192 = vadd.f32 %v2699, %v3067
        %v3193 = vadd.f32 %v2701, %v3071
        %v3194 = vadd.f32 %v2812, %v3075
        %v3195 = vadd.f32 %v2814, %v3079
        %v3196 = vadd.f32 %v2925, %v3083
        %v3197 = vadd.f32 %v2927, %v3087
        %v3198 = vadd.f32 %v3038, %v3091
        %v3199 = vadd.f32 %v3040, %v3095
        %v3200 = vadd.f32 %v2705, %v3067
        %v3201 = vadd.f32 %v2707, %v3071
        %v3202 = vadd.f32 %v2818, %v3075
        %v3203 = vadd.f32 %v2820, %v3079
        %v3204 = vadd.f32 %v2931, %v3083
        %v3205 = vadd.f32 %v2933, %v3087
        %v3206 = vadd.f32 %v3044, %v3091
        %v3207 = vadd.f32 %v3046, %v3095
        %v3208 = vadd.f32 %v2709, %v3067
        %v3209 = vadd.f32 %v2711, %v3071
        %v3210 = vadd.f32 %v2822, %v3075
        %v3211 = vadd.f32 %v2824, %v3079
        %v3212 = vadd.f32 %v2935, %v3083
        %v3213 = vadd.f32 %v2937, %v3087
        %v3214 = vadd.f32 %v3048, %v3091
        %v3215 = vadd.f32 %v3050, %v3095
        %v3216 = vadd.f32 %v2715, %v3067
        %v3217 = vadd.f32 %v2717, %v3071
        %v3218 = vadd.f32 %v2828, %v3075
        %v3219 = vadd.f32 %v2830, %v3079
        %v3220 = vadd.f32 %v2941, %v3083
        %v3221 = vadd.f32 %v2943, %v3087
        %v3222 = vadd.f32 %v3054, %v3091
        %v3223 = vadd.f32 %v3056, %v3095
        %v3224 = vadd.f32 %v2719, %v3067
        %v3225 = vadd.f32 %v2721, %v3071
        %v3226 = vadd.f32 %v2832, %v3075
        %v3227 = vadd.f32 %v2834, %v3079
        %v3228 = vadd.f32 %v2945, %v3083
        %v3229 = vadd.f32 %v2947, %v3087
        %v3230 = vadd.f32 %v3058, %v3091
        %v3231 = vadd.f32 %v3060, %v3095
        %v3232 = vmax.f32 %v3104, 0.0
        %v3233 = vmax.f32 %v3105, 0.0
        %v3234 = vmax.f32 %v3106, 0.0
        %v3235 = vmax.f32 %v3107, 0.0
        %v3236 = vmax.f32 %v3108, 0.0
        %v3237 = vmax.f32 %v3109, 0.0
        %v3238 = vmax.f32 %v3110, 0.0
        %v3239 = vmax.f32 %v3111, 0.0
        %v3240 = vmax.f32 %v3112, 0.0
        %v3241 = vmax.f32 %v3113, 0.0
        %v3242 = vmax.f32 %v3114, 0.0
        %v3243 = vmax.f32 %v3115, 0.0
        %v3244 = vmax.f32 %v3116, 0.0
        %v3245 = vmax.f32 %v3117, 0.0
        %v3246 = vmax.f32 %v3118, 0.0
        %v3247 = vmax.f32 %v3119, 0.0
        %v3248 = vmax.f32 %v3120, 0.0
        %v3249 = vmax.f32 %v3121, 0.0
        %v3250 = vmax.f32 %v3122, 0.0
        %v3251 = vmax.f32 %v3123, 0.0
        %v3252 = vmax.f32 %v3124, 0.0
        %v3253 = vmax.f32 %v3125, 0.0
        %v3254 = vmax.f32 %v3126, 0.0
        %v3255 = vmax.f32 %v3127, 0.0
        %v3256 = vmax.f32 %v3128, 0.0
        %v3257 = vmax.f32 %v3129, 0.0
        %v3258 = vmax.f32 %v3130, 0.0
        %v3259 = vmax.f32 %v3131, 0.0
        %v3260 = vmax.f32 %v3132, 0.0
        %v3261 = vmax.f32 %v3133, 0.0
        %v3262 = vmax.f32 %v3134, 0.0
        %v3263 = vmax.f32 %v3135, 0.0
        %v3264 = vmax.f32 %v3136, 0.0
        %v3265 = vmax.f32 %v3137, 0.0
        %v3266 = vmax.f32 %v3138, 0.0
        %v3267 = vmax.f32 %v3139, 0.0
        %v3268 = vmax.f32 %v3140, 0.0
        %v3269 = vmax.f32 %v3141, 0.0
        %v3270 = vmax.f32 %v3142, 0.0
        %v3271 = vmax.f32 %v3143, 0.0
        %v3272 = vmax.f32 %v3144, 0.0
        %v3273 = vmax.f32 %v3145, 0.0
        %v3274 = vmax.f32 %v3146, 0.0
        %v3275 = vmax.f32 %v3147, 0.0
        %v3276 = vmax.f32 %v3148, 0.0
        %v3277 = vmax.f32 %v3149, 0.0
        %v3278 = vmax.f32 %v3150, 0.0
        %v3279 = vmax.f32 %v3151, 0.0
        %v3280 = vmax.f32 %v3152, 0.0
        %v3281 = vmax.f32 %v3153, 0.0
        %v3282 = vmax.f32 %v3154, 0.0
        %v3283 = vmax.f32 %v3155, 0.0
        %v3284 = vmax.f32 %v3156, 0.0
        %v3285 = vmax.f32 %v3157, 0.0
        %v3286 = vmax.f32 %v3158, 0.0
        %v3287 = vmax.f32 %v3159, 0.0
        %v3288 = vmax.f32 %v3160, 0.0
        %v3289 = vmax.f32 %v3161, 0.0
        %v3290 = vmax.f32 %v3162, 0.0
        %v3291 = vmax.f32 %v3163, 0.0
        %v3292 = vmax.f32 %v3164, 0.0
        %v3293 = vmax.f32 %v3165, 0.0
        %v3294 = vmax.f32 %v3166, 0.0
        %v3295 = vmax.f32 %v3167, 0.0
        %v3296 = vmax.f32 %v3168, 0.0
        %v3297 = vmax.f32 %v3169, 0.0
        %v3298 = vmax.f32 %v3170, 0.0
        %v3299 = vmax.f32 %v3171, 0.0
        %v3300 = vmax.f32 %v3172, 0.0
        %v3301 = vmax.f32 %v3173, 0.0
        %v3302 = vmax.f32 %v3174, 0.0
        %v3303 = vmax.f32 %v3175, 0.0
        %v3304 = vmax.f32 %v3176, 0.0
        %v3305 = vmax.f32 %v3177, 0.0
        %v3306 = vmax.f32 %v3178, 0.0
        %v3307 = vmax.f32 %v3179, 0.0
        %v3308 = vmax.f32 %v3180, 0.0
        %v3309 = vmax.f32 %v3181, 0.0
        %v3310 = vmax.f32 %v3182, 0.0
        %v3311 = vmax.f32 %v3183, 0.0
        %v3312 = vmax.f32 %v3184, 0.0
        %v3313 = vmax.f32 %v3185, 0.0
        %v3314 = vmax.f32 %v3186, 0.0
        %v3315 = vmax.f32 %v3187, 0.0
        %v3316 = vmax.f32 %v3188, 0.0
        %v3317 = vmax.f32 %v3189, 0.0
        %v3318 = vmax.f32 %v3190, 0.0
        %v3319 = vmax.f32 %v3191, 0.0
        %v3320 = vmax.f32 %v3192, 0.0
        %v3321 = vmax.f32 %v3193, 0.0
        %v3322 = vmax.f32 %v3194, 0.0
        %v3323 = vmax.f32 %v3195, 0.0
        %v3324 = vmax.f32 %v3196, 0.0
        %v3325 = vmax.f32 %v3197, 0.0
        %v3326 = vmax.f32 %v3198, 0.0
        %v3327 = vmax.f32 %v3199, 0.0
        %v3328 = vmax.f32 %v3200, 0.0
        %v3329 = vmax.f32 %v3201, 0.0
        %v3330 = vmax.f32 %v3202, 0.0
        %v3331 = vmax.f32 %v3203, 0.0
        %v3332 = vmax.f32 %v3204, 0.0
        %v3333 = vmax.f32 %v3205, 0.0
        %v3334 = vmax.f32 %v3206, 0.0
        %v3335 = vmax.f32 %v3207, 0.0
        %v3336 = vmax.f32 %v3208, 0.0
        %v3337 = vmax.f32 %v3209, 0.0
        %v3338 = vmax.f32 %v3210, 0.0
        %v3339 = vmax.f32 %v3211, 0.0
        %v3340 = vmax.f32 %v3212, 0.0
        %v3341 = vmax.f32 %v3213, 0.0
        %v3342 = vmax.f32 %v3214, 0.0
        %v3343 = vmax.f32 %v3215, 0.0
        %v3344 = vmax.f32 %v3216, 0.0
        %v3345 = vmax.f32 %v3217, 0.0
        %v3346 = vmax.f32 %v3218, 0.0
        %v3347 = vmax.f32 %v3219, 0.0
        %v3348 = vmax.f32 %v3220, 0.0
        %v3349 = vmax.f32 %v3221, 0.0
        %v3350 = vmax.f32 %v3222, 0.0
        %v3351 = vmax.f32 %v3223, 0.0
        %v3352 = vmax.f32 %v3224, 0.0
        %v3353 = vmax.f32 %v3225, 0.0
        %v3354 = vmax.f32 %v3226, 0.0
        %v3355 = vmax.f32 %v3227, 0.0
        %v3356 = vmax.f32 %v3228, 0.0
        %v3357 = vmax.f32 %v3229, 0.0
        %v3358 = vmax.f32 %v3230, 0.0
        %v3359 = vmax.f32 %v3231, 0.0
        %v3360 = vld [vmem:[%s6] sm:$0xff]
        %v3361 = vld [vmem:[%s6 + $0x8] sm:$0xff]
        %v3362 = vld [vmem:[%s6 + $0x10] sm:$0xff]
        %v3363 = vld [vmem:[%s6 + $0x18] sm:$0xff]
        %v3364 = vld [vmem:[%s6 + $0x20] sm:$0xff]
        %v3365 = vld [vmem:[%s6 + $0x28] sm:$0xff]
        %v3366 = vld [vmem:[%s6 + $0x30] sm:$0xff]
        %v3367 = vld [vmem:[%s6 + $0x38] sm:$0xff]
        %v3368 = vld [vmem:[%s6 + $0x40] sm:$0xff]
        %v3369 = vld [vmem:[%s6 + $0x48] sm:$0xff]
        %v3370 = vld [vmem:[%s6 + $0x50] sm:$0xff]
        %v3371 = vld [vmem:[%s6 + $0x58] sm:$0xff]
        %v3372 = vld [vmem:[%s6 + $0x60] sm:$0xff]
        %v3373 = vld [vmem:[%s6 + $0x68] sm:$0xff]
        %v3374 = vld [vmem:[%s6 + $0x70] sm:$0xff]
        %v3375 = vld [vmem:[%s6 + $0x78] sm:$0xff]
        %v3376 = vmul.f32 %v3232, %v3360
        %v3377 = vmul.f32 %v3233, %v3361
        %v3378 = vmul.f32 %v3234, %v3362
        %v3379 = vmul.f32 %v3235, %v3363
        %v3380 = vmul.f32 %v3236, %v3364
        %v3381 = vmul.f32 %v3237, %v3365
        %v3382 = vmul.f32 %v3238, %v3366
        %v3383 = vmul.f32 %v3239, %v3367
        %v3384 = vmul.f32 %v3240, %v3368
        %v3385 = vmul.f32 %v3241, %v3369
        %v3386 = vmul.f32 %v3242, %v3370
        %v3387 = vmul.f32 %v3243, %v3371
        %v3388 = vmul.f32 %v3244, %v3372
        %v3389 = vmul.f32 %v3245, %v3373
        %v3390 = vmul.f32 %v3246, %v3374
        %v3391 = vmul.f32 %v3247, %v3375
        %v3392 = vmul.f32 %v3248, %v3360
        %v3393 = vmul.f32 %v3249, %v3361
        %v3394 = vmul.f32 %v3250, %v3362
        %v3395 = vmul.f32 %v3251, %v3363
        %v3396 = vmul.f32 %v3252, %v3364
        %v3397 = vmul.f32 %v3253, %v3365
        %v3398 = vmul.f32 %v3254, %v3366
        %v3399 = vmul.f32 %v3255, %v3367
        %v3400 = vmul.f32 %v3256, %v3368
        %v3401 = vmul.f32 %v3257, %v3369
        %v3402 = vmul.f32 %v3258, %v3370
        %v3403 = vmul.f32 %v3259, %v3371
        %v3404 = vmul.f32 %v3260, %v3372
        %v3405 = vmul.f32 %v3261, %v3373
        %v3406 = vmul.f32 %v3262, %v3374
        %v3407 = vmul.f32 %v3263, %v3375
        %v3408 = vmul.f32 %v3264, %v3360
        %v3409 = vmul.f32 %v3265, %v3361
        %v3410 = vmul.f32 %v3266, %v3362
        %v3411 = vmul.f32 %v3267, %v3363
        %v3412 = vmul.f32 %v3268, %v3364
        %v3413 = vmul.f32 %v3269, %v3365
        %v3414 = vmul.f32 %v3270, %v3366
        %v3415 = vmul.f32 %v3271, %v3367
        %v3416 = vmul.f32 %v3272, %v3368
        %v3417 = vmul.f32 %v3273, %v3369
        %v3418 = vmul.f32 %v3274, %v3370
        %v3419 = vmul.f32 %v3275, %v3371
        %v3420 = vmul.f32 %v3276, %v3372
        %v3421 = vmul.f32 %v3277, %v3373
        %v3422 = vmul.f32 %v3278, %v3374
        %v3423 = vmul.f32 %v3279, %v3375
        %v3424 = vmul.f32 %v3280, %v3360
        %v3425 = vmul.f32 %v3281, %v3361
        %v3426 = vmul.f32 %v3282, %v3362
        %v3427 = vmul.f32 %v3283, %v3363
        %v3428 = vmul.f32 %v3284, %v3364
        %v3429 = vmul.f32 %v3285, %v3365
        %v3430 = vmul.f32 %v3286, %v3366
        %v3431 = vmul.f32 %v3287, %v3367
        %v3432 = vmul.f32 %v3288, %v3368
        %v3433 = vmul.f32 %v3289, %v3369
        %v3434 = vmul.f32 %v3290, %v3370
        %v3435 = vmul.f32 %v3291, %v3371
        %v3436 = vmul.f32 %v3292, %v3372
        %v3437 = vmul.f32 %v3293, %v3373
        %v3438 = vmul.f32 %v3294, %v3374
        %v3439 = vmul.f32 %v3295, %v3375
        %v3440 = vmul.f32 %v3296, %v3360
        %v3441 = vmul.f32 %v3297, %v3361
        %v3442 = vmul.f32 %v3298, %v3362
        %v3443 = vmul.f32 %v3299, %v3363
        %v3444 = vmul.f32 %v3300, %v3364
        %v3445 = vmul.f32 %v3301, %v3365
        %v3446 = vmul.f32 %v3302, %v3366
        %v3447 = vmul.f32 %v3303, %v3367
        %v3448 = vmul.f32 %v3304, %v3368
        %v3449 = vmul.f32 %v3305, %v3369
        %v3450 = vmul.f32 %v3306, %v3370
        %v3451 = vmul.f32 %v3307, %v3371
        %v3452 = vmul.f32 %v3308, %v3372
        %v3453 = vmul.f32 %v3309, %v3373
        %v3454 = vmul.f32 %v3310, %v3374
        %v3455 = vmul.f32 %v3311, %v3375
        %v3456 = vmul.f32 %v3312, %v3360
        %v3457 = vmul.f32 %v3313, %v3361
        %v3458 = vmul.f32 %v3314, %v3362
        %v3459 = vmul.f32 %v3315, %v3363
        %v3460 = vmul.f32 %v3316, %v3364
        %v3461 = vmul.f32 %v3317, %v3365
        %v3462 = vmul.f32 %v3318, %v3366
        %v3463 = vmul.f32 %v3319, %v3367
        %v3464 = vmul.f32 %v3320, %v3368
        %v3465 = vmul.f32 %v3321, %v3369
        %v3466 = vmul.f32 %v3322, %v3370
        %v3467 = vmul.f32 %v3323, %v3371
        %v3468 = vmul.f32 %v3324, %v3372
        %v3469 = vmul.f32 %v3325, %v3373
        %v3470 = vmul.f32 %v3326, %v3374
        %v3471 = vmul.f32 %v3327, %v3375
        %v3472 = vmul.f32 %v3328, %v3360
        %v3473 = vmul.f32 %v3329, %v3361
        %v3474 = vmul.f32 %v3330, %v3362
        %v3475 = vmul.f32 %v3331, %v3363
        %v3476 = vmul.f32 %v3332, %v3364
        %v3477 = vmul.f32 %v3333, %v3365
        %v3478 = vmul.f32 %v3334, %v3366
        %v3479 = vmul.f32 %v3335, %v3367
        %v3480 = vmul.f32 %v3336, %v3368
        %v3481 = vmul.f32 %v3337, %v3369
        %v3482 = vmul.f32 %v3338, %v3370
        %v3483 = vmul.f32 %v3339, %v3371
        %v3484 = vmul.f32 %v3340, %v3372
        %v3485 = vmul.f32 %v3341, %v3373
        %v3486 = vmul.f32 %v3342, %v3374
        %v3487 = vmul.f32 %v3343, %v3375
        %v3488 = vmul.f32 %v3344, %v3360
        %v3489 = vmul.f32 %v3345, %v3361
        %v3490 = vmul.f32 %v3346, %v3362
        %v3491 = vmul.f32 %v3347, %v3363
        %v3492 = vmul.f32 %v3348, %v3364
        %v3493 = vmul.f32 %v3349, %v3365
        %v3494 = vmul.f32 %v3350, %v3366
        %v3495 = vmul.f32 %v3351, %v3367
        %v3496 = vmul.f32 %v3352, %v3368
        %v3497 = vmul.f32 %v3353, %v3369
        %v3498 = vmul.f32 %v3354, %v3370
        %v3499 = vmul.f32 %v3355, %v3371
        %v3500 = vmul.f32 %v3356, %v3372
        %v3501 = vmul.f32 %v3357, %v3373
        %v3502 = vmul.f32 %v3358, %v3374
        %v3503 = vmul.f32 %v3359, %v3375
        %v3504 = vld [vmem:[%s7] sm:$0xff]
        %v3505 = vld [vmem:[%s7 + $0x8] sm:$0xff]
        %v3506 = vld [vmem:[%s7 + $0x10] sm:$0xff]
        %v3507 = vld [vmem:[%s7 + $0x18] sm:$0xff]
        %v3508 = vld [vmem:[%s7 + $0x20] sm:$0xff]
        %v3509 = vld [vmem:[%s7 + $0x28] sm:$0xff]
        %v3510 = vld [vmem:[%s7 + $0x30] sm:$0xff]
        %v3511 = vld [vmem:[%s7 + $0x38] sm:$0xff]
        %v3512 = vld [vmem:[%s7 + $0x40] sm:$0xff]
        %v3513 = vld [vmem:[%s7 + $0x48] sm:$0xff]
        %v3514 = vld [vmem:[%s7 + $0x50] sm:$0xff]
        %v3515 = vld [vmem:[%s7 + $0x58] sm:$0xff]
        %v3516 = vld [vmem:[%s7 + $0x60] sm:$0xff]
        %v3517 = vld [vmem:[%s7 + $0x68] sm:$0xff]
        %v3518 = vld [vmem:[%s7 + $0x70] sm:$0xff]
        %v3519 = vld [vmem:[%s7 + $0x78] sm:$0xff]
        %v3520 = vadd.f32 %v3376, %v3504
        %v3521 = vadd.f32 %v3377, %v3505
        %v3522 = vadd.f32 %v3378, %v3506
        %v3523 = vadd.f32 %v3379, %v3507
        %v3524 = vadd.f32 %v3380, %v3508
        %v3525 = vadd.f32 %v3381, %v3509
        %v3526 = vadd.f32 %v3382, %v3510
        %v3527 = vadd.f32 %v3383, %v3511
        %v3528 = vadd.f32 %v3384, %v3512
        %v3529 = vadd.f32 %v3385, %v3513
        %v3530 = vadd.f32 %v3386, %v3514
        %v3531 = vadd.f32 %v3387, %v3515
        %v3532 = vadd.f32 %v3388, %v3516
        %v3533 = vadd.f32 %v3389, %v3517
        %v3534 = vadd.f32 %v3390, %v3518
        %v3535 = vadd.f32 %v3391, %v3519
        %v3536 = vadd.f32 %v3392, %v3504
        %v3537 = vadd.f32 %v3393, %v3505
        %v3538 = vadd.f32 %v3394, %v3506
        %v3539 = vadd.f32 %v3395, %v3507
        %v3540 = vadd.f32 %v3396, %v3508
        %v3541 = vadd.f32 %v3397, %v3509
        %v3542 = vadd.f32 %v3398, %v3510
        %v3543 = vadd.f32 %v3399, %v3511
        %v3544 = vadd.f32 %v3400, %v3512
        %v3545 = vadd.f32 %v3401, %v3513
        %v3546 = vadd.f32 %v3402, %v3514
        %v3547 = vadd.f32 %v3403, %v3515
        %v3548 = vadd.f32 %v3404, %v3516
        %v3549 = vadd.f32 %v3405, %v3517
        %v3550 = vadd.f32 %v3406, %v3518
        %v3551 = vadd.f32 %v3407, %v3519
        %v3552 = vadd.f32 %v3408, %v3504
        %v3553 = vadd.f32 %v3409, %v3505
        %v3554 = vadd.f32 %v3410, %v3506
        %v3555 = vadd.f32 %v3411, %v3507
        %v3556 = vadd.f32 %v3412, %v3508
        %v3557 = vadd.f32 %v3413, %v3509
        %v3558 = vadd.f32 %v3414, %v3510
        %v3559 = vadd.f32 %v3415, %v3511
        %v3560 = vadd.f32 %v3416, %v3512
        %v3561 = vadd.f32 %v3417, %v3513
        %v3562 = vadd.f32 %v3418, %v3514
        %v3563 = vadd.f32 %v3419, %v3515
        %v3564 = vadd.f32 %v3420, %v3516
        %v3565 = vadd.f32 %v3421, %v3517
        %v3566 = vadd.f32 %v3422, %v3518
        %v3567 = vadd.f32 %v3423, %v3519
        %v3568 = vadd.f32 %v3424, %v3504
        %v3569 = vadd.f32 %v3425, %v3505
        %v3570 = vadd.f32 %v3426, %v3506
        %v3571 = vadd.f32 %v3427, %v3507
        %v3572 = vadd.f32 %v3428, %v3508
        %v3573 = vadd.f32 %v3429, %v3509
        %v3574 = vadd.f32 %v3430, %v3510
        %v3575 = vadd.f32 %v3431, %v3511
        %v3576 = vadd.f32 %v3432, %v3512
        %v3577 = vadd.f32 %v3433, %v3513
        %v3578 = vadd.f32 %v3434, %v3514
        %v3579 = vadd.f32 %v3435, %v3515
        %v3580 = vadd.f32 %v3436, %v3516
        %v3581 = vadd.f32 %v3437, %v3517
        %v3582 = vadd.f32 %v3438, %v3518
        %v3583 = vadd.f32 %v3439, %v3519
        %v3584 = vadd.f32 %v3440, %v3504
        %v3585 = vadd.f32 %v3441, %v3505
        %v3586 = vadd.f32 %v3442, %v3506
        %v3587 = vadd.f32 %v3443, %v3507
        %v3588 = vadd.f32 %v3444, %v3508
        %v3589 = vadd.f32 %v3445, %v3509
        %v3590 = vadd.f32 %v3446, %v3510
        %v3591 = vadd.f32 %v3447, %v3511
        %v3592 = vadd.f32 %v3448, %v3512
        %v3593 = vadd.f32 %v3449, %v3513
        %v3594 = vadd.f32 %v3450, %v3514
        %v3595 = vadd.f32 %v3451, %v3515
        %v3596 = vadd.f32 %v3452, %v3516
        %v3597 = vadd.f32 %v3453, %v3517
        %v3598 = vadd.f32 %v3454, %v3518
        %v3599 = vadd.f32 %v3455, %v3519
        %v3600 = vadd.f32 %v3456, %v3504
        %v3601 = vadd.f32 %v3457, %v3505
        %v3602 = vadd.f32 %v3458, %v3506
        %v3603 = vadd.f32 %v3459, %v3507
        %v3604 = vadd.f32 %v3460, %v3508
        %v3605 = vadd.f32 %v3461, %v3509
        %v3606 = vadd.f32 %v3462, %v3510
        %v3607 = vadd.f32 %v3463, %v3511
        %v3608 = vadd.f32 %v3464, %v3512
        %v3609 = vadd.f32 %v3465, %v3513
        %v3610 = vadd.f32 %v3466, %v3514
        %v3611 = vadd.f32 %v3467, %v3515
        %v3612 = vadd.f32 %v3468, %v3516
        %v3613 = vadd.f32 %v3469, %v3517
        %v3614 = vadd.f32 %v3470, %v3518
        %v3615 = vadd.f32 %v3471, %v3519
        %v3616 = vadd.f32 %v3472, %v3504
        %v3617 = vadd.f32 %v3473, %v3505
        %v3618 = vadd.f32 %v3474, %v3506
        %v3619 = vadd.f32 %v3475, %v3507
        %v3620 = vadd.f32 %v3476, %v3508
        %v3621 = vadd.f32 %v3477, %v3509
        %v3622 = vadd.f32 %v3478, %v3510
        %v3623 = vadd.f32 %v3479, %v3511
        %v3624 = vadd.f32 %v3480, %v3512
        %v3625 = vadd.f32 %v3481, %v3513
        %v3626 = vadd.f32 %v3482, %v3514
        %v3627 = vadd.f32 %v3483, %v3515
        %v3628 = vadd.f32 %v3484, %v3516
        %v3629 = vadd.f32 %v3485, %v3517
        %v3630 = vadd.f32 %v3486, %v3518
        %v3631 = vadd.f32 %v3487, %v3519
        %v3632 = vadd.f32 %v3488, %v3504
        %v3633 = vadd.f32 %v3489, %v3505
        %v3634 = vadd.f32 %v3490, %v3506
        %v3635 = vadd.f32 %v3491, %v3507
        %v3636 = vadd.f32 %v3492, %v3508
        %v3637 = vadd.f32 %v3493, %v3509
        %v3638 = vadd.f32 %v3494, %v3510
        %v3639 = vadd.f32 %v3495, %v3511
        %v3640 = vadd.f32 %v3496, %v3512
        %v3641 = vadd.f32 %v3497, %v3513
        %v3642 = vadd.f32 %v3498, %v3514
        %v3643 = vadd.f32 %v3499, %v3515
        %v3644 = vadd.f32 %v3500, %v3516
        %v3645 = vadd.f32 %v3501, %v3517
        %v3646 = vadd.f32 %v3502, %v3518
        %v3647 = vadd.f32 %v3503, %v3519
        %v3648 = vpack.c.bf16 %v3528, %v3520
        %v3649 = vpack.c.bf16 %v3529, %v3521
        %v3650 = vpack.c.bf16 %v3530, %v3522
        %v3651 = vpack.c.bf16 %v3531, %v3523
        %v3652 = vpack.c.bf16 %v3532, %v3524
        %v3653 = vpack.c.bf16 %v3533, %v3525
        %v3654 = vpack.c.bf16 %v3534, %v3526
        %v3655 = vpack.c.bf16 %v3535, %v3527
        %v3656 = vpack.c.bf16 %v3544, %v3536
        %v3657 = vpack.c.bf16 %v3545, %v3537
        %v3658 = vpack.c.bf16 %v3546, %v3538
        %v3659 = vpack.c.bf16 %v3547, %v3539
        %v3660 = vpack.c.bf16 %v3548, %v3540
        %v3661 = vpack.c.bf16 %v3549, %v3541
        %v3662 = vpack.c.bf16 %v3550, %v3542
        %v3663 = vpack.c.bf16 %v3551, %v3543
        %v3664 = vpack.c.bf16 %v3560, %v3552
        %v3665 = vpack.c.bf16 %v3561, %v3553
        %v3666 = vpack.c.bf16 %v3562, %v3554
        %v3667 = vpack.c.bf16 %v3563, %v3555
        %v3668 = vpack.c.bf16 %v3564, %v3556
        %v3669 = vpack.c.bf16 %v3565, %v3557
        %v3670 = vpack.c.bf16 %v3566, %v3558
        %v3671 = vpack.c.bf16 %v3567, %v3559
        %v3672 = vpack.c.bf16 %v3576, %v3568
        %v3673 = vpack.c.bf16 %v3577, %v3569
        %v3674 = vpack.c.bf16 %v3578, %v3570
        %v3675 = vpack.c.bf16 %v3579, %v3571
        %v3676 = vpack.c.bf16 %v3580, %v3572
        %v3677 = vpack.c.bf16 %v3581, %v3573
        %v3678 = vpack.c.bf16 %v3582, %v3574
        %v3679 = vpack.c.bf16 %v3583, %v3575
        %v3680 = vpack.c.bf16 %v3592, %v3584
        %v3681 = vpack.c.bf16 %v3593, %v3585
        %v3682 = vpack.c.bf16 %v3594, %v3586
        %v3683 = vpack.c.bf16 %v3595, %v3587
        %v3684 = vpack.c.bf16 %v3596, %v3588
        %v3685 = vpack.c.bf16 %v3597, %v3589
        %v3686 = vpack.c.bf16 %v3598, %v3590
        %v3687 = vpack.c.bf16 %v3599, %v3591
        %v3688 = vpack.c.bf16 %v3608, %v3600
        %v3689 = vpack.c.bf16 %v3609, %v3601
        %v3690 = vpack.c.bf16 %v3610, %v3602
        %v3691 = vpack.c.bf16 %v3611, %v3603
        %v3692 = vpack.c.bf16 %v3612, %v3604
        %v3693 = vpack.c.bf16 %v3613, %v3605
        %v3694 = vpack.c.bf16 %v3614, %v3606
        %v3695 = vpack.c.bf16 %v3615, %v3607
        %v3696 = vpack.c.bf16 %v3624, %v3616
        %v3697 = vpack.c.bf16 %v3625, %v3617
        %v3698 = vpack.c.bf16 %v3626, %v3618
        %v3699 = vpack.c.bf16 %v3627, %v3619
        %v3700 = vpack.c.bf16 %v3628, %v3620
        %v3701 = vpack.c.bf16 %v3629, %v3621
        %v3702 = vpack.c.bf16 %v3630, %v3622
        %v3703 = vpack.c.bf16 %v3631, %v3623
        %v3704 = vpack.c.bf16 %v3640, %v3632
        %v3705 = vpack.c.bf16 %v3641, %v3633
        %v3706 = vpack.c.bf16 %v3642, %v3634
        %v3707 = vpack.c.bf16 %v3643, %v3635
        %v3708 = vpack.c.bf16 %v3644, %v3636
        %v3709 = vpack.c.bf16 %v3645, %v3637
        %v3710 = vpack.c.bf16 %v3646, %v3638
        %v3711 = vpack.c.bf16 %v3647, %v3639
        %v3712 = vld [vmem:[%s8] sm:$0xf]
        %v3713 = vld [vmem:[%s8 + $0x4] sm:$0xf]
        %v3714 = vld [vmem:[%s8 + $0x8] sm:$0xf]
        %v3715 = vld [vmem:[%s8 + $0xc] sm:$0xf]
        %v3716 = vld [vmem:[%s8 + $0x10] sm:$0xf]
        %v3717 = vld [vmem:[%s8 + $0x14] sm:$0xf]
        %v3718 = vld [vmem:[%s8 + $0x18] sm:$0xf]
        %v3719 = vld [vmem:[%s8 + $0x1c] sm:$0xf]
        %v3720 = vld [vmem:[%s8 + $0x20] sm:$0xf]
        %v3721 = vld [vmem:[%s8 + $0x24] sm:$0xf]
        %v3722 = vld [vmem:[%s8 + $0x28] sm:$0xf]
        %v3723 = vld [vmem:[%s8 + $0x2c] sm:$0xf]
        %v3724 = vld [vmem:[%s8 + $0x30] sm:$0xf]
        %v3725 = vld [vmem:[%s8 + $0x34] sm:$0xf]
        %v3726 = vld [vmem:[%s8 + $0x38] sm:$0xf]
        %v3727 = vld [vmem:[%s8 + $0x3c] sm:$0xf]
        %v3728 = vld [vmem:[%s8 + $0x40] sm:$0xf]
        %v3729 = vld [vmem:[%s8 + $0x44] sm:$0xf]
        %v3730 = vld [vmem:[%s8 + $0x48] sm:$0xf]
        %v3731 = vld [vmem:[%s8 + $0x4c] sm:$0xf]
        %v3732 = vld [vmem:[%s8 + $0x50] sm:$0xf]
        %v3733 = vld [vmem:[%s8 + $0x54] sm:$0xf]
        %v3734 = vld [vmem:[%s8 + $0x58] sm:$0xf]
        %v3735 = vld [vmem:[%s8 + $0x5c] sm:$0xf]
        %v3736 = vld [vmem:[%s8 + $0x60] sm:$0xf]
        %v3737 = vld [vmem:[%s8 + $0x64] sm:$0xf]
        %v3738 = vld [vmem:[%s8 + $0x68] sm:$0xf]
        %v3739 = vld [vmem:[%s8 + $0x6c] sm:$0xf]
        %v3740 = vld [vmem:[%s8 + $0x70] sm:$0xf]
        %v3741 = vld [vmem:[%s8 + $0x74] sm:$0xf]
        %v3742 = vld [vmem:[%s8 + $0x78] sm:$0xf]
        %v3743 = vld [vmem:[%s8 + $0x7c] sm:$0xf]
        %v3744 = vld [vmem:[%s8 + $0x80] sm:$0xf]
        %v3745 = vld [vmem:[%s8 + $0x84] sm:$0xf]
        %v3746 = vld [vmem:[%s8 + $0x88] sm:$0xf]
        %v3747 = vld [vmem:[%s8 + $0x8c] sm:$0xf]
        %v3748 = vld [vmem:[%s8 + $0x90] sm:$0xf]
        %v3749 = vld [vmem:[%s8 + $0x94] sm:$0xf]
        %v3750 = vld [vmem:[%s8 + $0x98] sm:$0xf]
        %v3751 = vld [vmem:[%s8 + $0x9c] sm:$0xf]
        %v3752 = vld [vmem:[%s8 + $0xa0] sm:$0xf]
        %v3753 = vld [vmem:[%s8 + $0xa4] sm:$0xf]
        %v3754 = vld [vmem:[%s8 + $0xa8] sm:$0xf]
        %v3755 = vld [vmem:[%s8 + $0xac] sm:$0xf]
        %v3756 = vld [vmem:[%s8 + $0xb0] sm:$0xf]
        %v3757 = vld [vmem:[%s8 + $0xb4] sm:$0xf]
        %v3758 = vld [vmem:[%s8 + $0xb8] sm:$0xf]
        %v3759 = vld [vmem:[%s8 + $0xbc] sm:$0xf]
        %v3760 = vld [vmem:[%s8 + $0xc0] sm:$0xf]
        %v3761 = vld [vmem:[%s8 + $0xc4] sm:$0xf]
        %v3762 = vld [vmem:[%s8 + $0xc8] sm:$0xf]
        %v3763 = vld [vmem:[%s8 + $0xcc] sm:$0xf]
        %v3764 = vld [vmem:[%s8 + $0xd0] sm:$0xf]
        %v3765 = vld [vmem:[%s8 + $0xd4] sm:$0xf]
        %v3766 = vld [vmem:[%s8 + $0xd8] sm:$0xf]
        %v3767 = vld [vmem:[%s8 + $0xdc] sm:$0xf]
        %v3768 = vld [vmem:[%s8 + $0xe0] sm:$0xf]
        %v3769 = vld [vmem:[%s8 + $0xe4] sm:$0xf]
        %v3770 = vld [vmem:[%s8 + $0xe8] sm:$0xf]
        %v3771 = vld [vmem:[%s8 + $0xec] sm:$0xf]
        %v3772 = vld [vmem:[%s8 + $0xf0] sm:$0xf]
        %v3773 = vld [vmem:[%s8 + $0xf4] sm:$0xf]
        %v3774 = vld [vmem:[%s8 + $0xf8] sm:$0xf]
        %v3775 = vld [vmem:[%s8 + $0xfc] sm:$0xf]
        %v3776 = vld [vmem:[%s8 + $0x100] sm:$0xf]
        %v3777 = vld [vmem:[%s8 + $0x104] sm:$0xf]
        %v3778 = vld [vmem:[%s8 + $0x108] sm:$0xf]
        %v3779 = vld [vmem:[%s8 + $0x10c] sm:$0xf]
        %v3780 = vld [vmem:[%s8 + $0x110] sm:$0xf]
        %v3781 = vld [vmem:[%s8 + $0x114] sm:$0xf]
        %v3782 = vld [vmem:[%s8 + $0x118] sm:$0xf]
        %v3783 = vld [vmem:[%s8 + $0x11c] sm:$0xf]
        %v3784 = vld [vmem:[%s8 + $0x120] sm:$0xf]
        %v3785 = vld [vmem:[%s8 + $0x124] sm:$0xf]
        %v3786 = vld [vmem:[%s8 + $0x128] sm:$0xf]
        %v3787 = vld [vmem:[%s8 + $0x12c] sm:$0xf]
        %v3788 = vld [vmem:[%s8 + $0x130] sm:$0xf]
        %v3789 = vld [vmem:[%s8 + $0x134] sm:$0xf]
        %v3790 = vld [vmem:[%s8 + $0x138] sm:$0xf]
        %v3791 = vld [vmem:[%s8 + $0x13c] sm:$0xf]
        %v3792 = vld [vmem:[%s8 + $0x140] sm:$0xf]
        %v3793 = vld [vmem:[%s8 + $0x144] sm:$0xf]
        %v3794 = vld [vmem:[%s8 + $0x148] sm:$0xf]
        %v3795 = vld [vmem:[%s8 + $0x14c] sm:$0xf]
        %v3796 = vld [vmem:[%s8 + $0x150] sm:$0xf]
        %v3797 = vld [vmem:[%s8 + $0x154] sm:$0xf]
        %v3798 = vld [vmem:[%s8 + $0x158] sm:$0xf]
        %v3799 = vld [vmem:[%s8 + $0x15c] sm:$0xf]
        %v3800 = vld [vmem:[%s8 + $0x160] sm:$0xf]
        %v3801 = vld [vmem:[%s8 + $0x164] sm:$0xf]
        %v3802 = vld [vmem:[%s8 + $0x168] sm:$0xf]
        %v3803 = vld [vmem:[%s8 + $0x16c] sm:$0xf]
        %v3804 = vld [vmem:[%s8 + $0x170] sm:$0xf]
        %v3805 = vld [vmem:[%s8 + $0x174] sm:$0xf]
        %v3806 = vld [vmem:[%s8 + $0x178] sm:$0xf]
        %v3807 = vld [vmem:[%s8 + $0x17c] sm:$0xf]
        %v3808 = vld [vmem:[%s8 + $0x180] sm:$0xf]
        %v3809 = vld [vmem:[%s8 + $0x184] sm:$0xf]
        %v3810 = vld [vmem:[%s8 + $0x188] sm:$0xf]
        %v3811 = vld [vmem:[%s8 + $0x18c] sm:$0xf]
        %v3812 = vld [vmem:[%s8 + $0x190] sm:$0xf]
        %v3813 = vld [vmem:[%s8 + $0x194] sm:$0xf]
        %v3814 = vld [vmem:[%s8 + $0x198] sm:$0xf]
        %v3815 = vld [vmem:[%s8 + $0x19c] sm:$0xf]
        %v3816 = vld [vmem:[%s8 + $0x1a0] sm:$0xf]
        %v3817 = vld [vmem:[%s8 + $0x1a4] sm:$0xf]
        %v3818 = vld [vmem:[%s8 + $0x1a8] sm:$0xf]
        %v3819 = vld [vmem:[%s8 + $0x1ac] sm:$0xf]
        %v3820 = vld [vmem:[%s8 + $0x1b0] sm:$0xf]
        %v3821 = vld [vmem:[%s8 + $0x1b4] sm:$0xf]
        %v3822 = vld [vmem:[%s8 + $0x1b8] sm:$0xf]
        %v3823 = vld [vmem:[%s8 + $0x1bc] sm:$0xf]
        %v3824 = vld [vmem:[%s8 + $0x1c0] sm:$0xf]
        %v3825 = vld [vmem:[%s8 + $0x1c4] sm:$0xf]
        %v3826 = vld [vmem:[%s8 + $0x1c8] sm:$0xf]
        %v3827 = vld [vmem:[%s8 + $0x1cc] sm:$0xf]
        %v3828 = vld [vmem:[%s8 + $0x1d0] sm:$0xf]
        %v3829 = vld [vmem:[%s8 + $0x1d4] sm:$0xf]
        %v3830 = vld [vmem:[%s8 + $0x1d8] sm:$0xf]
        %v3831 = vld [vmem:[%s8 + $0x1dc] sm:$0xf]
        %v3832 = vld [vmem:[%s8 + $0x1e0] sm:$0xf]
        %v3833 = vld [vmem:[%s8 + $0x1e4] sm:$0xf]
        %v3834 = vld [vmem:[%s8 + $0x1e8] sm:$0xf]
        %v3835 = vld [vmem:[%s8 + $0x1ec] sm:$0xf]
        %v3836 = vld [vmem:[%s8 + $0x1f0] sm:$0xf]
        %v3837 = vld [vmem:[%s8 + $0x1f4] sm:$0xf]
        %v3838 = vld [vmem:[%s8 + $0x1f8] sm:$0xf]
        %v3839 = vld [vmem:[%s8 + $0x1fc] sm:$0xf]
        %v3968 = vunpack.c.l.b16 %v3712
        %v3969 = vunpack.c.l.b16 %v3713
        %v3970 = vunpack.c.l.b16 %v3714
        %v3971 = vunpack.c.l.b16 %v3715
        %v3972 = vunpack.c.l.b16 %v3716
        %v3973 = vunpack.c.l.b16 %v3717
        %v3974 = vunpack.c.l.b16 %v3718
        %v3975 = vunpack.c.l.b16 %v3719
        %v3976 = vunpack.c.l.b16 %v3720
        %v3977 = vunpack.c.l.b16 %v3721
        %v3978 = vunpack.c.l.b16 %v3722
        %v3979 = vunpack.c.l.b16 %v3723
        %v3980 = vunpack.c.l.b16 %v3724
        %v3981 = vunpack.c.l.b16 %v3725
        %v3982 = vunpack.c.l.b16 %v3726
        %v3983 = vunpack.c.l.b16 %v3727
        %v3984 = vunpack.c.l.b16 %v3728
        %v3985 = vunpack.c.l.b16 %v3729
        %v3986 = vunpack.c.l.b16 %v3730
        %v3987 = vunpack.c.l.b16 %v3731
        %v3988 = vunpack.c.l.b16 %v3732
        %v3989 = vunpack.c.l.b16 %v3733
        %v3990 = vunpack.c.l.b16 %v3734
        %v3991 = vunpack.c.l.b16 %v3735
        %v3992 = vunpack.c.l.b16 %v3736
        %v3993 = vunpack.c.l.b16 %v3737
        %v3994 = vunpack.c.l.b16 %v3738
        %v3995 = vunpack.c.l.b16 %v3739
        %v3996 = vunpack.c.l.b16 %v3740
        %v3997 = vunpack.c.l.b16 %v3741
        %v3998 = vunpack.c.l.b16 %v3742
        %v3999 = vunpack.c.l.b16 %v3743
        %v4000 = vunpack.c.l.b16 %v3744
        %v4001 = vunpack.c.l.b16 %v3745
        %v4002 = vunpack.c.l.b16 %v3746
        %v4003 = vunpack.c.l.b16 %v3747
        %v4004 = vunpack.c.l.b16 %v3748
        %v4005 = vunpack.c.l.b16 %v3749
        %v4006 = vunpack.c.l.b16 %v3750
        %v4007 = vunpack.c.l.b16 %v3751
        %v4008 = vunpack.c.l.b16 %v3752
        %v4009 = vunpack.c.l.b16 %v3753
        %v4010 = vunpack.c.l.b16 %v3754
        %v4011 = vunpack.c.l.b16 %v3755
        %v4012 = vunpack.c.l.b16 %v3756
        %v4013 = vunpack.c.l.b16 %v3757
        %v4014 = vunpack.c.l.b16 %v3758
        %v4015 = vunpack.c.l.b16 %v3759
        %v4016 = vunpack.c.l.b16 %v3760
        %v4017 = vunpack.c.l.b16 %v3761
        %v4018 = vunpack.c.l.b16 %v3762
        %v4019 = vunpack.c.l.b16 %v3763
        %v4020 = vunpack.c.l.b16 %v3764
        %v4021 = vunpack.c.l.b16 %v3765
        %v4022 = vunpack.c.l.b16 %v3766
        %v4023 = vunpack.c.l.b16 %v3767
        %v4024 = vunpack.c.l.b16 %v3768
        %v4025 = vunpack.c.l.b16 %v3769
        %v4026 = vunpack.c.l.b16 %v3770
        %v4027 = vunpack.c.l.b16 %v3771
        %v4028 = vunpack.c.l.b16 %v3772
        %v4029 = vunpack.c.l.b16 %v3773
        %v4030 = vunpack.c.l.b16 %v3774
        %v4031 = vunpack.c.l.b16 %v3775
        %v4032 = vunpack.c.l.b16 %v3776
        %v4033 = vunpack.c.l.b16 %v3777
        %v4034 = vunpack.c.l.b16 %v3778
        %v4035 = vunpack.c.l.b16 %v3779
        %v4036 = vunpack.c.l.b16 %v3780
        %v4037 = vunpack.c.l.b16 %v3781
        %v4038 = vunpack.c.l.b16 %v3782
        %v4039 = vunpack.c.l.b16 %v3783
        %v4040 = vunpack.c.l.b16 %v3784
        %v4041 = vunpack.c.l.b16 %v3785
        %v4042 = vunpack.c.l.b16 %v3786
        %v4043 = vunpack.c.l.b16 %v3787
        %v4044 = vunpack.c.l.b16 %v3788
        %v4045 = vunpack.c.l.b16 %v3789
        %v4046 = vunpack.c.l.b16 %v3790
        %v4047 = vunpack.c.l.b16 %v3791
        %v4048 = vunpack.c.l.b16 %v3792
        %v4049 = vunpack.c.l.b16 %v3793
        %v4050 = vunpack.c.l.b16 %v3794
        %v4051 = vunpack.c.l.b16 %v3795
        %v4052 = vunpack.c.l.b16 %v3796
        %v4053 = vunpack.c.l.b16 %v3797
        %v4054 = vunpack.c.l.b16 %v3798
        %v4055 = vunpack.c.l.b16 %v3799
        %v4056 = vunpack.c.l.b16 %v3800
        %v4057 = vunpack.c.l.b16 %v3801
        %v4058 = vunpack.c.l.b16 %v3802
        %v4059 = vunpack.c.l.b16 %v3803
        %v4060 = vunpack.c.l.b16 %v3804
        %v4061 = vunpack.c.l.b16 %v3805
        %v4062 = vunpack.c.l.b16 %v3806
        %v4063 = vunpack.c.l.b16 %v3807
        %v4064 = vunpack.c.l.b16 %v3808
        %v4065 = vunpack.c.l.b16 %v3809
        %v4066 = vunpack.c.l.b16 %v3810
        %v4067 = vunpack.c.l.b16 %v3811
        %v4068 = vunpack.c.l.b16 %v3812
        %v4069 = vunpack.c.l.b16 %v3813
        %v4070 = vunpack.c.l.b16 %v3814
        %v4071 = vunpack.c.l.b16 %v3815
        %v4072 = vunpack.c.l.b16 %v3816
        %v4073 = vunpack.c.l.b16 %v3817
        %v4074 = vunpack.c.l.b16 %v3818
        %v4075 = vunpack.c.l.b16 %v3819
        %v4076 = vunpack.c.l.b16 %v3820
        %v4077 = vunpack.c.l.b16 %v3821
        %v4078 = vunpack.c.l.b16 %v3822
        %v4079 = vunpack.c.l.b16 %v3823
        %v4080 = vunpack.c.l.b16 %v3824
        %v4081 = vunpack.c.l.b16 %v3825
        %v4082 = vunpack.c.l.b16 %v3826
        %v4083 = vunpack.c.l.b16 %v3827
        %v4084 = vunpack.c.l.b16 %v3828
        %v4085 = vunpack.c.l.b16 %v3829
        %v4086 = vunpack.c.l.b16 %v3830
        %v4087 = vunpack.c.l.b16 %v3831
        %v4088 = vunpack.c.l.b16 %v3832
        %v4089 = vunpack.c.l.b16 %v3833
        %v4090 = vunpack.c.l.b16 %v3834
        %v4091 = vunpack.c.l.b16 %v3835
        %v4092 = vunpack.c.l.b16 %v3836
        %v4093 = vunpack.c.l.b16 %v3837
        %v4094 = vunpack.c.l.b16 %v3838
        %v4095 = vunpack.c.l.b16 %v3839
        %v4096 = vpack.c.b16 %v3969, %v3968
        %v4097 = vpack.c.b16 %v3971, %v3970
        %v4098 = vpack.c.b16 %v3973, %v3972
        %v4099 = vpack.c.b16 %v3975, %v3974
        %v4100 = vpack.c.b16 %v3977, %v3976
        %v4101 = vpack.c.b16 %v3979, %v3978
        %v4102 = vpack.c.b16 %v3981, %v3980
        %v4103 = vpack.c.b16 %v3983, %v3982
        %v4104 = vpack.c.b16 %v3985, %v3984
        %v4105 = vpack.c.b16 %v3987, %v3986
        %v4106 = vpack.c.b16 %v3989, %v3988
        %v4107 = vpack.c.b16 %v3991, %v3990
        %v4108 = vpack.c.b16 %v3993, %v3992
        %v4109 = vpack.c.b16 %v3995, %v3994
        %v4110 = vpack.c.b16 %v3997, %v3996
        %v4111 = vpack.c.b16 %v3999, %v3998
        %v4112 = vpack.c.b16 %v4001, %v4000
        %v4113 = vpack.c.b16 %v4003, %v4002
        %v4114 = vpack.c.b16 %v4005, %v4004
        %v4115 = vpack.c.b16 %v4007, %v4006
        %v4116 = vpack.c.b16 %v4009, %v4008
        %v4117 = vpack.c.b16 %v4011, %v4010
        %v4118 = vpack.c.b16 %v4013, %v4012
        %v4119 = vpack.c.b16 %v4015, %v4014
        %v4120 = vpack.c.b16 %v4017, %v4016
        %v4121 = vpack.c.b16 %v4019, %v4018
        %v4122 = vpack.c.b16 %v4021, %v4020
        %v4123 = vpack.c.b16 %v4023, %v4022
        %v4124 = vpack.c.b16 %v4025, %v4024
        %v4125 = vpack.c.b16 %v4027, %v4026
        %v4126 = vpack.c.b16 %v4029, %v4028
        %v4127 = vpack.c.b16 %v4031, %v4030
        %v4128 = vpack.c.b16 %v4033, %v4032
        %v4129 = vpack.c.b16 %v4035, %v4034
        %v4130 = vpack.c.b16 %v4037, %v4036
        %v4131 = vpack.c.b16 %v4039, %v4038
        %v4132 = vpack.c.b16 %v4041, %v4040
        %v4133 = vpack.c.b16 %v4043, %v4042
        %v4134 = vpack.c.b16 %v4045, %v4044
        %v4135 = vpack.c.b16 %v4047, %v4046
        %v4136 = vpack.c.b16 %v4049, %v4048
        %v4137 = vpack.c.b16 %v4051, %v4050
        %v4138 = vpack.c.b16 %v4053, %v4052
        %v4139 = vpack.c.b16 %v4055, %v4054
        %v4140 = vpack.c.b16 %v4057, %v4056
        %v4141 = vpack.c.b16 %v4059, %v4058
        %v4142 = vpack.c.b16 %v4061, %v4060
        %v4143 = vpack.c.b16 %v4063, %v4062
        %v4144 = vpack.c.b16 %v4065, %v4064
        %v4145 = vpack.c.b16 %v4067, %v4066
        %v4146 = vpack.c.b16 %v4069, %v4068
        %v4147 = vpack.c.b16 %v4071, %v4070
        %v4148 = vpack.c.b16 %v4073, %v4072
        %v4149 = vpack.c.b16 %v4075, %v4074
        %v4150 = vpack.c.b16 %v4077, %v4076
        %v4151 = vpack.c.b16 %v4079, %v4078
        %v4152 = vpack.c.b16 %v4081, %v4080
        %v4153 = vpack.c.b16 %v4083, %v4082
        %v4154 = vpack.c.b16 %v4085, %v4084
        %v4155 = vpack.c.b16 %v4087, %v4086
        %v4156 = vpack.c.b16 %v4089, %v4088
        %v4157 = vpack.c.b16 %v4091, %v4090
        %v4158 = vpack.c.b16 %v4093, %v4092
        %v4159 = vpack.c.b16 %v4095, %v4094
        %4224 = vmatprep.subr.bf16.mxu0 0
        %4225 = vmatpush1.bf16.msra.mxu0 %v4096
        %4226 = vmatprep.subr.bf16.mxu0 0
        %4227 = vmatpush1.bf16.msra.mxu0 %v4097
        %4228 = vmatprep.subr.bf16.mxu0 0
        %4229 = vmatpush1.bf16.msra.mxu0 %v4098
        %4230 = vmatprep.subr.bf16.mxu0 0
        %4231 = vmatpush1.bf16.msra.mxu0 %v4099
        %4232 = vmatprep.subr.bf16.mxu0 0
        %4233 = vmatpush1.bf16.msra.mxu0 %v4100
        %4234 = vmatprep.subr.bf16.mxu0 0
        %4235 = vmatpush1.bf16.msra.mxu0 %v4101
        %4236 = vmatprep.subr.bf16.mxu0 0
        %4237 = vmatpush1.bf16.msra.mxu0 %v4102
        %4238 = vmatprep.subr.bf16.mxu0 0
        %4239 = vmatpush1.bf16.msra.mxu0 %v4103
        %4240 = vmatprep.subr.bf16.mxu0 0
        %4241 = vmatpush1.bf16.msra.mxu0 %v4104
        %4242 = vmatprep.subr.bf16.mxu0 0
        %4243 = vmatpush1.bf16.msra.mxu0 %v4105
        %4244 = vmatprep.subr.bf16.mxu0 0
        %4245 = vmatpush1.bf16.msra.mxu0 %v4106
        %4246 = vmatprep.subr.bf16.mxu0 0
        %4247 = vmatpush1.bf16.msra.mxu0 %v4107
        %4248 = vmatprep.subr.bf16.mxu0 0
        %4249 = vmatpush1.bf16.msra.mxu0 %v4108
        %4250 = vmatprep.subr.bf16.mxu0 0
        %4251 = vmatpush1.bf16.msra.mxu0 %v4109
        %4252 = vmatprep.subr.bf16.mxu0 0
        %4253 = vmatpush1.bf16.msra.mxu0 %v4110
        %4254 = vmatprep.subr.bf16.mxu0 0
        %4255 = vmatpush1.bf16.msra.mxu0 %v4111
        %4256 = vmatprep.mubr.bf16.mxu0 %v3649
        %4257 = vmatmul.mubr.bf16.gmra.mrb[0].mxu0 %v3648
        %v4258 = vpop.f32.mrb[0].mxu0
        %v4259 = vadd.f32 0.0, %v4258
        %v4260 = vpop.f32.mrb[0].mxu0
        %v4261 = vpop.f32.mrb[0].mxu0
        %v4262 = vadd.f32 0.0, %v4261
        %v4263 = vpop.f32.mrb[0].mxu0
        %4264 = vmatprep.mubr.bf16.mxu0 %v3657
        %4265 = vmatmul.mubr.bf16.gmra.mrb[0].mxu0 %v3656
        %v4266 = vpop.f32.mrb[0].mxu0
        %v4267 = vadd.f32 0.0, %v4266
        %v4268 = vpop.f32.mrb[0].mxu0
        %v4269 = vpop.f32.mrb[0].mxu0
        %v4270 = vadd.f32 0.0, %v4269
        %v4271 = vpop.f32.mrb[0].mxu0
        %4272 = vmatprep.mubr.bf16.mxu0 %v3665
        %4273 = vmatmul.mubr.bf16.gmra.mrb[0].mxu0 %v3664
        %v4274 = vpop.f32.mrb[0].mxu0
        %v4275 = vadd.f32 0.0, %v4274
        %v4276 = vpop.f32.mrb[0].mxu0
        %v4277 = vpop.f32.mrb[0].mxu0
        %v4278 = vadd.f32 0.0, %v4277
        %v4279 = vpop.f32.mrb[0].mxu0
        %4280 = vmatprep.mubr.bf16.mxu0 %v3673
        %4281 = vmatmul.mubr.bf16.gmra.mrb[0].mxu0 %v3672
        %v4282 = vpop.f32.mrb[0].mxu0
        %v4283 = vadd.f32 0.0, %v4282
        %v4284 = vpop.f32.mrb[0].mxu0
        %v4285 = vpop.f32.mrb[0].mxu0
        %v4286 = vadd.f32 0.0, %v4285
        %v4287 = vpop.f32.mrb[0].mxu0
        %4288 = vmatprep.mubr.bf16.mxu0 %v3681
        %4289 = vmatmul.mubr.bf16.gmra.mrb[0].mxu0 %v3680
        %v4290 = vpop.f32.mrb[0].mxu0
        %v4291 = vadd.f32 0.0, %v4290
        %v4292 = vpop.f32.mrb[0].mxu0
        %v4293 = vpop.f32.mrb[0].mxu0
        %v4294 = vadd.f32 0.0, %v4293
        %v4295 = vpop.f32.mrb[0].mxu0
        %4296 = vmatprep.mubr.bf16.mxu0 %v3689
        %4297 = vmatmul.mubr.bf16.gmra.mrb[0].mxu0 %v3688
        %v4298 = vpop.f32.mrb[0].mxu0
        %v4299 = vadd.f32 0.0, %v4298
        %v4300 = vpop.f32.mrb[0].mxu0
        %v4301 = vpop.f32.mrb[0].mxu0
        %v4302 = vadd.f32 0.0, %v4301
        %v4303 = vpop.f32.mrb[0].mxu0
        %4304 = vmatprep.mubr.bf16.mxu0 %v3697
        %4305 = vmatmul.mubr.bf16.gmra.mrb[0].mxu0 %v3696
        %v4306 = vpop.f32.mrb[0].mxu0
        %v4307 = vadd.f32 0.0, %v4306
        %v4308 = vpop.f32.mrb[0].mxu0
        %v4309 = vpop.f32.mrb[0].mxu0
        %v4310 = vadd.f32 0.0, %v4309
        %v4311 = vpop.f32.mrb[0].mxu0
        %4312 = vmatprep.mubr.bf16.mxu0 %v3705
        %4313 = vmatmul.mubr.bf16.gmra.mrb[0].mxu0 %v3704
        %v4314 = vpop.f32.mrb[0].mxu0
        %v4315 = vadd.f32 0.0, %v4314
        %v4316 = vpop.f32.mrb[0].mxu0
        %v4317 = vpop.f32.mrb[0].mxu0
        %v4318 = vadd.f32 0.0, %v4317
        %v4319 = vpop.f32.mrb[0].mxu0
        %4320 = vdwg.mxu0
        %4321 = vmatprep.subr.bf16.mxu0 0
        %4322 = vmatpush1.bf16.msra.mxu0 %v4112
        %4323 = vmatprep.subr.bf16.mxu0 0
        %4324 = vmatpush1.bf16.msra.mxu0 %v4113
        %4325 = vmatprep.subr.bf16.mxu0 0
        %4326 = vmatpush1.bf16.msra.mxu0 %v4114
        %4327 = vmatprep.subr.bf16.mxu0 0
        %4328 = vmatpush1.bf16.msra.mxu0 %v4115
        %4329 = vmatprep.subr.bf16.mxu0 0
        %4330 = vmatpush1.bf16.msra.mxu0 %v4116
        %4331 = vmatprep.subr.bf16.mxu0 0
        %4332 = vmatpush1.bf16.msra.mxu0 %v4117
        %4333 = vmatprep.subr.bf16.mxu0 0
        %4334 = vmatpush1.bf16.msra.mxu0 %v4118
        %4335 = vmatprep.subr.bf16.mxu0 0
        %4336 = vmatpush1.bf16.msra.mxu0 %v4119
        %4337 = vmatprep.subr.bf16.mxu0 0
        %4338 = vmatpush1.bf16.msra.mxu0 %v4120
        %4339 = vmatprep.subr.bf16.mxu0 0
        %4340 = vmatpush1.bf16.msra.mxu0 %v4121
        %4341 = vmatprep.subr.bf16.mxu0 0
        %4342 = vmatpush1.bf16.msra.mxu0 %v4122
        %4343 = vmatprep.subr.bf16.mxu0 0
        %4344 = vmatpush1.bf16.msra.mxu0 %v4123
        %4345 = vmatprep.subr.bf16.mxu0 0
        %4346 = vmatpush1.bf16.msra.mxu0 %v4124
        %4347 = vmatprep.subr.bf16.mxu0 0
        %4348 = vmatpush1.bf16.msra.mxu0 %v4125
        %4349 = vmatprep.subr.bf16.mxu0 0
        %4350 = vmatpush1.bf16.msra.mxu0 %v4126
        %4351 = vmatprep.subr.bf16.mxu0 0
        %4352 = vmatpush1.bf16.msra.mxu0 %v4127
        %4353 = vmatprep.mubr.bf16.mxu0 %v3651
        %4354 = vmatmul.mubr.bf16.gmra.mrb[0].mxu0 %v3650
        %v4355 = vpop.f32.mrb[0].mxu0
        %v4356 = vadd.f32 %v4259, %v4355
        %v4357 = vpop.f32.mrb[0].mxu0
        %v4358 = vpop.f32.mrb[0].mxu0
        %v4359 = vadd.f32 %v4262, %v4358
        %v4360 = vpop.f32.mrb[0].mxu0
        %4361 = vmatprep.mubr.bf16.mxu0 %v3659
        %4362 = vmatmul.mubr.bf16.gmra.mrb[0].mxu0 %v3658
        %v4363 = vpop.f32.mrb[0].mxu0
        %v4364 = vadd.f32 %v4267, %v4363
        %v4365 = vpop.f32.mrb[0].mxu0
        %v4366 = vpop.f32.mrb[0].mxu0
        %v4367 = vadd.f32 %v4270, %v4366
        %v4368 = vpop.f32.mrb[0].mxu0
        %4369 = vmatprep.mubr.bf16.mxu0 %v3667
        %4370 = vmatmul.mubr.bf16.gmra.mrb[0].mxu0 %v3666
        %v4371 = vpop.f32.mrb[0].mxu0
        %v4372 = vadd.f32 %v4275, %v4371
        %v4373 = vpop.f32.mrb[0].mxu0
        %v4374 = vpop.f32.mrb[0].mxu0
        %v4375 = vadd.f32 %v4278, %v4374
        %v4376 = vpop.f32.mrb[0].mxu0
        %4377 = vmatprep.mubr.bf16.mxu0 %v3675
        %4378 = vmatmul.mubr.bf16.gmra.mrb[0].mxu0 %v3674
        %v4379 = vpop.f32.mrb[0].mxu0
        %v4380 = vadd.f32 %v4283, %v4379
        %v4381 = vpop.f32.mrb[0].mxu0
        %v4382 = vpop.f32.mrb[0].mxu0
        %v4383 = vadd.f32 %v4286, %v4382
        %v4384 = vpop.f32.mrb[0].mxu0
        %4385 = vmatprep.mubr.bf16.mxu0 %v3683
        %4386 = vmatmul.mubr.bf16.gmra.mrb[0].mxu0 %v3682
        %v4387 = vpop.f32.mrb[0].mxu0
        %v4388 = vadd.f32 %v4291, %v4387
        %v4389 = vpop.f32.mrb[0].mxu0
        %v4390 = vpop.f32.mrb[0].mxu0
        %v4391 = vadd.f32 %v4294, %v4390
        %v4392 = vpop.f32.mrb[0].mxu0
        %4393 = vmatprep.mubr.bf16.mxu0 %v3691
        %4394 = vmatmul.mubr.bf16.gmra.mrb[0].mxu0 %v3690
        %v4395 = vpop.f32.mrb[0].mxu0
        %v4396 = vadd.f32 %v4299, %v4395
        %v4397 = vpop.f32.mrb[0].mxu0
        %v4398 = vpop.f32.mrb[0].mxu0
        %v4399 = vadd.f32 %v4302, %v4398
        %v4400 = vpop.f32.mrb[0].mxu0
        %4401 = vmatprep.mubr.bf16.mxu0 %v3699
        %4402 = vmatmul.mubr.bf16.gmra.mrb[0].mxu0 %v3698
        %v4403 = vpop.f32.mrb[0].mxu0
        %v4404 = vadd.f32 %v4307, %v4403
        %v4405 = vpop.f32.mrb[0].mxu0
        %v4406 = vpop.f32.mrb[0].mxu0
        %v4407 = vadd.f32 %v4310, %v4406
        %v4408 = vpop.f32.mrb[0].mxu0
        %4409 = vmatprep.mubr.bf16.mxu0 %v3707
        %4410 = vmatmul.mubr.bf16.gmra.mrb[0].mxu0 %v3706
        %v4411 = vpop.f32.mrb[0].mxu0
        %v4412 = vadd.f32 %v4315, %v4411
        %v4413 = vpop.f32.mrb[0].mxu0
        %v4414 = vpop.f32.mrb[0].mxu0
        %v4415 = vadd.f32 %v4318, %v4414
        %v4416 = vpop.f32.mrb[0].mxu0
        %4417 = vdwg.mxu0
        %4418 = vmatprep.subr.bf16.mxu0 0
        %4419 = vmatpush1.bf16.msra.mxu0 %v4128
        %4420 = vmatprep.subr.bf16.mxu0 0
        %4421 = vmatpush1.bf16.msra.mxu0 %v4129
        %4422 = vmatprep.subr.bf16.mxu0 0
        %4423 = vmatpush1.bf16.msra.mxu0 %v4130
        %4424 = vmatprep.subr.bf16.mxu0 0
        %4425 = vmatpush1.bf16.msra.mxu0 %v4131
        %4426 = vmatprep.subr.bf16.mxu0 0
        %4427 = vmatpush1.bf16.msra.mxu0 %v4132
        %4428 = vmatprep.subr.bf16.mxu0 0
        %4429 = vmatpush1.bf16.msra.mxu0 %v4133
        %4430 = vmatprep.subr.bf16.mxu0 0
        %4431 = vmatpush1.bf16.msra.mxu0 %v4134
        %4432 = vmatprep.subr.bf16.mxu0 0
        %4433 = vmatpush1.bf16.msra.mxu0 %v4135
        %4434 = vmatprep.subr.bf16.mxu0 0
        %4435 = vmatpush1.bf16.msra.mxu0 %v4136
        %4436 = vmatprep.subr.bf16.mxu0 0
        %4437 = vmatpush1.bf16.msra.mxu0 %v4137
        %4438 = vmatprep.subr.bf16.mxu0 0
        %4439 = vmatpush1.bf16.msra.mxu0 %v4138
        %4440 = vmatprep.subr.bf16.mxu0 0
        %4441 = vmatpush1.bf16.msra.mxu0 %v4139
        %4442 = vmatprep.subr.bf16.mxu0 0
        %4443 = vmatpush1.bf16.msra.mxu0 %v4140
        %4444 = vmatprep.subr.bf16.mxu0 0
        %4445 = vmatpush1.bf16.msra.mxu0 %v4141
        %4446 = vmatprep.subr.bf16.mxu0 0
        %4447 = vmatpush1.bf16.msra.mxu0 %v4142
        %4448 = vmatprep.subr.bf16.mxu0 0
        %4449 = vmatpush1.bf16.msra.mxu0 %v4143
        %4450 = vmatprep.mubr.bf16.mxu0 %v3653
        %4451 = vmatmul.mubr.bf16.gmra.mrb[0].mxu0 %v3652
        %v4452 = vpop.f32.mrb[0].mxu0
        %v4453 = vadd.f32 %v4356, %v4452
        %v4454 = vpop.f32.mrb[0].mxu0
        %v4455 = vpop.f32.mrb[0].mxu0
        %v4456 = vadd.f32 %v4359, %v4455
        %v4457 = vpop.f32.mrb[0].mxu0
        %4458 = vmatprep.mubr.bf16.mxu0 %v3661
        %4459 = vmatmul.mubr.bf16.gmra.mrb[0].mxu0 %v3660
        %v4460 = vpop.f32.mrb[0].mxu0
        %v4461 = vadd.f32 %v4364, %v4460
        %v4462 = vpop.f32.mrb[0].mxu0
        %v4463 = vpop.f32.mrb[0].mxu0
        %v4464 = vadd.f32 %v4367, %v4463
        %v4465 = vpop.f32.mrb[0].mxu0
        %4466 = vmatprep.mubr.bf16.mxu0 %v3669
        %4467 = vmatmul.mubr.bf16.gmra.mrb[0].mxu0 %v3668
        %v4468 = vpop.f32.mrb[0].mxu0
        %v4469 = vadd.f32 %v4372, %v4468
        %v4470 = vpop.f32.mrb[0].mxu0
        %v4471 = vpop.f32.mrb[0].mxu0
        %v4472 = vadd.f32 %v4375, %v4471
        %v4473 = vpop.f32.mrb[0].mxu0
        %4474 = vmatprep.mubr.bf16.mxu0 %v3677
        %4475 = vmatmul.mubr.bf16.gmra.mrb[0].mxu0 %v3676
        %v4476 = vpop.f32.mrb[0].mxu0
        %v4477 = vadd.f32 %v4380, %v4476
        %v4478 = vpop.f32.mrb[0].mxu0
        %v4479 = vpop.f32.mrb[0].mxu0
        %v4480 = vadd.f32 %v4383, %v4479
        %v4481 = vpop.f32.mrb[0].mxu0
        %4482 = vmatprep.mubr.bf16.mxu0 %v3685
        %4483 = vmatmul.mubr.bf16.gmra.mrb[0].mxu0 %v3684
        %v4484 = vpop.f32.mrb[0].mxu0
        %v4485 = vadd.f32 %v4388, %v4484
        %v4486 = vpop.f32.mrb[0].mxu0
        %v4487 = vpop.f32.mrb[0].mxu0
        %v4488 = vadd.f32 %v4391, %v4487
        %v4489 = vpop.f32.mrb[0].mxu0
        %4490 = vmatprep.mubr.bf16.mxu0 %v3693
        %4491 = vmatmul.mubr.bf16.gmra.mrb[0].mxu0 %v3692
        %v4492 = vpop.f32.mrb[0].mxu0
        %v4493 = vadd.f32 %v4396, %v4492
        %v4494 = vpop.f32.mrb[0].mxu0
        %v4495 = vpop.f32.mrb[0].mxu0
        %v4496 = vadd.f32 %v4399, %v4495
        %v4497 = vpop.f32.mrb[0].mxu0
        %4498 = vmatprep.mubr.bf16.mxu0 %v3701
        %4499 = vmatmul.mubr.bf16.gmra.mrb[0].mxu0 %v3700
        %v4500 = vpop.f32.mrb[0].mxu0
        %v4501 = vadd.f32 %v4404, %v4500
        %v4502 = vpop.f32.mrb[0].mxu0
        %v4503 = vpop.f32.mrb[0].mxu0
        %v4504 = vadd.f32 %v4407, %v4503
        %v4505 = vpop.f32.mrb[0].mxu0
        %4506 = vmatprep.mubr.bf16.mxu0 %v3709
        %4507 = vmatmul.mubr.bf16.gmra.mrb[0].mxu0 %v3708
        %v4508 = vpop.f32.mrb[0].mxu0
        %v4509 = vadd.f32 %v4412, %v4508
        %v4510 = vpop.f32.mrb[0].mxu0
        %v4511 = vpop.f32.mrb[0].mxu0
        %v4512 = vadd.f32 %v4415, %v4511
        %v4513 = vpop.f32.mrb[0].mxu0
        %4514 = vdwg.mxu0
        %4515 = vmatprep.subr.bf16.mxu0 0
        %4516 = vmatpush1.bf16.msra.mxu0 %v4144
        %4517 = vmatprep.subr.bf16.mxu0 0
        %4518 = vmatpush1.bf16.msra.mxu0 %v4145
        %4519 = vmatprep.subr.bf16.mxu0 0
        %4520 = vmatpush1.bf16.msra.mxu0 %v4146
        %4521 = vmatprep.subr.bf16.mxu0 0
        %4522 = vmatpush1.bf16.msra.mxu0 %v4147
        %4523 = vmatprep.subr.bf16.mxu0 0
        %4524 = vmatpush1.bf16.msra.mxu0 %v4148
        %4525 = vmatprep.subr.bf16.mxu0 0
        %4526 = vmatpush1.bf16.msra.mxu0 %v4149
        %4527 = vmatprep.subr.bf16.mxu0 0
        %4528 = vmatpush1.bf16.msra.mxu0 %v4150
        %4529 = vmatprep.subr.bf16.mxu0 0
        %4530 = vmatpush1.bf16.msra.mxu0 %v4151
        %4531 = vmatprep.subr.bf16.mxu0 0
        %4532 = vmatpush1.bf16.msra.mxu0 %v4152
        %4533 = vmatprep.subr.bf16.mxu0 0
        %4534 = vmatpush1.bf16.msra.mxu0 %v4153
        %4535 = vmatprep.subr.bf16.mxu0 0
        %4536 = vmatpush1.bf16.msra.mxu0 %v4154
        %4537 = vmatprep.subr.bf16.mxu0 0
        %4538 = vmatpush1.bf16.msra.mxu0 %v4155
        %4539 = vmatprep.subr.bf16.mxu0 0
        %4540 = vmatpush1.bf16.msra.mxu0 %v4156
        %4541 = vmatprep.subr.bf16.mxu0 0
        %4542 = vmatpush1.bf16.msra.mxu0 %v4157
        %4543 = vmatprep.subr.bf16.mxu0 0
        %4544 = vmatpush1.bf16.msra.mxu0 %v4158
        %4545 = vmatprep.subr.bf16.mxu0 0
        %4546 = vmatpush1.bf16.msra.mxu0 %v4159
        %4547 = vmatprep.mubr.bf16.mxu0 %v3655
        %4548 = vmatmul.mubr.bf16.gmra.mrb[0].mxu0 %v3654
        %v4549 = vpop.f32.mrb[0].mxu0
        %v4550 = vadd.f32 %v4453, %v4549
        %v4551 = vpop.f32.mrb[0].mxu0
        %v4552 = vpop.f32.mrb[0].mxu0
        %v4553 = vadd.f32 %v4456, %v4552
        %v4554 = vpop.f32.mrb[0].mxu0
        %4555 = vmatprep.mubr.bf16.mxu0 %v3663
        %4556 = vmatmul.mubr.bf16.gmra.mrb[0].mxu0 %v3662
        %v4557 = vpop.f32.mrb[0].mxu0
        %v4558 = vadd.f32 %v4461, %v4557
        %v4559 = vpop.f32.mrb[0].mxu0
        %v4560 = vpop.f32.mrb[0].mxu0
        %v4561 = vadd.f32 %v4464, %v4560
        %v4562 = vpop.f32.mrb[0].mxu0
        %4563 = vmatprep.mubr.bf16.mxu0 %v3671
        %4564 = vmatmul.mubr.bf16.gmra.mrb[0].mxu0 %v3670
        %v4565 = vpop.f32.mrb[0].mxu0
        %v4566 = vadd.f32 %v4469, %v4565
        %v4567 = vpop.f32.mrb[0].mxu0
        %v4568 = vpop.f32.mrb[0].mxu0
        %v4569 = vadd.f32 %v4472, %v4568
        %v4570 = vpop.f32.mrb[0].mxu0
        %4571 = vmatprep.mubr.bf16.mxu0 %v3679
        %4572 = vmatmul.mubr.bf16.gmra.mrb[0].mxu0 %v3678
        %v4573 = vpop.f32.mrb[0].mxu0
        %v4574 = vadd.f32 %v4477, %v4573
        %v4575 = vpop.f32.mrb[0].mxu0
        %v4576 = vpop.f32.mrb[0].mxu0
        %v4577 = vadd.f32 %v4480, %v4576
        %v4578 = vpop.f32.mrb[0].mxu0
        %4579 = vmatprep.mubr.bf16.mxu0 %v3687
        %4580 = vmatmul.mubr.bf16.gmra.mrb[0].mxu0 %v3686
        %v4581 = vpop.f32.mrb[0].mxu0
        %v4582 = vadd.f32 %v4485, %v4581
        %v4583 = vpop.f32.mrb[0].mxu0
        %v4584 = vpop.f32.mrb[0].mxu0
        %v4585 = vadd.f32 %v4488, %v4584
        %v4586 = vpop.f32.mrb[0].mxu0
        %4587 = vmatprep.mubr.bf16.mxu0 %v3695
        %4588 = vmatmul.mubr.bf16.gmra.mrb[0].mxu0 %v3694
        %v4589 = vpop.f32.mrb[0].mxu0
        %v4590 = vadd.f32 %v4493, %v4589
        %v4591 = vpop.f32.mrb[0].mxu0
        %v4592 = vpop.f32.mrb[0].mxu0
        %v4593 = vadd.f32 %v4496, %v4592
        %v4594 = vpop.f32.mrb[0].mxu0
        %4595 = vmatprep.mubr.bf16.mxu0 %v3703
        %4596 = vmatmul.mubr.bf16.gmra.mrb[0].mxu0 %v3702
        %v4597 = vpop.f32.mrb[0].mxu0
        %v4598 = vadd.f32 %v4501, %v4597
        %v4599 = vpop.f32.mrb[0].mxu0
        %v4600 = vpop.f32.mrb[0].mxu0
        %v4601 = vadd.f32 %v4504, %v4600
        %v4602 = vpop.f32.mrb[0].mxu0
        %4603 = vmatprep.mubr.bf16.mxu0 %v3711
        %4604 = vmatmul.mubr.bf16.gmra.mrb[0].mxu0 %v3710
        %v4605 = vpop.f32.mrb[0].mxu0
        %v4606 = vadd.f32 %v4509, %v4605
        %v4607 = vpop.f32.mrb[0].mxu0
        %v4608 = vpop.f32.mrb[0].mxu0
        %v4609 = vadd.f32 %v4512, %v4608
        %v4610 = vpop.f32.mrb[0].mxu0
        %4611 = vdwg.mxu0
        %v4612 = vadd.f32 %v4550, %v4553
        %v4613 = vrot.slane %v4612, 4
        %v4614 = vadd.f32 %v4612, %v4613
        %v4615 = vrot.slane %v4614, 2
        %v4616 = vadd.f32 %v4614, %v4615
        %v4617 = vrot.slane %v4616, 1
        %v4618 = vadd.f32 %v4616, %v4617
        %v4619 = vadd.f32 %v4558, %v4561
        %v4620 = vrot.slane %v4619, 4
        %v4621 = vadd.f32 %v4619, %v4620
        %v4622 = vrot.slane %v4621, 2
        %v4623 = vadd.f32 %v4621, %v4622
        %v4624 = vrot.slane %v4623, 1
        %v4625 = vadd.f32 %v4623, %v4624
        %v4626 = vadd.f32 %v4566, %v4569
        %v4627 = vrot.slane %v4626, 4
        %v4628 = vadd.f32 %v4626, %v4627
        %v4629 = vrot.slane %v4628, 2
        %v4630 = vadd.f32 %v4628, %v4629
        %v4631 = vrot.slane %v4630, 1
        %v4632 = vadd.f32 %v4630, %v4631
        %v4633 = vadd.f32 %v4574, %v4577
        %v4634 = vrot.slane %v4633, 4
        %v4635 = vadd.f32 %v4633, %v4634
        %v4636 = vrot.slane %v4635, 2
        %v4637 = vadd.f32 %v4635, %v4636
        %v4638 = vrot.slane %v4637, 1
        %v4639 = vadd.f32 %v4637, %v4638
        %v4640 = vadd.f32 %v4582, %v4585
        %v4641 = vrot.slane %v4640, 4
        %v4642 = vadd.f32 %v4640, %v4641
        %v4643 = vrot.slane %v4642, 2
        %v4644 = vadd.f32 %v4642, %v4643
        %v4645 = vrot.slane %v4644, 1
        %v4646 = vadd.f32 %v4644, %v4645
        %v4647 = vadd.f32 %v4590, %v4593
        %v4648 = vrot.slane %v4647, 4
        %v4649 = vadd.f32 %v4647, %v4648
        %v4650 = vrot.slane %v4649, 2
        %v4651 = vadd.f32 %v4649, %v4650
        %v4652 = vrot.slane %v4651, 1
        %v4653 = vadd.f32 %v4651, %v4652
        %v4654 = vadd.f32 %v4598, %v4601
        %v4655 = vrot.slane %v4654, 4
        %v4656 = vadd.f32 %v4654, %v4655
        %v4657 = vrot.slane %v4656, 2
        %v4658 = vadd.f32 %v4656, %v4657
        %v4659 = vrot.slane %v4658, 1
        %v4660 = vadd.f32 %v4658, %v4659
        %v4661 = vadd.f32 %v4606, %v4609
        %v4662 = vrot.slane %v4661, 4
        %v4663 = vadd.f32 %v4661, %v4662
        %v4664 = vrot.slane %v4663, 2
        %v4665 = vadd.f32 %v4663, %v4664
        %v4666 = vrot.slane %v4665, 1
        %v4667 = vadd.f32 %v4665, %v4666
        %v4668 = vld [vmem:[%s9] sm:$0x1]
        %v4670 = vlaneseq
        %v4671 = vshrl.u32 %v4670, 7
        %v4672 = vsub.s32 0, %v4671
        %v4673 = vrot.slane %v4668, %v4672
        %v4675 = vadd.f32 %v4618, %v4673
        %v4676 = vadd.f32 %v4625, %v4673
        %v4677 = vadd.f32 %v4632, %v4673
        %v4678 = vadd.f32 %v4639, %v4673
        %v4679 = vadd.f32 %v4646, %v4673
        %v4680 = vadd.f32 %v4653, %v4673
        %v4681 = vadd.f32 %v4660, %v4673
        %v4682 = vadd.f32 %v4667, %v4673
        %v4691 = vrot.slane %v4676, 7
        %vm4692 = vcmask 1041409
        %v4693 = vsel %vm4692, %v4691, %v4675
        %v4694 = vrot.slane %v4677, 6
        %vm4695 = vcmask 1042434
        %v4696 = vsel %vm4695, %v4694, %v4693
        %v4697 = vrot.slane %v4678, 5
        %vm4698 = vcmask 1043459
        %v4699 = vsel %vm4698, %v4697, %v4696
        %v4700 = vrot.slane %v4679, 4
        %vm4701 = vcmask 1044484
        %v4702 = vsel %vm4701, %v4700, %v4699
        %v4703 = vrot.slane %v4680, 3
        %vm4704 = vcmask 1045509
        %v4705 = vsel %vm4704, %v4703, %v4702
        %v4706 = vrot.slane %v4681, 2
        %vm4707 = vcmask 1046534
        %v4708 = vsel %vm4707, %v4706, %v4705
        %v4709 = vrot.slane %v4682, 1
        %vm4710 = vcmask 1047559
        %v4711 = vsel %vm4710, %v4709, %v4708
        %4713 = vst [vmem:[%s355] sm:$0xff] %v4711
        %s4714 = sand.u32 %s247, 1
        %s4715 = scalar_lea.sflag [#allocation4], %s4714
        %s4716 = sand.u32 %s247, 1
        %s4717 = smul.addr %s4716, 8
        %s4718 = scalar_lea.vmem [#allocation3], %s4717
        // Predicated region
        $region61: #{_lambda_.1} parent=59 // pred_check
          %p4719 = pneg %p257
        $region62: #{_lambda_.1} parent=59 // pred_check_branch
          %4721 = sbr.rel (%p4719) target = $region64
        $region63: #{_lambda_.1} parent=59 // pred_region
          %s4723 = ssub.s32 128, 128
          %4724 = vsyncadd %s4715, %s4723
          %s4725 = smul.addr %s24, 128
          %s4726 = scalar_lea.hbm %s10, %s4725
          %s4728 = sshll.u32 %s4718, 4
          %s4729 = int_to_ptr.vmem [resolvable:$true] %s4728
          %4731 = dma.vmem_to_hbm [thread:$0]  %s4729, 128, %s4726, %s4715
        $region64: #{_lambda_.1} parent=59 // pred_fallthru
          _
      $region60: #{_lambda_.1} parent=5 // pred_fallthru
        _
      %p4732 = scmp.le.s32.totalorder 2, %s19
      // Predicated region
      $region65: #{_lambda_.1} parent=5 // pred_check
        %p4733 = pneg %p4732
      $region66: #{_lambda_.1} parent=5 // pred_check_branch
        %4735 = sbr.rel (%p4733) target = $region68
      $region67: #{_lambda_.1} parent=5 // pred_region
        %s4736 = ssub.s32 %s19, 2
        // Predicated region
        $region69: #{_lambda_.1} parent=67 // pred_check
          %p4737 = pneg %p263
        $region70: #{_lambda_.1} parent=67 // pred_check_branch
          %4739 = sbr.rel (%p4737) target = $region72
        $region71: #{_lambda_.1} parent=67 // pred_region
          %s4740 = sand.u32 %s248, 1
          %s4741 = scalar_lea.sflag [#allocation4], %s4740
          %s4742 = sand.u32 %s248, 1
          %s4743 = smul.addr %s4742, 8
          %s4744 = scalar_lea.vmem [#allocation3], %s4743
          %4745 = dma.done %s4741, 128
        $region72: #{_lambda_.1} parent=67 // pred_fallthru
          _
      $region68: #{_lambda_.1} parent=5 // pred_fallthru
        _
    $region6: #{_lambda_.1} parent=1 // loop_footer
      %s23 = sadd.s32 1, %s19
    $region7: #{_lambda_.1} parent=1 // loop_footer_branch
      %18 = sbr.rel target = $region3
    $region8: #{_lambda_.1} parent=1 // loop_exit
      _
    %4746 = vsyncpa [#allocation4], 1
    %s4747 = scalar_lea.sflag [#allocation4], 1
    %4748 = vsyncpa %s4747, 1

</llo_original>
